<compile_context>
chip_gen: v7x
topology: tpu7x:2x2x1
jax: 0.10.0
libtpu: 0.0.40
codegen_flags: <defaults>
</compile_context>

<pallas_src>
import functools

import jax
import jax.numpy as jnp
from jax.experimental import pallas as pl
from jax.experimental.pallas import tpu as pltpu

LANE = 128
SUBLANE = 8
MAX_TILE = 1024     # target weight-streaming tile width (multiple of LANE)
PAD_CHUNK = 512     # large feature dims are padded to a multiple of this


def _round_up(n, m):
    return (n + m - 1) // m * m


def _pad_dim(n):
    """Pad a feature dim to a lane multiple; big dims to a PAD_CHUNK multiple."""
    p = _round_up(n, LANE)
    if p > PAD_CHUNK:
        p = _round_up(p, PAD_CHUNK)
    return p


def _pick_tile(dim, target):
    """Largest multiple of LANE that divides `dim` and is <= target."""
    t = max(LANE, min(dim, (target // LANE) * LANE))
    while dim % t != 0:
        t -= LANE
    return t


def _leaky_relu(x, slope=0.1):
    return jnp.where(x >= 0, x, slope * x)


def _sigmoid(x):
    # tanh formulation: lands on the EUP slot and is stable for large |x|.
    return 0.5 * jnp.tanh(0.5 * x) + 0.5


# ----------------------------------------------------------------------------
# Kernels
# ----------------------------------------------------------------------------
def encoder_kernel(x_ref, w1_ref, b1_ref, h1_ref, acc_ref):
    """h1 = LeakyReLU(x @ w1 + b1)   (eval-mode BN folded into w1/b1).

    Grid: (n_h parallel over Hp column tiles, n_k arbitrary over K tiles).
    Streams bf16 w1 tiles; f32 VMEM accumulator; stores h1 as bf16."""
    k = pl.program_id(1)

    @pl.when(k == 0)
    def _():
        acc_ref[...] = jnp.zeros_like(acc_ref)

    acc_ref[...] += jnp.dot(x_ref[...], w1_ref[...],
                            preferred_element_type=jnp.float32)

    @pl.when(k == pl.num_programs(1) - 1)
    def _():
        h1_ref[...] = _leaky_relu(acc_ref[...] + b1_ref[...]).astype(h1_ref.dtype)


def head_kernel(h1_ref, wmv_ref, bmv_ref, wd1_ref, bd1_ref, mv_ref, d1_ref):
    """Fused (mu|log_var) head (linear_block(1000, 32) x2) + decoder hidden
    layer.  All operands are tiny (< 1 MiB) and fully resident in VMEM."""
    mv = _leaky_relu(
        jnp.dot(h1_ref[...], wmv_ref[...], preferred_element_type=jnp.float32)
        + bmv_ref[...])
    mv_ref[...] = mv
    # sample() in eval mode: z = mu (zero-padded rows of wd1 select mu only).
    d1 = _sigmoid(
        jnp.dot(mv.astype(jnp.bfloat16), wd1_ref[...],
                preferred_element_type=jnp.float32) + bd1_ref[...])
    d1_ref[...] = d1.astype(d1_ref.dtype)


def decoder_kernel(d1_ref, wd2_ref, b2_ref, xhat_ref):
    """x_hat tile = sigmoid(d1 @ wd2[:, tile] + b2[tile]).

    Streams bf16 wd2 over its N dim ("parallel" axis); b2 stays resident as
    one (1, Np) block and is sliced in-kernel (no tiny per-step DMAs)."""
    tn = xhat_ref.shape[-1]
    off = pl.multiple_of(pl.program_id(0) * tn, tn)
    xhat_ref[...] = _sigmoid(
        jnp.dot(d1_ref[...], wd2_ref[...], preferred_element_type=jnp.float32)
        + b2_ref[:, pl.ds(off, tn)])


# ----------------------------------------------------------------------------
# Wrapper
# ----------------------------------------------------------------------------
def tybalt_vae_forward(x, kernel_params, *, output_size, zsize=32):
    (w1, b1, wmv, bmv, wd1, bd1, wd2, b2) = kernel_params
    B0, in0 = x.shape
    Kp, Hp = w1.shape
    ZP = wmv.shape[1]
    Np = wd2.shape[1]

    Bp = _round_up(max(B0, SUBLANE), SUBLANE)
    xp = jnp.zeros((Bp, Kp), jnp.bfloat16).at[:B0, :in0].set(
        x.astype(jnp.bfloat16))

    # Tile selection (see perf notes at top of file).
    tk = _pick_tile(Kp, Kp if Kp <= 2 * MAX_TILE else MAX_TILE)
    th = _pick_tile(Hp, max(LANE, Hp // 2))                  # >=2 Hp blocks
    tn = _pick_tile(Np, min(MAX_TILE, max(LANE, Np // 2)))   # >=2 N blocks
    n_k, n_h, n_j = Kp // tk, Hp // th, Np // tn

    # ---- 1. encoder hidden layer: h1 = LeakyReLU(x @ w1 + b1) --------------
    enc_cost = pl.CostEstimate(
        flops=2 * Bp * Kp * Hp,
        transcendentals=0,
        bytes_accessed=2 * (n_h * Bp * Kp + Kp * Hp + Bp * Hp) + 4 * Hp,
    )
    h1 = pl.pallas_call(
        encoder_kernel,
        out_shape=jax.ShapeDtypeStruct((Bp, Hp), jnp.bfloat16),
        grid_spec=pltpu.PrefetchScalarGridSpec(
            num_scalar_prefetch=0,
            grid=(n_h, n_k),
            in_specs=[
                pl.BlockSpec((Bp, tk), lambda h, k: (0, k)),   # x (bf16)
                pl.BlockSpec((tk, th), lambda h, k: (k, h)),   # w1 (bf16)
                pl.BlockSpec((1, th), lambda h, k: (0, h)),    # b1 (f32)
            ],
            out_specs=pl.BlockSpec((Bp, th), lambda h, k: (0, h)),
            scratch_shapes=[pltpu.VMEM((Bp, th), jnp.float32)],
        ),
        compiler_params=pltpu.CompilerParams(
            dimension_semantics=("parallel", "arbitrary")),
        cost_estimate=enc_cost,
    )(xp, w1, b1)

    # ---- 2. fused latent heads + decoder hidden layer (tiny, resident) -----
    head_cost = pl.CostEstimate(
        flops=4 * Bp * Hp * ZP,
        transcendentals=Bp * Hp,
        bytes_accessed=2 * (2 * Bp * Hp + 2 * Hp * ZP)
        + 4 * (ZP + Hp + Bp * ZP),
    )
    mv, d1 = pl.pallas_call(
        head_kernel,
        out_shape=(jax.ShapeDtypeStruct((Bp, ZP), jnp.float32),
                   jax.ShapeDtypeStruct((Bp, Hp), jnp.bfloat16)),
        cost_estimate=head_cost,
    )(h1, wmv, bmv, wd1, bd1)

    # ---- 3. decoder output layer: x_hat = sigmoid(d1 @ wd2 + b2) -----------
    dec_cost = pl.CostEstimate(
        flops=2 * Bp * Hp * Np,
        transcendentals=Bp * Np,
        bytes_accessed=2 * (n_j * Bp * Hp + Hp * Np) + 4 * (Np + Bp * Np),
    )
    xhat_p = pl.pallas_call(
        decoder_kernel,
        out_shape=jax.ShapeDtypeStruct((Bp, Np), jnp.float32),
        grid_spec=pltpu.PrefetchScalarGridSpec(
            num_scalar_prefetch=0,
            grid=(n_j,),
            in_specs=[
                pl.BlockSpec((Bp, Hp), lambda j: (0, 0)),   # d1 (bf16) resident
                pl.BlockSpec((Hp, tn), lambda j: (0, j)),   # wd2 (bf16) streamed
                pl.BlockSpec((1, Np), lambda j: (0, 0)),    # b2 (f32) resident
            ],
            out_specs=pl.BlockSpec((Bp, tn), lambda j: (0, j)),
        ),
        compiler_params=pltpu.CompilerParams(
            dimension_semantics=("parallel",)),
        cost_estimate=dec_cost,
    )(d1, wd2, b2)

    x_hat = xhat_p[:B0, :output_size]
    mu = mv[:B0, :zsize]
    log_var = mv[:B0, zsize:2 * zsize]
    return x_hat, mu, log_var


# ----------------------------------------------------------------------------
# Parameter construction (synthetic, PyTorch-faithful init; eval-mode BN folded)
# ----------------------------------------------------------------------------
def _fold_bn_eval(w, b, gamma, beta, running_mean, running_var, eps=1e-5):
    """Fold eval-mode BatchNorm1d into the preceding Linear (y = x@W + b)."""
    scale = gamma / jnp.sqrt(running_var + eps)
    return w * scale[None, :], (b - running_mean) * scale + beta


def make_params(key, input_size, output_size, zsize=32, hidden=1000):
    ks = iter(jax.random.split(key, 32))

    def lin(fan_in, fan_out):
        bound = 1.0 / jnp.sqrt(fan_in)
        w = jax.random.uniform(next(ks), (fan_in, fan_out), jnp.float32,
                               -bound, bound)
        b = jax.random.uniform(next(ks), (fan_out,), jnp.float32, -bound, bound)
        return w, b

    def bn(f):
        gamma = 1.0 + 0.1 * jax.random.normal(next(ks), (f,), jnp.float32)
        beta = 0.1 * jax.random.normal(next(ks), (f,), jnp.float32)
        rmean = 0.1 * jax.random.normal(next(ks), (f,), jnp.float32)
        rvar = 1.0 + 0.1 * jax.random.uniform(next(ks), (f,), jnp.float32)
        return gamma, beta, rmean, rvar

    w1, b1 = lin(input_size, hidden)
    w1, b1 = _fold_bn_eval(w1, b1, *bn(hidden))          # linear_block(in, 1000)
    wmu, bmu = lin(hidden, zsize)
    wmu, bmu = _fold_bn_eval(wmu, bmu, *bn(zsize))       # linear_block(1000, 32)
    wv, bv = lin(hidden, zsize)
    wv, bv = _fold_bn_eval(wv, bv, *bn(zsize))           # linear_block(1000, 32)
    wd1, bd1 = lin(zsize, hidden)                        # Linear(zsize, 1000)
    wd2, b2 = lin(hidden, output_size)                   # Linear(1000, out)

    return (w1, b1, wmu, bmu, wv, bv, wd1, bd1, wd2, b2)


def prepare_kernel_params(raw, input_size, output_size, hidden=1000, zsize=32):
    """Pad to lane/tile-aligned shapes, fuse the mu/log_var heads, cast bf16."""
    (w1, b1, wmu, bmu, wv, bv, wd1, bd1, wd2, b2) = raw
    Kp = _pad_dim(input_size)
    Hp = _round_up(hidden, LANE)
    Np = _pad_dim(output_size)
    ZP = LANE  # lane-dense fused latent width: [mu(32) | log_var(32) | zero pad]

    w1p = (jnp.zeros((Kp, Hp), jnp.float32)
           .at[:input_size, :hidden].set(w1).astype(jnp.bfloat16))
    b1p = jnp.zeros((1, Hp), jnp.float32).at[0, :hidden].set(b1)

    wmvp = (jnp.zeros((Hp, ZP), jnp.float32)
            .at[:hidden, :zsize].set(wmu)
            .at[:hidden, zsize:2 * zsize].set(wv).astype(jnp.bfloat16))
    bmvp = (jnp.zeros((1, ZP), jnp.float32)
            .at[0, :zsize].set(bmu)
            .at[0, zsize:2 * zsize].set(bv))

    # Zero rows beyond zsize make the fused (mu|log_var) block feed only mu
    # into the decoder (z = mu in eval mode).
    wd1p = (jnp.zeros((ZP, Hp), jnp.float32)
            .at[:zsize, :hidden].set(wd1).astype(jnp.bfloat16))
    bd1p = jnp.zeros((1, Hp), jnp.float32).at[0, :hidden].set(bd1)

    # Zero rows beyond `hidden` kill the sigmoid(0)=0.5 padding of d1.
    wd2p = (jnp.zeros((Hp, Np), jnp.float32)
            .at[:hidden, :output_size].set(wd2).astype(jnp.bfloat16))
    b2p = jnp.zeros((1, Np), jnp.float32).at[0, :output_size].set(b2)

    return (w1p, b1p, wmvp, bmvp, wd1p, bd1p, wd2p, b2p)


# ----------------------------------------------------------------------------
# Pure-JAX reference (same bf16-weight / f32-accumulate precision as the kernel)
# ----------------------------------------------------------------------------
def reference_forward(x, raw_params):
    (w1, b1, wmu, bmu, wv, bv, wd1, bd1, wd2, b2) = raw_params
    bf = lambda a: a.astype(jnp.bfloat16)
    dot = lambda a, w: jnp.dot(bf(a), bf(w),
                               preferred_element_type=jnp.float32)
    h1 = _leaky_relu(dot(x, w1) + b1)
    mu = _leaky_relu(dot(h1, wmu) + bmu)
    lv = _leaky_relu(dot(h1, wv) + bv)
    d1 = _sigmoid(dot(mu, wd1) + bd1)          # z = mu in eval mode
    xhat = _sigmoid(dot(d1, wd2) + b2)
    return xhat, mu, lv


if __name__ == "__main__":
    key = jax.random.PRNGKey(0)
    k_params, k_x = jax.random.split(key)

    B = 8
    input_size = 256     # small stand-in for the ~5000-gene Tybalt input
    output_size = 256
    zsize = 32
    hidden = 1000

    raw = make_params(k_params, input_size, output_size,
                      zsize=zsize, hidden=hidden)
    kparams = prepare_kernel_params(raw, input_size, output_size,
                                    hidden=hidden, zsize=zsize)
    x = jax.random.normal(k_x, (B, input_size), dtype=jnp.float32)

    fwd = jax.jit(functools.partial(tybalt_vae_forward,
                                    output_size=output_size, zsize=zsize))
    x_hat, mean, log_var = fwd(x, kparams)
    jax.block_until_ready((x_hat, mean, log_var))

    # Correctness check against a pure-JAX reference of the same math/precision.
    rx, rm, rv = reference_forward(x, raw)
    assert x_hat.shape == (B, output_size)
    assert mean.shape == (B, zsize) and log_var.shape == (B, zsize)
    assert jnp.allclose(x_hat, rx, atol=5e-3, rtol=5e-3)
    assert jnp.allclose(mean, rm, atol=5e-3, rtol=5e-3)
    assert jnp.allclose(log_var, rv, atol=5e-3, rtol=5e-3)

    print("KERNEL_OK")
</pallas_src>

<mosaic_0001>
module attributes {stable_mosaic.version = 11 : i64} {
  func.func @decoder_kernel(%arg0: i32, %arg1: memref<8x1024xbf16, #tpu.memory_space<vmem>>, %arg2: memref<1024x128xbf16, #tpu.memory_space<vmem>>, %arg3: memref<1x256xf32, #tpu.memory_space<vmem>>, %arg4: memref<8x128xf32, #tpu.memory_space<vmem>>) attributes {dimension_semantics = [#tpu.dimension_semantics<parallel>], iteration_bounds = array<i64: 2>, scalar_prefetch = 0 : i64, scratch_operands = 0 : i64, tpu.core_type = #tpu.core_type<tc>, window_params = [{pipeline_mode = #tpu.pipeline_mode<synchronous>, transform_indices = @transform_0, window_bounds = array<i64: 8, 1024>}, {transform_indices = @transform_1, window_bounds = array<i64: 1024, 128>}, {pipeline_mode = #tpu.pipeline_mode<synchronous>, transform_indices = @transform_2, window_bounds = array<i64: 1, 256>}, {transform_indices = @transform_3, window_bounds = array<i64: 8, 128>}]} {
    %c128_i32 = arith.constant 128 : i32
    %0 = arith.muli %arg0, %c128_i32 : i32
    %1 = tpu.assume_multiple %0, 128 : i32
    %c0 = arith.constant 0 : index
    %c0_0 = arith.constant 0 : index
    %2 = vector.load %arg1[%c0, %c0_0] : memref<8x1024xbf16, #tpu.memory_space<vmem>>, vector<8x1024xbf16>
    %c0_1 = arith.constant 0 : index
    %c0_2 = arith.constant 0 : index
    %3 = vector.load %arg2[%c0_1, %c0_2] : memref<1024x128xbf16, #tpu.memory_space<vmem>>, vector<1024x128xbf16>
    %cst = arith.constant dense<0.000000e+00> : vector<8x128xf32>
    %4 = tpu.matmul %2, %3, %cst {dimension_numbers = #tpu.dot_dimension_numbers<[1], [0], [0], [1], [0, 0, 1, 1], [], []>} : vector<8x1024xbf16>, vector<1024x128xbf16>, vector<8x128xf32> -> vector<8x128xf32>
    %c0_3 = arith.constant 0 : index
    %5 = arith.index_cast %1 : i32 to index
    %6 = vector.load %arg3[%c0_3, %5] : memref<1x256xf32, #tpu.memory_space<vmem>>, vector<1x128xf32>
    %7 = vector.broadcast %6 : vector<1x128xf32> to vector<8x128xf32>
    %8 = arith.addf %4, %7 : vector<8x128xf32>
    %cst_4 = arith.constant 5.000000e-01 : f32
    %9 = vector.broadcast %cst_4 : f32 to vector<8x128xf32>
    %10 = arith.mulf %9, %8 : vector<8x128xf32>
    %11 = math.tanh %10 : vector<8x128xf32>
    %cst_5 = arith.constant 5.000000e-01 : f32
    %12 = vector.broadcast %cst_5 : f32 to vector<8x128xf32>
    %13 = arith.mulf %12, %11 : vector<8x128xf32>
    %cst_6 = arith.constant 5.000000e-01 : f32
    %14 = vector.broadcast %cst_6 : f32 to vector<8x128xf32>
    %15 = arith.addf %13, %14 : vector<8x128xf32>
    %c0_7 = arith.constant 0 : index
    %c0_8 = arith.constant 0 : index
    %16 = vector.load %arg4[%c0_7, %c0_8] : memref<8x128xf32, #tpu.memory_space<vmem>>, vector<8x128xf32>
    tpu.vector_store %arg4[%c0_7, %c0_8], %15 {strides = array<i32>} : memref<8x128xf32, #tpu.memory_space<vmem>>, vector<8x128xf32>,
    return
  }
  func.func @transform_0(%arg0: i32) -> (i32, i32) {
    %c0_i32 = arith.constant 0 : i32
    %c0_i32_0 = arith.constant 0 : i32
    %c0_i32_1 = arith.constant 0 : i32
    return %c0_i32, %c0_i32_0 : i32, i32
  }
  func.func @transform_1(%arg0: i32) -> (i32, i32) {
    %c0_i32 = arith.constant 0 : i32
    %c0_i32_0 = arith.constant 0 : i32
    return %c0_i32, %arg0 : i32, i32
  }
  func.func @transform_2(%arg0: i32) -> (i32, i32) {
    %c0_i32 = arith.constant 0 : i32
    %c0_i32_0 = arith.constant 0 : i32
    %c0_i32_1 = arith.constant 0 : i32
    return %c0_i32, %c0_i32_0 : i32, i32
  }
  func.func @transform_3(%arg0: i32) -> (i32, i32) {
    %c0_i32 = arith.constant 0 : i32
    %c0_i32_0 = arith.constant 0 : i32
    return %c0_i32, %arg0 : i32, i32
  }
}

module attributes {stable_mosaic.version = 11 : i64} {
  func.func @encoder_kernel(%arg0: i32, %arg1: i32, %arg2: memref<8x256xbf16, #tpu.memory_space<vmem>>, %arg3: memref<256x512xbf16, #tpu.memory_space<vmem>>, %arg4: memref<1x512xf32, #tpu.memory_space<vmem>>, %arg5: memref<8x512xbf16, #tpu.memory_space<vmem>>, %arg6: memref<8x512xf32, #tpu.memory_space<vmem>>) attributes {dimension_semantics = [#tpu.dimension_semantics<parallel>, #tpu.dimension_semantics<arbitrary>], iteration_bounds = array<i64: 2, 1>, scalar_prefetch = 0 : i64, scratch_operands = 1 : i64, tpu.core_type = #tpu.core_type<tc>, window_params = [{transform_indices = @transform_0, window_bounds = array<i64: 8, 256>}, {transform_indices = @transform_1, window_bounds = array<i64: 256, 512>}, {transform_indices = @transform_2, window_bounds = array<i64: 1, 512>}, {transform_indices = @transform_3, window_bounds = array<i64: 8, 512>}]} {
    %c0_i32 = arith.constant 0 : i32
    %0 = arith.cmpi eq, %arg1, %c0_i32 : i32
    %1 = arith.extui %0 : i1 to i32
    %c0_i32_0 = arith.constant 0 : i32
    %2 = arith.cmpi ne, %1, %c0_i32_0 : i32
    scf.if %2 {
      %cst_10 = arith.constant 0.000000e+00 : f32
      %12 = vector.broadcast %cst_10 : f32 to vector<8x512xf32>
      %c0_11 = arith.constant 0 : index
      %c0_12 = arith.constant 0 : index
      %13 = vector.load %arg6[%c0_11, %c0_12] : memref<8x512xf32, #tpu.memory_space<vmem>>, vector<8x512xf32>
      tpu.vector_store %arg6[%c0_11, %c0_12], %12 {strides = array<i32>} : memref<8x512xf32, #tpu.memory_space<vmem>>, vector<8x512xf32>,
    } else {
    }
    %c0 = arith.constant 0 : index
    %c0_1 = arith.constant 0 : index
    %3 = vector.load %arg6[%c0, %c0_1] : memref<8x512xf32, #tpu.memory_space<vmem>>, vector<8x512xf32>
    %c0_2 = arith.constant 0 : index
    %c0_3 = arith.constant 0 : index
    %4 = vector.load %arg2[%c0_2, %c0_3] : memref<8x256xbf16, #tpu.memory_space<vmem>>, vector<8x256xbf16>
    %c0_4 = arith.constant 0 : index
    %c0_5 = arith.constant 0 : index
    %5 = vector.load %arg3[%c0_4, %c0_5] : memref<256x512xbf16, #tpu.memory_space<vmem>>, vector<256x512xbf16>
    %cst = arith.constant dense<0.000000e+00> : vector<8x512xf32>
    %6 = tpu.matmul %4, %5, %cst {dimension_numbers = #tpu.dot_dimension_numbers<[1], [0], [0], [1], [0, 0, 1, 1], [], []>} : vector<8x256xbf16>, vector<256x512xbf16>, vector<8x512xf32> -> vector<8x512xf32>
    %7 = arith.addf %3, %6 : vector<8x512xf32>
    %c0_6 = arith.constant 0 : index
    %c0_7 = arith.constant 0 : index
    %8 = vector.load %arg6[%c0_6, %c0_7] : memref<8x512xf32, #tpu.memory_space<vmem>>, vector<8x512xf32>
    tpu.vector_store %arg6[%c0_6, %c0_7], %7 {strides = array<i32>} : memref<8x512xf32, #tpu.memory_space<vmem>>, vector<8x512xf32>,
    %c0_i32_8 = arith.constant 0 : i32
    %9 = arith.cmpi eq, %arg1, %c0_i32_8 : i32
    %10 = arith.extui %9 : i1 to i32
    %c0_i32_9 = arith.constant 0 : i32
    %11 = arith.cmpi ne, %10, %c0_i32_9 : i32
    scf.if %11 {
      %c0_10 = arith.constant 0 : index
      %c0_11 = arith.constant 0 : index
      %12 = vector.load %arg6[%c0_10, %c0_11] : memref<8x512xf32, #tpu.memory_space<vmem>>, vector<8x512xf32>
      %c0_12 = arith.constant 0 : index
      %c0_13 = arith.constant 0 : index
      %13 = vector.load %arg4[%c0_12, %c0_13] : memref<1x512xf32, #tpu.memory_space<vmem>>, vector<1x512xf32>
      %14 = vector.broadcast %13 : vector<1x512xf32> to vector<8x512xf32>
      %15 = arith.addf %12, %14 : vector<8x512xf32>
      %cst_14 = arith.constant 0.000000e+00 : f32
      %16 = vector.broadcast %cst_14 : f32 to vector<8x512xf32>
      %17 = arith.cmpf oge, %15, %16 : vector<8x512xf32>
      %cst_15 = arith.constant 1.000000e-01 : f32
      %18 = vector.broadcast %cst_15 : f32 to vector<8x512xf32>
      %19 = arith.mulf %18, %15 : vector<8x512xf32>
      %20 = arith.select %17, %15, %19 : vector<8x512xi1>, vector<8x512xf32>
      %21 = arith.truncf %20 : vector<8x512xf32> to vector<8x512xbf16>
      %c0_16 = arith.constant 0 : index
      %c0_17 = arith.constant 0 : index
      %22 = vector.load %arg5[%c0_16, %c0_17] : memref<8x512xbf16, #tpu.memory_space<vmem>>, vector<8x512xbf16>
      tpu.vector_store %arg5[%c0_16, %c0_17], %21 {strides = array<i32>} : memref<8x512xbf16, #tpu.memory_space<vmem>>, vector<8x512xbf16>,
    } else {
    }
    return
  }
  func.func @transform_0(%arg0: i32, %arg1: i32) -> (i32, i32) {
    %c0_i32 = arith.constant 0 : i32
    %c0_i32_0 = arith.constant 0 : i32
    return %c0_i32, %arg1 : i32, i32
  }
  func.func @transform_1(%arg0: i32, %arg1: i32) -> (i32, i32) {
    %c0_i32 = arith.constant 0 : i32
    return %arg1, %arg0 : i32, i32
  }
  func.func @transform_2(%arg0: i32, %arg1: i32) -> (i32, i32) {
    %c0_i32 = arith.constant 0 : i32
    %c0_i32_0 = arith.constant 0 : i32
    return %c0_i32, %arg0 : i32, i32
  }
  func.func @transform_3(%arg0: i32, %arg1: i32) -> (i32, i32) {
    %c0_i32 = arith.constant 0 : i32
    %c0_i32_0 = arith.constant 0 : i32
    return %c0_i32, %arg0 : i32, i32
  }
}

module attributes {stable_mosaic.version = 11 : i64} {
  func.func @head_kernel(%arg0: memref<8x1024xbf16, #tpu.memory_space<vmem>>, %arg1: memref<1024x128xbf16, #tpu.memory_space<vmem>>, %arg2: memref<1x128xf32, #tpu.memory_space<vmem>>, %arg3: memref<128x1024xbf16, #tpu.memory_space<vmem>>, %arg4: memref<1x1024xf32, #tpu.memory_space<vmem>>, %arg5: memref<8x128xf32, #tpu.memory_space<vmem>>, %arg6: memref<8x1024xbf16, #tpu.memory_space<vmem>>) attributes {dimension_semantics = [], scalar_prefetch = 0 : i64, scratch_operands = 0 : i64, tpu.core_type = #tpu.core_type<tc>} {
    %c0 = arith.constant 0 : index
    %c0_0 = arith.constant 0 : index
    %0 = vector.load %arg0[%c0, %c0_0] : memref<8x1024xbf16, #tpu.memory_space<vmem>>, vector<8x1024xbf16>
    %c0_1 = arith.constant 0 : index
    %c0_2 = arith.constant 0 : index
    %1 = vector.load %arg1[%c0_1, %c0_2] : memref<1024x128xbf16, #tpu.memory_space<vmem>>, vector<1024x128xbf16>
    %cst = arith.constant dense<0.000000e+00> : vector<8x128xf32>
    %2 = tpu.matmul %0, %1, %cst {dimension_numbers = #tpu.dot_dimension_numbers<[1], [0], [0], [1], [0, 0, 1, 1], [], []>} : vector<8x1024xbf16>, vector<1024x128xbf16>, vector<8x128xf32> -> vector<8x128xf32>
    %c0_3 = arith.constant 0 : index
    %c0_4 = arith.constant 0 : index
    %3 = vector.load %arg2[%c0_3, %c0_4] : memref<1x128xf32, #tpu.memory_space<vmem>>, vector<1x128xf32>
    %4 = vector.broadcast %3 : vector<1x128xf32> to vector<8x128xf32>
    %5 = arith.addf %2, %4 : vector<8x128xf32>
    %cst_5 = arith.constant 0.000000e+00 : f32
    %6 = vector.broadcast %cst_5 : f32 to vector<8x128xf32>
    %7 = arith.cmpf oge, %5, %6 : vector<8x128xf32>
    %cst_6 = arith.constant 1.000000e-01 : f32
    %8 = vector.broadcast %cst_6 : f32 to vector<8x128xf32>
    %9 = arith.mulf %8, %5 : vector<8x128xf32>
    %10 = arith.select %7, %5, %9 : vector<8x128xi1>, vector<8x128xf32>
    %c0_7 = arith.constant 0 : index
    %c0_8 = arith.constant 0 : index
    %11 = vector.load %arg5[%c0_7, %c0_8] : memref<8x128xf32, #tpu.memory_space<vmem>>, vector<8x128xf32>
    tpu.vector_store %arg5[%c0_7, %c0_8], %10 {strides = array<i32>} : memref<8x128xf32, #tpu.memory_space<vmem>>, vector<8x128xf32>,
    %12 = arith.truncf %10 : vector<8x128xf32> to vector<8x128xbf16>
    %c0_9 = arith.constant 0 : index
    %c0_10 = arith.constant 0 : index
    %13 = vector.load %arg3[%c0_9, %c0_10] : memref<128x1024xbf16, #tpu.memory_space<vmem>>, vector<128x1024xbf16>
    %cst_11 = arith.constant dense<0.000000e+00> : vector<8x1024xf32>
    %14 = tpu.matmul %12, %13, %cst_11 {dimension_numbers = #tpu.dot_dimension_numbers<[1], [0], [0], [1], [0, 0, 1, 1], [], []>} : vector<8x128xbf16>, vector<128x1024xbf16>, vector<8x1024xf32> -> vector<8x1024xf32>
    %c0_12 = arith.constant 0 : index
    %c0_13 = arith.constant 0 : index
    %15 = vector.load %arg4[%c0_12, %c0_13] : memref<1x1024xf32, #tpu.memory_space<vmem>>, vector<1x1024xf32>
    %16 = vector.broadcast %15 : vector<1x1024xf32> to vector<8x1024xf32>
    %17 = arith.addf %14, %16 : vector<8x1024xf32>
    %cst_14 = arith.constant 5.000000e-01 : f32
    %18 = vector.broadcast %cst_14 : f32 to vector<8x1024xf32>
    %19 = arith.mulf %18, %17 : vector<8x1024xf32>
    %20 = math.tanh %19 : vector<8x1024xf32>
    %cst_15 = arith.constant 5.000000e-01 : f32
    %21 = vector.broadcast %cst_15 : f32 to vector<8x1024xf32>
    %22 = arith.mulf %21, %20 : vector<8x1024xf32>
    %cst_16 = arith.constant 5.000000e-01 : f32
    %23 = vector.broadcast %cst_16 : f32 to vector<8x1024xf32>
    %24 = arith.addf %22, %23 : vector<8x1024xf32>
    %25 = arith.truncf %24 : vector<8x1024xf32> to vector<8x1024xbf16>
    %c0_17 = arith.constant 0 : index
    %c0_18 = arith.constant 0 : index
    %26 = vector.load %arg6[%c0_17, %c0_18] : memref<8x1024xbf16, #tpu.memory_space<vmem>>, vector<8x1024xbf16>
    tpu.vector_store %arg6[%c0_17, %c0_18], %25 {strides = array<i32>} : memref<8x1024xbf16, #tpu.memory_space<vmem>>, vector<8x1024xbf16>,
    return
  }
}

</mosaic_0001>

<llo_original>
// kernel: tybalt_vae_forward.3
$region0: #{tybalt_vae_forward.3}
  #allocation0 [shape = 'u32[]', space=smem, size = 0x4, offset = 0x4, fixed_abs, tag = 'smem constant byte address 0x4 - core index']
  #allocation1 [shape = 'u32[144,128]{1,0:T(1,128)}', space=vmem, size = 0x12000, scoped, tag = 'internal scratch']
  #allocation2 [shape = 'f32[8,512]{1,0:T(8,128)}', space=vmem, size = 0x4000, scoped, tag = 'scratch operand']
  %s0 = inlined_call_operand.vmem [shape: bf16[8,256], index: 0, kind: input, shape index: {}]
  %s1 = inlined_call_operand.hbm [shape: bf16[256,1024], index: 1, kind: input, shape index: {}]
  %s2 = inlined_call_operand.vmem [shape: f32[1,1024], index: 2, kind: input, shape index: {}]
  %s3 = inlined_call_operand.vmem [shape: bf16[8,1024], index: 3, kind: output, shape index: {}]
  %s4 = sld [smem:[#allocation0]]
  $region57: #{tybalt_vae_forward.3} parent=0
    _
  %s6 = ssub.s32 1, %s4
  %s7 = scalar_select 0, %s6, %s4
  $region1: #{tybalt_vae_forward.3} parent=0
    #allocation3 [shape = 'u8[524288]{0}', space=vmem, size = 0x80000, scoped, tag = 'input window, operand 1']
    #allocation4 [shape = 's32[2]{0}', space=sflag, size = 0x8, scoped, tag = 'scoped memory for tybalt_vae_forward.3']
    %8 = vsyncpa [#allocation4], 0
    %s9 = scalar_lea.sflag [#allocation4], 1
    %10 = vsyncpa %s9, 0
    loop: start=0, step=1, limit=4
    $region2: #{tybalt_vae_forward.3} parent=1 // loop_pre_header
      _
    $region3: #{tybalt_vae_forward.3} parent=1 // loop_header
      %s12 = sphi 0, %s16
      %p13 = scmp.ge.s32.totalorder %s12, 4
      %s19 = sphi 0, %s31
      %s20 = sphi 0, %s27
      %s21 = sphi 0, %s19
      %s22 = sphi 0, %s20
      %s23 = sphi 0, %s21
      %s24 = sphi 0, %s22
      %s34 = sphi 0, %s36
      %s37 = sphi 0, %s34
      %s38 = sphi 0, %s37
      %s54 = sphi 0, %s38
      %s62 = sphi 0, %s64
      %s65 = sphi 0, %s62
      %s66 = sphi 0, %s65
      %s82 = sphi 0, %s66
      %s88 = sphi 0, %s90
      %s91 = sphi 0, %s88
      %s92 = sphi 0, %s91
      %s108 = sphi 0, %s92
      %s114 = sphi 0, %s116
      %s117 = sphi 0, %s114
      %s118 = sphi 0, %s117
      %s134 = sphi 0, %s118
    $region4: #{tybalt_vae_forward.3} parent=1 // loop_header_branch
      %15 = sbr.rel (%p13) target = $region8
    $region5: #{tybalt_vae_forward.3} parent=1 // loop_body
      %s17 = ssub.s32 %s12, 1
      %s18 = ssub.s32 %s12, 2
      %s25 = sadd.s32 1, %s20
      %p26 = scmp.ge.s32.totalorder %s25, 1
      %s27 = scalar_select %p26, 0, %s25
      %s28 = sadd.s32 1, %s19
      %s29 = scalar_select %p26, %s28, %s19
      %p30 = scmp.ge.s32.totalorder %s29, 2
      %s31 = scalar_select %p30, 0, %s29
      %s32 = ssub.s32 %s20, %s27
      %p33 = scmp.eq.s32.totalorder %s32, 0
      %s35 = sadd.s32 %s34, 1
      %s36 = scalar_select %p33, %s34, %s35
      %p39 = pneg %p33
      %p40 = scmp.eq.s32.totalorder %s12, 1
      %p41 = por %p39, %p40
      %p42 = scmp.ne.s32.totalorder %s34, %s37
      %p43 = scmp.eq.s32.totalorder %s12, 0
      %p44 = por %p42, %p43
      %p45 = scmp.ne.s32.totalorder %s34, %s37
      %p46 = scmp.eq.s32.totalorder %s17, 1
      %p47 = por %p45, %p46
      %p48 = scmp.ne.s32.totalorder %s37, %s38
      %p49 = scmp.eq.s32.totalorder %s17, 0
      %p50 = por %p48, %p49
      %p51 = scmp.ne.s32.totalorder %s37, %s38
      %p52 = scmp.eq.s32.totalorder %s18, 1
      %p53 = por %p51, %p52
      %p55 = scmp.ne.s32.totalorder %s38, %s54
      %p56 = scmp.eq.s32.totalorder %s18, 0
      %p57 = por %p55, %p56
      %s58 = ssub.s32 %s20, %s27
      %s59 = ssub.s32 %s19, %s31
      %s60 = sor.u32 %s58, %s59
      %p61 = scmp.eq.s32.totalorder %s60, 0
      %s63 = sadd.s32 %s62, 1
      %s64 = scalar_select %p61, %s62, %s63
      %p67 = pneg %p61
      %p68 = scmp.eq.s32.totalorder %s12, 1
      %p69 = por %p67, %p68
      %p70 = scmp.ne.s32.totalorder %s62, %s65
      %p71 = scmp.eq.s32.totalorder %s12, 0
      %p72 = por %p70, %p71
      %p73 = scmp.ne.s32.totalorder %s62, %s65
      %p74 = scmp.eq.s32.totalorder %s17, 1
      %p75 = por %p73, %p74
      %p76 = scmp.ne.s32.totalorder %s65, %s66
      %p77 = scmp.eq.s32.totalorder %s17, 0
      %p78 = por %p76, %p77
      %p79 = scmp.ne.s32.totalorder %s65, %s66
      %p80 = scmp.eq.s32.totalorder %s18, 1
      %p81 = por %p79, %p80
      %p83 = scmp.ne.s32.totalorder %s66, %s82
      %p84 = scmp.eq.s32.totalorder %s18, 0
      %p85 = por %p83, %p84
      %s86 = ssub.s32 %s19, %s31
      %p87 = scmp.eq.s32.totalorder %s86, 0
      %s89 = sadd.s32 %s88, 1
      %s90 = scalar_select %p87, %s88, %s89
      %p93 = pneg %p87
      %p94 = scmp.eq.s32.totalorder %s12, 1
      %p95 = por %p93, %p94
      %p96 = scmp.ne.s32.totalorder %s88, %s91
      %p97 = scmp.eq.s32.totalorder %s12, 0
      %p98 = por %p96, %p97
      %p99 = scmp.ne.s32.totalorder %s88, %s91
      %p100 = scmp.eq.s32.totalorder %s17, 1
      %p101 = por %p99, %p100
      %p102 = scmp.ne.s32.totalorder %s91, %s92
      %p103 = scmp.eq.s32.totalorder %s17, 0
      %p104 = por %p102, %p103
      %p105 = scmp.ne.s32.totalorder %s91, %s92
      %p106 = scmp.eq.s32.totalorder %s18, 1
      %p107 = por %p105, %p106
      %p109 = scmp.ne.s32.totalorder %s92, %s108
      %p110 = scmp.eq.s32.totalorder %s18, 0
      %p111 = por %p109, %p110
      %s112 = ssub.s32 %s19, %s31
      %p113 = scmp.eq.s32.totalorder %s112, 0
      %s115 = sadd.s32 %s114, 1
      %s116 = scalar_select %p113, %s114, %s115
      %p119 = pneg %p113
      %p120 = scmp.eq.s32.totalorder %s12, 1
      %p121 = por %p119, %p120
      %p122 = scmp.ne.s32.totalorder %s114, %s117
      %p123 = scmp.eq.s32.totalorder %s12, 0
      %p124 = por %p122, %p123
      %p125 = scmp.ne.s32.totalorder %s114, %s117
      %p126 = scmp.eq.s32.totalorder %s17, 1
      %p127 = por %p125, %p126
      %p128 = scmp.ne.s32.totalorder %s117, %s118
      %p129 = scmp.eq.s32.totalorder %s17, 0
      %p130 = por %p128, %p129
      %p131 = scmp.ne.s32.totalorder %s117, %s118
      %p132 = scmp.eq.s32.totalorder %s18, 1
      %p133 = por %p131, %p132
      %p135 = scmp.ne.s32.totalorder %s118, %s134
      %p136 = scmp.eq.s32.totalorder %s18, 0
      %p137 = por %p135, %p136
      %p138 = scmp.le.s32.totalorder 1, %s12
      %p139 = scmp.lt.s32.totalorder %s12, 3
      %p140 = pnand %p138, %p139
      %p141 = pneg %p140
      // Predicated region
      $region9: #{tybalt_vae_forward.3} parent=5 // pred_check
        _
      $region10: #{tybalt_vae_forward.3} parent=5 // pred_check_branch
        %143 = sbr.rel (%p140) target = $region12
      $region11: #{tybalt_vae_forward.3} parent=5 // pred_region
        %s144 = ssub.s32 %s12, 1
        // Predicated region
        $region13: #{tybalt_vae_forward.3} parent=11 // pred_check
          %p145 = pneg %p50
        $region14: #{tybalt_vae_forward.3} parent=11 // pred_check_branch
          %147 = sbr.rel (%p145) target = $region16
        $region15: #{tybalt_vae_forward.3} parent=11 // pred_region
          %s148 = smul.u32 2, %s22
          %p149 = scmp.lt.s32.totalorder %s148, 1
          %s150 = scalar_select %p149, %s148, 1
          %s151 = smul.addr %s150, 4
          %s152 = scalar_lea.vmem %s0, %s151
          %s153 = smul.u32 2, %s22
        $region16: #{tybalt_vae_forward.3} parent=11 // pred_fallthru
          _
      $region12: #{tybalt_vae_forward.3} parent=5 // pred_fallthru
        _
      %p154 = scmp.lt.s32.totalorder %s12, 2
      // Predicated region
      $region17: #{tybalt_vae_forward.3} parent=5 // pred_check
        %p155 = pneg %p154
      $region18: #{tybalt_vae_forward.3} parent=5 // pred_check_branch
        %157 = sbr.rel (%p155) target = $region20
      $region19: #{tybalt_vae_forward.3} parent=5 // pred_region
        // Predicated region
        $region21: #{tybalt_vae_forward.3} parent=19 // pred_check
          %p158 = pneg %p72
        $region22: #{tybalt_vae_forward.3} parent=19 // pred_check_branch
          %160 = sbr.rel (%p158) target = $region24
        $region23: #{tybalt_vae_forward.3} parent=19 // pred_region
          %s161 = sand.u32 %s62, 1
          %s162 = scalar_lea.sflag [#allocation4], %s161
          %s163 = sand.u32 %s62, 1
          %s164 = smul.addr %s163, 512
          %s165 = scalar_lea.vmem [#allocation3], %s164
          %s166 = smul.u32 32, %s20
          %s167 = smul.u32 4, %s19
          %s169 = ssub.s32 8192, 8192
          %170 = vsyncadd %s162, %s169
          %s171 = smul.addr %s166, 8
          %s172 = sadd.s32 %s167, %s171
          %s173 = smul.addr %s172, 64
          %s174 = scalar_lea.hbm %s1, %s173
          %s175 = sshll.u32 %s165, 4
          %s176 = int_to_ptr.vmem [resolvable:$true] %s175
          %181 = dma.hbm_to_vmem [thread:$0]  %s174, 8192, %s176, %s162, 512, 256, 16
        $region24: #{tybalt_vae_forward.3} parent=19 // pred_fallthru
          _
        // Predicated region
        $region25: #{tybalt_vae_forward.3} parent=19 // pred_check
          %p182 = pneg %p98
        $region26: #{tybalt_vae_forward.3} parent=19 // pred_check_branch
          %184 = sbr.rel (%p182) target = $region28
        $region27: #{tybalt_vae_forward.3} parent=19 // pred_region
          %s185 = smul.u32 4, %s19
          %p186 = scmp.lt.s32.totalorder %s185, 7
          %s187 = scalar_select %p186, %s185, 7
          %s188 = scalar_lea.vmem %s2, %s187
          %s189 = smul.u32 4, %s19
        $region28: #{tybalt_vae_forward.3} parent=19 // pred_fallthru
          _
      $region20: #{tybalt_vae_forward.3} parent=5 // pred_fallthru
        _
      %p190 = scmp.le.s32.totalorder 1, %s12
      %p191 = scmp.lt.s32.totalorder %s12, 3
      %p192 = pnand %p190, %p191
      %p193 = pneg %p192
      // Predicated region
      $region29: #{tybalt_vae_forward.3} parent=5 // pred_check
        _
      $region30: #{tybalt_vae_forward.3} parent=5 // pred_check_branch
        %195 = sbr.rel (%p192) target = $region32
      $region31: #{tybalt_vae_forward.3} parent=5 // pred_region
        %s196 = ssub.s32 %s12, 1
        %s197 = sand.u32 %s65, 1
        %s198 = scalar_lea.sflag [#allocation4], %s197
        %s199 = sand.u32 %s65, 1
        %s200 = smul.addr %s199, 512
        %s201 = scalar_lea.vmem [#allocation3], %s200
        // Predicated region
        $region33: #{tybalt_vae_forward.3} parent=31 // pred_check
          %p202 = pneg %p78
        $region34: #{tybalt_vae_forward.3} parent=31 // pred_check_branch
          %204 = sbr.rel (%p202) target = $region36
        $region35: #{tybalt_vae_forward.3} parent=31 // pred_region
          %205 = dma.done %s198, 8192
        $region36: #{tybalt_vae_forward.3} parent=31 // pred_fallthru
          _
        %s206 = smul.u32 2, %s22
        %p207 = scmp.lt.s32.totalorder %s206, 1
        %s208 = scalar_select %p207, %s206, 1
        %s209 = smul.addr %s208, 4
        %s210 = scalar_lea.vmem %s0, %s209
        %p211 = pneg %p50
        %p212 = pneg %p47
        %s213 = sand.u32 %s65, 1
        %s214 = scalar_lea.sflag [#allocation4], %s213
        %s215 = sand.u32 %s65, 1
        %s216 = smul.addr %s215, 512
        %s217 = scalar_lea.vmem [#allocation3], %s216
        %p218 = pneg %p78
        %p219 = pneg %p75
        %s220 = smul.u32 4, %s21
        %p221 = scmp.lt.s32.totalorder %s220, 7
        %s222 = scalar_select %p221, %s220, 7
        %s223 = scalar_lea.vmem %s2, %s222
        %p224 = pneg %p104
        %p225 = pneg %p101
        %p226 = pneg %p130
        %p227 = pneg %p127
        %s228 = smul.u32 4, %s21
        %p229 = scmp.lt.s32.totalorder %s228, 7
        %s230 = scalar_select %p229, %s228, 7
        %s231 = smul.addr %s230, 4
        %s232 = scalar_lea.vmem %s3, %s231
        %s233 = smul.u32 2, %s22
        %p234 = scmp.lt.s32.totalorder %s233, 1
        %s235 = scalar_select %p234, %s233, 1
        %s236 = smul.addr %s235, 4
        %s237 = scalar_lea.vmem %s0, %s236
        %s238 = smul.u32 2, %s22
        %s239 = smul.u32 32, %s22
        %s240 = smul.u32 4, %s21
        %s241 = smul.u32 4, %s21
        %p242 = scmp.lt.s32.totalorder %s241, 7
        %s243 = scalar_select %p242, %s241, 7
        %s244 = scalar_lea.vmem %s2, %s243
        %s245 = smul.u32 4, %s21
        %s246 = smul.u32 4, %s21
        %p247 = scmp.lt.s32.totalorder %s246, 7
        %s248 = scalar_select %p247, %s246, 7
        %s249 = smul.addr %s248, 4
        %s250 = scalar_lea.vmem %s3, %s249
        %s251 = smul.u32 4, %s21
        %p252 = scmp.eq.s32.totalorder %s22, 0
        // Predicated region
        $region37: #{tybalt_vae_forward.3} parent=31 // pred_check
          %p253 = pneg %p252
        $region38: #{tybalt_vae_forward.3} parent=31 // pred_check_branch
          %255 = sbr.rel (%p253) target = $region40
        $region39: #{tybalt_vae_forward.3} parent=31 // pred_region
          %256 = vst [vmem:[#allocation2] sm:$0xff] 0.0
          %257 = vst [vmem:[#allocation2 + $0x8] sm:$0xff] 0.0
          %258 = vst [vmem:[#allocation2 + $0x10] sm:$0xff] 0.0
          %259 = vst [vmem:[#allocation2 + $0x18] sm:$0xff] 0.0
        $region40: #{tybalt_vae_forward.3} parent=31 // pred_fallthru
          _
        %v260 = vld [vmem:[#allocation2] sm:$0xff]
        %v261 = vld [vmem:[#allocation2 + $0x8] sm:$0xff]
        %v262 = vld [vmem:[#allocation2 + $0x10] sm:$0xff]
        %v263 = vld [vmem:[#allocation2 + $0x18] sm:$0xff]
        %v264 = vld [vmem:[%s237] sm:$0xff]
        %v265 = vld [vmem:[%s201] sm:$0xff]
        %v266 = vld [vmem:[%s201 + $0x8] sm:$0xff]
        %v267 = vld [vmem:[%s201 + $0x10] sm:$0xff]
        %v268 = vld [vmem:[%s201 + $0x18] sm:$0xff]
        %v269 = vld [vmem:[%s201 + $0x20] sm:$0xff]
        %v270 = vld [vmem:[%s201 + $0x28] sm:$0xff]
        %v271 = vld [vmem:[%s201 + $0x30] sm:$0xff]
        %v272 = vld [vmem:[%s201 + $0x38] sm:$0xff]
        %v273 = vld [vmem:[%s201 + $0x40] sm:$0xff]
        %v274 = vld [vmem:[%s201 + $0x48] sm:$0xff]
        %v275 = vld [vmem:[%s201 + $0x50] sm:$0xff]
        %v276 = vld [vmem:[%s201 + $0x58] sm:$0xff]
        %v277 = vld [vmem:[%s201 + $0x60] sm:$0xff]
        %v278 = vld [vmem:[%s201 + $0x68] sm:$0xff]
        %v279 = vld [vmem:[%s201 + $0x70] sm:$0xff]
        %v280 = vld [vmem:[%s201 + $0x78] sm:$0xff]
        %v281 = vld [vmem:[%s201 + $0x80] sm:$0xff]
        %v282 = vld [vmem:[%s201 + $0x88] sm:$0xff]
        %v283 = vld [vmem:[%s201 + $0x90] sm:$0xff]
        %v284 = vld [vmem:[%s201 + $0x98] sm:$0xff]
        %v285 = vld [vmem:[%s201 + $0xa0] sm:$0xff]
        %v286 = vld [vmem:[%s201 + $0xa8] sm:$0xff]
        %v287 = vld [vmem:[%s201 + $0xb0] sm:$0xff]
        %v288 = vld [vmem:[%s201 + $0xb8] sm:$0xff]
        %v289 = vld [vmem:[%s201 + $0xc0] sm:$0xff]
        %v290 = vld [vmem:[%s201 + $0xc8] sm:$0xff]
        %v291 = vld [vmem:[%s201 + $0xd0] sm:$0xff]
        %v292 = vld [vmem:[%s201 + $0xd8] sm:$0xff]
        %v293 = vld [vmem:[%s201 + $0xe0] sm:$0xff]
        %v294 = vld [vmem:[%s201 + $0xe8] sm:$0xff]
        %v295 = vld [vmem:[%s201 + $0xf0] sm:$0xff]
        %v296 = vld [vmem:[%s201 + $0xf8] sm:$0xff]
        %v297 = vld [vmem:[%s201 + $0x100] sm:$0xff]
        %v298 = vld [vmem:[%s201 + $0x108] sm:$0xff]
        %v299 = vld [vmem:[%s201 + $0x110] sm:$0xff]
        %v300 = vld [vmem:[%s201 + $0x118] sm:$0xff]
        %v301 = vld [vmem:[%s201 + $0x120] sm:$0xff]
        %v302 = vld [vmem:[%s201 + $0x128] sm:$0xff]
        %v303 = vld [vmem:[%s201 + $0x130] sm:$0xff]
        %v304 = vld [vmem:[%s201 + $0x138] sm:$0xff]
        %v305 = vld [vmem:[%s201 + $0x140] sm:$0xff]
        %v306 = vld [vmem:[%s201 + $0x148] sm:$0xff]
        %v307 = vld [vmem:[%s201 + $0x150] sm:$0xff]
        %v308 = vld [vmem:[%s201 + $0x158] sm:$0xff]
        %v309 = vld [vmem:[%s201 + $0x160] sm:$0xff]
        %v310 = vld [vmem:[%s201 + $0x168] sm:$0xff]
        %v311 = vld [vmem:[%s201 + $0x170] sm:$0xff]
        %v312 = vld [vmem:[%s201 + $0x178] sm:$0xff]
        %v313 = vld [vmem:[%s201 + $0x180] sm:$0xff]
        %v314 = vld [vmem:[%s201 + $0x188] sm:$0xff]
        %v315 = vld [vmem:[%s201 + $0x190] sm:$0xff]
        %v316 = vld [vmem:[%s201 + $0x198] sm:$0xff]
        %v317 = vld [vmem:[%s201 + $0x1a0] sm:$0xff]
        %v318 = vld [vmem:[%s201 + $0x1a8] sm:$0xff]
        %v319 = vld [vmem:[%s201 + $0x1b0] sm:$0xff]
        %v320 = vld [vmem:[%s201 + $0x1b8] sm:$0xff]
        %v321 = vld [vmem:[%s201 + $0x1c0] sm:$0xff]
        %v322 = vld [vmem:[%s201 + $0x1c8] sm:$0xff]
        %v323 = vld [vmem:[%s201 + $0x1d0] sm:$0xff]
        %v324 = vld [vmem:[%s201 + $0x1d8] sm:$0xff]
        %v325 = vld [vmem:[%s201 + $0x1e0] sm:$0xff]
        %v326 = vld [vmem:[%s201 + $0x1e8] sm:$0xff]
        %v327 = vld [vmem:[%s201 + $0x1f0] sm:$0xff]
        %v328 = vld [vmem:[%s201 + $0x1f8] sm:$0xff]
        %v330 = vunpack.c.l.b16 %v264
        %v331 = vunpack.c.h.b16 %v264
        %v332 = vpack.c.b16 %v330, %v330
        %v333 = vpack.c.b16 %v331, %v331
        %v400 = vunpack.c.l.b16 %v265
        %v401 = vunpack.c.h.b16 %v265
        %v402 = vunpack.c.l.b16 %v266
        %v403 = vunpack.c.h.b16 %v266
        %v404 = vunpack.c.l.b16 %v267
        %v405 = vunpack.c.h.b16 %v267
        %v406 = vunpack.c.l.b16 %v268
        %v407 = vunpack.c.h.b16 %v268
        %v408 = vunpack.c.l.b16 %v269
        %v409 = vunpack.c.h.b16 %v269
        %v410 = vunpack.c.l.b16 %v270
        %v411 = vunpack.c.h.b16 %v270
        %v412 = vunpack.c.l.b16 %v271
        %v413 = vunpack.c.h.b16 %v271
        %v414 = vunpack.c.l.b16 %v272
        %v415 = vunpack.c.h.b16 %v272
        %v416 = vunpack.c.l.b16 %v273
        %v417 = vunpack.c.h.b16 %v273
        %v418 = vunpack.c.l.b16 %v274
        %v419 = vunpack.c.h.b16 %v274
        %v420 = vunpack.c.l.b16 %v275
        %v421 = vunpack.c.h.b16 %v275
        %v422 = vunpack.c.l.b16 %v276
        %v423 = vunpack.c.h.b16 %v276
        %v424 = vunpack.c.l.b16 %v277
        %v425 = vunpack.c.h.b16 %v277
        %v426 = vunpack.c.l.b16 %v278
        %v427 = vunpack.c.h.b16 %v278
        %v428 = vunpack.c.l.b16 %v279
        %v429 = vunpack.c.h.b16 %v279
        %v430 = vunpack.c.l.b16 %v280
        %v431 = vunpack.c.h.b16 %v280
        %v432 = vunpack.c.l.b16 %v281
        %v433 = vunpack.c.h.b16 %v281
        %v434 = vunpack.c.l.b16 %v282
        %v435 = vunpack.c.h.b16 %v282
        %v436 = vunpack.c.l.b16 %v283
        %v437 = vunpack.c.h.b16 %v283
        %v438 = vunpack.c.l.b16 %v284
        %v439 = vunpack.c.h.b16 %v284
        %v440 = vunpack.c.l.b16 %v285
        %v441 = vunpack.c.h.b16 %v285
        %v442 = vunpack.c.l.b16 %v286
        %v443 = vunpack.c.h.b16 %v286
        %v444 = vunpack.c.l.b16 %v287
        %v445 = vunpack.c.h.b16 %v287
        %v446 = vunpack.c.l.b16 %v288
        %v447 = vunpack.c.h.b16 %v288
        %v448 = vunpack.c.l.b16 %v289
        %v449 = vunpack.c.h.b16 %v289
        %v450 = vunpack.c.l.b16 %v290
        %v451 = vunpack.c.h.b16 %v290
        %v452 = vunpack.c.l.b16 %v291
        %v453 = vunpack.c.h.b16 %v291
        %v454 = vunpack.c.l.b16 %v292
        %v455 = vunpack.c.h.b16 %v292
        %v456 = vunpack.c.l.b16 %v293
        %v457 = vunpack.c.h.b16 %v293
        %v458 = vunpack.c.l.b16 %v294
        %v459 = vunpack.c.h.b16 %v294
        %v460 = vunpack.c.l.b16 %v295
        %v461 = vunpack.c.h.b16 %v295
        %v462 = vunpack.c.l.b16 %v296
        %v463 = vunpack.c.h.b16 %v296
        %v464 = vunpack.c.l.b16 %v297
        %v465 = vunpack.c.h.b16 %v297
        %v466 = vunpack.c.l.b16 %v298
        %v467 = vunpack.c.h.b16 %v298
        %v468 = vunpack.c.l.b16 %v299
        %v469 = vunpack.c.h.b16 %v299
        %v470 = vunpack.c.l.b16 %v300
        %v471 = vunpack.c.h.b16 %v300
        %v472 = vunpack.c.l.b16 %v301
        %v473 = vunpack.c.h.b16 %v301
        %v474 = vunpack.c.l.b16 %v302
        %v475 = vunpack.c.h.b16 %v302
        %v476 = vunpack.c.l.b16 %v303
        %v477 = vunpack.c.h.b16 %v303
        %v478 = vunpack.c.l.b16 %v304
        %v479 = vunpack.c.h.b16 %v304
        %v480 = vunpack.c.l.b16 %v305
        %v481 = vunpack.c.h.b16 %v305
        %v482 = vunpack.c.l.b16 %v306
        %v483 = vunpack.c.h.b16 %v306
        %v484 = vunpack.c.l.b16 %v307
        %v485 = vunpack.c.h.b16 %v307
        %v486 = vunpack.c.l.b16 %v308
        %v487 = vunpack.c.h.b16 %v308
        %v488 = vunpack.c.l.b16 %v309
        %v489 = vunpack.c.h.b16 %v309
        %v490 = vunpack.c.l.b16 %v310
        %v491 = vunpack.c.h.b16 %v310
        %v492 = vunpack.c.l.b16 %v311
        %v493 = vunpack.c.h.b16 %v311
        %v494 = vunpack.c.l.b16 %v312
        %v495 = vunpack.c.h.b16 %v312
        %v496 = vunpack.c.l.b16 %v313
        %v497 = vunpack.c.h.b16 %v313
        %v498 = vunpack.c.l.b16 %v314
        %v499 = vunpack.c.h.b16 %v314
        %v500 = vunpack.c.l.b16 %v315
        %v501 = vunpack.c.h.b16 %v315
        %v502 = vunpack.c.l.b16 %v316
        %v503 = vunpack.c.h.b16 %v316
        %v504 = vunpack.c.l.b16 %v317
        %v505 = vunpack.c.h.b16 %v317
        %v506 = vunpack.c.l.b16 %v318
        %v507 = vunpack.c.h.b16 %v318
        %v508 = vunpack.c.l.b16 %v319
        %v509 = vunpack.c.h.b16 %v319
        %v510 = vunpack.c.l.b16 %v320
        %v511 = vunpack.c.h.b16 %v320
        %v512 = vunpack.c.l.b16 %v321
        %v513 = vunpack.c.h.b16 %v321
        %v514 = vunpack.c.l.b16 %v322
        %v515 = vunpack.c.h.b16 %v322
        %v516 = vunpack.c.l.b16 %v323
        %v517 = vunpack.c.h.b16 %v323
        %v518 = vunpack.c.l.b16 %v324
        %v519 = vunpack.c.h.b16 %v324
        %v520 = vunpack.c.l.b16 %v325
        %v521 = vunpack.c.h.b16 %v325
        %v522 = vunpack.c.l.b16 %v326
        %v523 = vunpack.c.h.b16 %v326
        %v524 = vunpack.c.l.b16 %v327
        %v525 = vunpack.c.h.b16 %v327
        %v526 = vunpack.c.l.b16 %v328
        %v527 = vunpack.c.h.b16 %v328
        %v528 = vpack.c.b16 %v404, %v400
        %v529 = vpack.c.b16 %v405, %v401
        %v530 = vpack.c.b16 %v406, %v402
        %v531 = vpack.c.b16 %v407, %v403
        %v532 = vpack.c.b16 %v412, %v408
        %v533 = vpack.c.b16 %v413, %v409
        %v534 = vpack.c.b16 %v414, %v410
        %v535 = vpack.c.b16 %v415, %v411
        %v536 = vpack.c.b16 %v420, %v416
        %v537 = vpack.c.b16 %v421, %v417
        %v538 = vpack.c.b16 %v422, %v418
        %v539 = vpack.c.b16 %v423, %v419
        %v540 = vpack.c.b16 %v428, %v424
        %v541 = vpack.c.b16 %v429, %v425
        %v542 = vpack.c.b16 %v430, %v426
        %v543 = vpack.c.b16 %v431, %v427
        %v544 = vpack.c.b16 %v436, %v432
        %v545 = vpack.c.b16 %v437, %v433
        %v546 = vpack.c.b16 %v438, %v434
        %v547 = vpack.c.b16 %v439, %v435
        %v548 = vpack.c.b16 %v444, %v440
        %v549 = vpack.c.b16 %v445, %v441
        %v550 = vpack.c.b16 %v446, %v442
        %v551 = vpack.c.b16 %v447, %v443
        %v552 = vpack.c.b16 %v452, %v448
        %v553 = vpack.c.b16 %v453, %v449
        %v554 = vpack.c.b16 %v454, %v450
        %v555 = vpack.c.b16 %v455, %v451
        %v556 = vpack.c.b16 %v460, %v456
        %v557 = vpack.c.b16 %v461, %v457
        %v558 = vpack.c.b16 %v462, %v458
        %v559 = vpack.c.b16 %v463, %v459
        %v560 = vpack.c.b16 %v468, %v464
        %v561 = vpack.c.b16 %v469, %v465
        %v562 = vpack.c.b16 %v470, %v466
        %v563 = vpack.c.b16 %v471, %v467
        %v564 = vpack.c.b16 %v476, %v472
        %v565 = vpack.c.b16 %v477, %v473
        %v566 = vpack.c.b16 %v478, %v474
        %v567 = vpack.c.b16 %v479, %v475
        %v568 = vpack.c.b16 %v484, %v480
        %v569 = vpack.c.b16 %v485, %v481
        %v570 = vpack.c.b16 %v486, %v482
        %v571 = vpack.c.b16 %v487, %v483
        %v572 = vpack.c.b16 %v492, %v488
        %v573 = vpack.c.b16 %v493, %v489
        %v574 = vpack.c.b16 %v494, %v490
        %v575 = vpack.c.b16 %v495, %v491
        %v576 = vpack.c.b16 %v500, %v496
        %v577 = vpack.c.b16 %v501, %v497
        %v578 = vpack.c.b16 %v502, %v498
        %v579 = vpack.c.b16 %v503, %v499
        %v580 = vpack.c.b16 %v508, %v504
        %v581 = vpack.c.b16 %v509, %v505
        %v582 = vpack.c.b16 %v510, %v506
        %v583 = vpack.c.b16 %v511, %v507
        %v584 = vpack.c.b16 %v516, %v512
        %v585 = vpack.c.b16 %v517, %v513
        %v586 = vpack.c.b16 %v518, %v514
        %v587 = vpack.c.b16 %v519, %v515
        %v588 = vpack.c.b16 %v524, %v520
        %v589 = vpack.c.b16 %v525, %v521
        %v590 = vpack.c.b16 %v526, %v522
        %v591 = vpack.c.b16 %v527, %v523
        %656 = vmatprep.subr.bf16.mxu0 %v529
        %657 = vmatpush1.bf16.msra.mxu0 %v528
        %658 = vmatprep.subr.bf16.mxu0 %v533
        %659 = vmatpush1.bf16.msra.mxu0 %v532
        %660 = vmatprep.subr.bf16.mxu0 %v537
        %661 = vmatpush1.bf16.msra.mxu0 %v536
        %662 = vmatprep.subr.bf16.mxu0 %v541
        %663 = vmatpush1.bf16.msra.mxu0 %v540
        %664 = vmatprep.subr.bf16.mxu0 %v545
        %665 = vmatpush1.bf16.msra.mxu0 %v544
        %666 = vmatprep.subr.bf16.mxu0 %v549
        %667 = vmatpush1.bf16.msra.mxu0 %v548
        %668 = vmatprep.subr.bf16.mxu0 %v553
        %669 = vmatpush1.bf16.msra.mxu0 %v552
        %670 = vmatprep.subr.bf16.mxu0 %v557
        %671 = vmatpush1.bf16.msra.mxu0 %v556
        %672 = vmatprep.subr.bf16.mxu0 %v561
        %673 = vmatpush1.bf16.msra.mxu0 %v560
        %674 = vmatprep.subr.bf16.mxu0 %v565
        %675 = vmatpush1.bf16.msra.mxu0 %v564
        %676 = vmatprep.subr.bf16.mxu0 %v569
        %677 = vmatpush1.bf16.msra.mxu0 %v568
        %678 = vmatprep.subr.bf16.mxu0 %v573
        %679 = vmatpush1.bf16.msra.mxu0 %v572
        %680 = vmatprep.subr.bf16.mxu0 %v577
        %681 = vmatpush1.bf16.msra.mxu0 %v576
        %682 = vmatprep.subr.bf16.mxu0 %v581
        %683 = vmatpush1.bf16.msra.mxu0 %v580
        %684 = vmatprep.subr.bf16.mxu0 %v585
        %685 = vmatpush1.bf16.msra.mxu0 %v584
        %686 = vmatprep.subr.bf16.mxu0 %v589
        %687 = vmatpush1.bf16.msra.mxu0 %v588
        %688 = vmatprep.mubr.bf16.mxu0 %v333
        %689 = vmatmul.mubr.bf16.gmra.mrb[0].mxu0 %v332
        %v690 = vpop.f32.mrb[0].mxu0
        %v691 = vadd.f32 0.0, %v690
        %v692 = vpop.f32.mrb[0].mxu0
        %v693 = vadd.f32 0.0, %v692
        %v694 = vpop.f32.mrb[0].mxu0
        %v695 = vpop.f32.mrb[0].mxu0
        %696 = vdwg.mxu0
        %697 = vmatprep.subr.bf16.mxu0 %v531
        %698 = vmatpush1.bf16.msra.mxu0 %v530
        %699 = vmatprep.subr.bf16.mxu0 %v535
        %700 = vmatpush1.bf16.msra.mxu0 %v534
        %701 = vmatprep.subr.bf16.mxu0 %v539
        %702 = vmatpush1.bf16.msra.mxu0 %v538
        %703 = vmatprep.subr.bf16.mxu0 %v543
        %704 = vmatpush1.bf16.msra.mxu0 %v542
        %705 = vmatprep.subr.bf16.mxu0 %v547
        %706 = vmatpush1.bf16.msra.mxu0 %v546
        %707 = vmatprep.subr.bf16.mxu0 %v551
        %708 = vmatpush1.bf16.msra.mxu0 %v550
        %709 = vmatprep.subr.bf16.mxu0 %v555
        %710 = vmatpush1.bf16.msra.mxu0 %v554
        %711 = vmatprep.subr.bf16.mxu0 %v559
        %712 = vmatpush1.bf16.msra.mxu0 %v558
        %713 = vmatprep.subr.bf16.mxu0 %v563
        %714 = vmatpush1.bf16.msra.mxu0 %v562
        %715 = vmatprep.subr.bf16.mxu0 %v567
        %716 = vmatpush1.bf16.msra.mxu0 %v566
        %717 = vmatprep.subr.bf16.mxu0 %v571
        %718 = vmatpush1.bf16.msra.mxu0 %v570
        %719 = vmatprep.subr.bf16.mxu0 %v575
        %720 = vmatpush1.bf16.msra.mxu0 %v574
        %721 = vmatprep.subr.bf16.mxu0 %v579
        %722 = vmatpush1.bf16.msra.mxu0 %v578
        %723 = vmatprep.subr.bf16.mxu0 %v583
        %724 = vmatpush1.bf16.msra.mxu0 %v582
        %725 = vmatprep.subr.bf16.mxu0 %v587
        %726 = vmatpush1.bf16.msra.mxu0 %v586
        %727 = vmatprep.subr.bf16.mxu0 %v591
        %728 = vmatpush1.bf16.msra.mxu0 %v590
        %729 = vmatprep.mubr.bf16.mxu0 %v333
        %730 = vmatmul.mubr.bf16.gmra.mrb[0].mxu0 %v332
        %v731 = vpop.f32.mrb[0].mxu0
        %v732 = vadd.f32 0.0, %v731
        %v733 = vpop.f32.mrb[0].mxu0
        %v734 = vadd.f32 0.0, %v733
        %v735 = vpop.f32.mrb[0].mxu0
        %v736 = vpop.f32.mrb[0].mxu0
        %737 = vdwg.mxu0
        %v738 = vadd.f32 %v260, %v691
        %v739 = vadd.f32 %v261, %v693
        %v740 = vadd.f32 %v262, %v732
        %v741 = vadd.f32 %v263, %v734
        %742 = vst [vmem:[#allocation2] sm:$0xff] %v738
        %743 = vst [vmem:[#allocation2 + $0x8] sm:$0xff] %v739
        %744 = vst [vmem:[#allocation2 + $0x10] sm:$0xff] %v740
        %745 = vst [vmem:[#allocation2 + $0x18] sm:$0xff] %v741
        // Predicated region
        $region41: #{tybalt_vae_forward.3} parent=31 // pred_check
          %p746 = pneg %p252
        $region42: #{tybalt_vae_forward.3} parent=31 // pred_check_branch
          %748 = sbr.rel (%p746) target = $region44
        $region43: #{tybalt_vae_forward.3} parent=31 // pred_region
          %v749 = vld [vmem:[#allocation2] sm:$0xff]
          %v750 = vld [vmem:[#allocation2 + $0x8] sm:$0xff]
          %v751 = vld [vmem:[#allocation2 + $0x10] sm:$0xff]
          %v752 = vld [vmem:[#allocation2 + $0x18] sm:$0xff]
          %v753 = vld [vmem:[%s244] sm:$0xf]
          %v755 = vlaneseq
          %v756 = vshrl.u32 %v755, 7
          %v757 = vsub.s32 0, %v756
          %v758 = vrot.slane %v753, %v757
          %v759 = vlaneseq
          %v760 = vshrl.u32 %v759, 7
          %v761 = vsub.s32 1, %v760
          %v762 = vrot.slane %v753, %v761
          %v763 = vlaneseq
          %v764 = vshrl.u32 %v763, 7
          %v765 = vsub.s32 2, %v764
          %v766 = vrot.slane %v753, %v765
          %v767 = vlaneseq
          %v768 = vshrl.u32 %v767, 7
          %v769 = vsub.s32 3, %v768
          %v770 = vrot.slane %v753, %v769
          %v775 = vadd.f32 %v749, %v758
          %v776 = vadd.f32 %v750, %v762
          %v777 = vadd.f32 %v751, %v766
          %v778 = vadd.f32 %v752, %v770
          %vm779 = vcmp.ge.f32.partialorder %v775, 0.0
          %vm780 = vcmp.ge.f32.partialorder %v776, 0.0
          %vm781 = vcmp.ge.f32.partialorder %v777, 0.0
          %vm782 = vcmp.ge.f32.partialorder %v778, 0.0
          %v783 = vmul.f32 %v775, 0.1
          %v784 = vmul.f32 %v776, 0.1
          %v785 = vmul.f32 %v777, 0.1
          %v786 = vmul.f32 %v778, 0.1
          %v787 = vsel %vm779, %v775, %v783
          %v788 = vsel %vm780, %v776, %v784
          %v789 = vsel %vm781, %v777, %v785
          %v790 = vsel %vm782, %v778, %v786
          %v791 = vpack.c.bf16 %v787, %v787
          %v792 = vpack.c.bf16 %v788, %v788
          %v793 = vpack.c.bf16 %v789, %v789
          %v794 = vpack.c.bf16 %v790, %v790
          %v799 = vunpack.c.l.b16 %v791
          %v800 = vunpack.c.l.b16 %v792
          %v801 = vunpack.c.l.b16 %v793
          %v802 = vunpack.c.l.b16 %v794
          %v803 = vpack.c.b16 %v800, %v799
          %v804 = vpack.c.b16 %v802, %v801
          %807 = vst [vmem:[%s250] sm:$0xff] %v803
          %808 = vst [vmem:[%s250 + $0x8] sm:$0xff] %v804
        $region44: #{tybalt_vae_forward.3} parent=31 // pred_fallthru
          _
        %s809 = smul.u32 4, %s21
        %p810 = scmp.lt.s32.totalorder %s809, 7
        %s811 = scalar_select %p810, %s809, 7
        %s812 = smul.addr %s811, 4
        %s813 = scalar_lea.vmem %s3, %s812
        // Predicated region
        $region45: #{tybalt_vae_forward.3} parent=31 // pred_check
          %p814 = pneg %p127
        $region46: #{tybalt_vae_forward.3} parent=31 // pred_check_branch
          %816 = sbr.rel (%p814) target = $region48
        $region47: #{tybalt_vae_forward.3} parent=31 // pred_region
          %s817 = smul.u32 4, %s21
        $region48: #{tybalt_vae_forward.3} parent=31 // pred_fallthru
          _
      $region32: #{tybalt_vae_forward.3} parent=5 // pred_fallthru
        _
      %p818 = scmp.le.s32.totalorder 2, %s12
      // Predicated region
      $region49: #{tybalt_vae_forward.3} parent=5 // pred_check
        %p819 = pneg %p818
      $region50: #{tybalt_vae_forward.3} parent=5 // pred_check_branch
        %821 = sbr.rel (%p819) target = $region52
      $region51: #{tybalt_vae_forward.3} parent=5 // pred_region
        %s822 = ssub.s32 %s12, 2
        // Predicated region
        $region53: #{tybalt_vae_forward.3} parent=51 // pred_check
          %p823 = pneg %p133
        $region54: #{tybalt_vae_forward.3} parent=51 // pred_check_branch
          %825 = sbr.rel (%p823) target = $region56
        $region55: #{tybalt_vae_forward.3} parent=51 // pred_region
          %s826 = smul.u32 4, %s23
          %p827 = scmp.lt.s32.totalorder %s826, 7
          %s828 = scalar_select %p827, %s826, 7
          %s829 = smul.addr %s828, 4
          %s830 = scalar_lea.vmem %s3, %s829
        $region56: #{tybalt_vae_forward.3} parent=51 // pred_fallthru
          _
      $region52: #{tybalt_vae_forward.3} parent=5 // pred_fallthru
        _
    $region6: #{tybalt_vae_forward.3} parent=1 // loop_footer
      %s16 = sadd.s32 1, %s12
    $region7: #{tybalt_vae_forward.3} parent=1 // loop_footer_branch
      %11 = sbr.rel target = $region3
    $region8: #{tybalt_vae_forward.3} parent=1 // loop_exit
      _
    %831 = vsyncpa [#allocation4], 1
    %s832 = scalar_lea.sflag [#allocation4], 1
    %833 = vsyncpa %s832, 1

// kernel: tybalt_vae_forward.5
$region0: #{tybalt_vae_forward.5}
  #allocation0 [shape = 'u32[]', space=smem, size = 0x4, offset = 0x4, fixed_abs, tag = 'smem constant byte address 0x4 - core index']
  #allocation1 [shape = 'u32[144,128]{1,0:T(1,128)}', space=vmem, size = 0x12000, scoped, tag = 'internal scratch']
  %s0 = inlined_call_operand.vmem [shape: bf16[8,1024], index: 0, kind: input, shape index: {}]
  %s1 = inlined_call_operand.vmem [shape: bf16[1024,256], index: 1, kind: input, shape index: {}]
  %s2 = inlined_call_operand.vmem [shape: f32[1,256], index: 2, kind: input, shape index: {}]
  %s3 = inlined_call_operand.hbm [shape: f32[8,256], index: 3, kind: output, shape index: {}]
  %s4 = sld [smem:[#allocation0]]
  $region86: #{tybalt_vae_forward.5} parent=0
    _
  %s6 = ssub.s32 1, %s4
  %s7 = scalar_select 0, %s6, %s4
  $region1: #{tybalt_vae_forward.5} parent=0
    #allocation2 [shape = 'u8[524288]{0}', space=vmem, size = 0x80000, scoped, tag = 'input window, operand 1']
    #allocation3 [shape = 'u8[8192]{0}', space=vmem, size = 0x2000, scoped, tag = 'output window, operand 0']
    #allocation4 [shape = 's32[2]{0}', space=sflag, size = 0x8, scoped, tag = 'scoped memory for tybalt_vae_forward.5']
    %8 = vsyncpa [#allocation4], 0
    %s9 = scalar_lea.sflag [#allocation4], 1
    %10 = vsyncpa %s9, 0
    loop: start=0, step=1, limit=4
    $region2: #{tybalt_vae_forward.5} parent=1 // loop_pre_header
      _
    $region3: #{tybalt_vae_forward.5} parent=1 // loop_header
      %s12 = sphi 0, %s16
      %p13 = scmp.ge.s32.totalorder %s12, 4
      %s20 = sphi 0, %s20
      %s22 = sphi 0, %s20
      %s23 = sphi 0, %s22
      %s37 = sphi 0, %s23
      %s43 = sphi 0, %s45
      %s46 = sphi 0, %s43
      %s47 = sphi 0, %s46
      %s63 = sphi 0, %s47
      %s67 = sphi 0, %s67
      %s69 = sphi 0, %s67
      %s70 = sphi 0, %s69
      %s84 = sphi 0, %s70
      %s90 = sphi 0, %s92
      %s93 = sphi 0, %s90
      %s94 = sphi 0, %s93
      %s110 = sphi 0, %s94
    $region4: #{tybalt_vae_forward.5} parent=1 // loop_header_branch
      %15 = sbr.rel (%p13) target = $region8
    $region5: #{tybalt_vae_forward.5} parent=1 // loop_body
      %s17 = ssub.s32 %s12, 1
      %s18 = ssub.s32 %s12, 2
      %s19 = sadd.s32 %s12, 1
      %s21 = sadd.s32 %s20, 1
      %p24 = scmp.eq.s32.totalorder %s12, 1
      %p25 = scmp.ne.s32.totalorder %s20, %s22
      %p26 = scmp.eq.s32.totalorder %s12, 0
      %p27 = por %p25, %p26
      %p28 = scmp.ne.s32.totalorder %s20, %s22
      %p29 = scmp.eq.s32.totalorder %s17, 1
      %p30 = por %p28, %p29
      %p31 = scmp.ne.s32.totalorder %s22, %s23
      %p32 = scmp.eq.s32.totalorder %s17, 0
      %p33 = por %p31, %p32
      %p34 = scmp.ne.s32.totalorder %s22, %s23
      %p35 = scmp.eq.s32.totalorder %s18, 1
      %p36 = por %p34, %p35
      %p38 = scmp.ne.s32.totalorder %s23, %s37
      %p39 = scmp.eq.s32.totalorder %s18, 0
      %p40 = por %p38, %p39
      %s41 = ssub.s32 %s12, %s19
      %p42 = scmp.eq.s32.totalorder %s41, 0
      %s44 = sadd.s32 %s43, 1
      %s45 = scalar_select %p42, %s43, %s44
      %p48 = pneg %p42
      %p49 = scmp.eq.s32.totalorder %s12, 1
      %p50 = por %p48, %p49
      %p51 = scmp.ne.s32.totalorder %s43, %s46
      %p52 = scmp.eq.s32.totalorder %s12, 0
      %p53 = por %p51, %p52
      %p54 = scmp.ne.s32.totalorder %s43, %s46
      %p55 = scmp.eq.s32.totalorder %s17, 1
      %p56 = por %p54, %p55
      %p57 = scmp.ne.s32.totalorder %s46, %s47
      %p58 = scmp.eq.s32.totalorder %s17, 0
      %p59 = por %p57, %p58
      %p60 = scmp.ne.s32.totalorder %s46, %s47
      %p61 = scmp.eq.s32.totalorder %s18, 1
      %p62 = por %p60, %p61
      %p64 = scmp.ne.s32.totalorder %s47, %s63
      %p65 = scmp.eq.s32.totalorder %s18, 0
      %p66 = por %p64, %p65
      %s68 = sadd.s32 %s67, 1
      %p71 = scmp.eq.s32.totalorder %s12, 1
      %p72 = scmp.ne.s32.totalorder %s67, %s69
      %p73 = scmp.eq.s32.totalorder %s12, 0
      %p74 = por %p72, %p73
      %p75 = scmp.ne.s32.totalorder %s67, %s69
      %p76 = scmp.eq.s32.totalorder %s17, 1
      %p77 = por %p75, %p76
      %p78 = scmp.ne.s32.totalorder %s69, %s70
      %p79 = scmp.eq.s32.totalorder %s17, 0
      %p80 = por %p78, %p79
      %p81 = scmp.ne.s32.totalorder %s69, %s70
      %p82 = scmp.eq.s32.totalorder %s18, 1
      %p83 = por %p81, %p82
      %p85 = scmp.ne.s32.totalorder %s70, %s84
      %p86 = scmp.eq.s32.totalorder %s18, 0
      %p87 = por %p85, %p86
      %s88 = ssub.s32 %s12, %s19
      %p89 = scmp.eq.s32.totalorder %s88, 0
      %s91 = sadd.s32 %s90, 1
      %s92 = scalar_select %p89, %s90, %s91
      %p95 = pneg %p89
      %p96 = scmp.eq.s32.totalorder %s12, 1
      %p97 = por %p95, %p96
      %p98 = scmp.ne.s32.totalorder %s90, %s93
      %p99 = scmp.eq.s32.totalorder %s12, 0
      %p100 = por %p98, %p99
      %p101 = scmp.ne.s32.totalorder %s90, %s93
      %p102 = scmp.eq.s32.totalorder %s17, 1
      %p103 = por %p101, %p102
      %p104 = scmp.ne.s32.totalorder %s93, %s94
      %p105 = scmp.eq.s32.totalorder %s17, 0
      %p106 = por %p104, %p105
      %p107 = scmp.ne.s32.totalorder %s93, %s94
      %p108 = scmp.eq.s32.totalorder %s18, 1
      %p109 = por %p107, %p108
      %p111 = scmp.ne.s32.totalorder %s94, %s110
      %p112 = scmp.eq.s32.totalorder %s18, 0
      %p113 = por %p111, %p112
      %p114 = scmp.le.s32.totalorder 1, %s12
      %p115 = scmp.lt.s32.totalorder %s12, 3
      %p116 = pnand %p114, %p115
      %p117 = pneg %p116
      // Predicated region
      $region9: #{tybalt_vae_forward.5} parent=5 // pred_check
        _
      $region10: #{tybalt_vae_forward.5} parent=5 // pred_check_branch
        %119 = sbr.rel (%p116) target = $region12
      $region11: #{tybalt_vae_forward.5} parent=5 // pred_region
        %s120 = ssub.s32 %s12, 1
        // Predicated region
        $region13: #{tybalt_vae_forward.5} parent=11 // pred_check
          %p121 = pneg %p33
        $region14: #{tybalt_vae_forward.5} parent=11 // pred_check_branch
          %123 = sbr.rel (%p121) target = $region16
        $region15: #{tybalt_vae_forward.5} parent=11 // pred_region
          _
        $region16: #{tybalt_vae_forward.5} parent=11 // pred_fallthru
          _
        // Predicated region
        $region17: #{tybalt_vae_forward.5} parent=11 // pred_check
          %p124 = pneg %p80
        $region18: #{tybalt_vae_forward.5} parent=11 // pred_check_branch
          %126 = sbr.rel (%p124) target = $region20
        $region19: #{tybalt_vae_forward.5} parent=11 // pred_region
          _
        $region20: #{tybalt_vae_forward.5} parent=11 // pred_fallthru
          _
      $region12: #{tybalt_vae_forward.5} parent=5 // pred_fallthru
        _
      %p127 = scmp.lt.s32.totalorder %s12, 2
      // Predicated region
      $region21: #{tybalt_vae_forward.5} parent=5 // pred_check
        %p128 = pneg %p127
      $region22: #{tybalt_vae_forward.5} parent=5 // pred_check_branch
        %130 = sbr.rel (%p128) target = $region24
      $region23: #{tybalt_vae_forward.5} parent=5 // pred_region
        // Predicated region
        $region25: #{tybalt_vae_forward.5} parent=23 // pred_check
          %p131 = pneg %p53
        $region26: #{tybalt_vae_forward.5} parent=23 // pred_check_branch
          %133 = sbr.rel (%p131) target = $region28
        $region27: #{tybalt_vae_forward.5} parent=23 // pred_region
          %s134 = sand.u32 %s43, 1
          %s135 = sand.u32 %s43, 1
          %s136 = smul.addr %s135, 512
          %s137 = scalar_lea.vmem [#allocation2], %s136
          %s138 = smul.addr %s12, 4
          %s139 = scalar_lea.vmem %s1, %s138
          // Predicated region
          $region29: #{tybalt_vae_forward.5} parent=27 // pred_check
            _
          $region30: #{tybalt_vae_forward.5} parent=27 // pred_check_branch
            %141 = sbr.rel (0) target = $region32
          $region31: #{tybalt_vae_forward.5} parent=27 // pred_region
            // Predicated region
            $region33: #{tybalt_vae_forward.5} parent=31 // pred_check
              _
            $region34: #{tybalt_vae_forward.5} parent=31 // pred_check_branch
              %143 = sbr.rel target = $region36
            $region35: #{tybalt_vae_forward.5} parent=31 // pred_region
              // Predicated region
              $region48: #{tybalt_vae_forward.5} parent=35 // pred_check
                _
              $region49: #{tybalt_vae_forward.5} parent=35 // pred_check_branch
                %412 = sbr.rel (0) target = $region51
              $region50: #{tybalt_vae_forward.5} parent=35 // pred_region
                loop: start=0, step=1, limit=1
                $region52: #{tybalt_vae_forward.5} parent=50 // loop_pre_header
                  _
                $region53: #{tybalt_vae_forward.5} parent=50 // loop_header
                  %s414 = sphi 0, %s418
                  %p415 = scmp.ge.s32.totalorder %s414, 1
                  %s419 = sphi %s139, %s139
                  %s420 = sphi %s137, %s137
                $region54: #{tybalt_vae_forward.5} parent=50 // loop_header_branch
                  %417 = sbr.rel (%p415) target = $region58
                $region55: #{tybalt_vae_forward.5} parent=50 // loop_body
                  _
                $region56: #{tybalt_vae_forward.5} parent=50 // loop_footer
                  %s418 = sadd.s32 1, %s414
                $region57: #{tybalt_vae_forward.5} parent=50 // loop_footer_branch
                  %413 = sbr.rel target = $region53
                $region58: #{tybalt_vae_forward.5} parent=50 // loop_exit
                  _
                loop: start=0, step=1, limit=1
                $region59: #{tybalt_vae_forward.5} parent=50 // loop_pre_header
                  _
                $region60: #{tybalt_vae_forward.5} parent=50 // loop_header
                  %s423 = sphi 0, %s427
                  %p424 = scmp.ge.s32.totalorder %s423, 1
                  %s428 = sphi %s139, %s139
                  %s429 = sphi %s137, %s137
                $region61: #{tybalt_vae_forward.5} parent=50 // loop_header_branch
                  %426 = sbr.rel (%p424) target = $region65
                $region62: #{tybalt_vae_forward.5} parent=50 // loop_body
                  %v430 = vld [vmem:[%s428] sm:$0xf]
                  %431 = vst [vmem:[%s429] sm:$0xf] %v430
                  %v432 = vld [vmem:[%s428 + $0x8] sm:$0xf]
                  %433 = vst [vmem:[%s429 + $0x4] sm:$0xf] %v432
                  %v434 = vld [vmem:[%s428 + $0x10] sm:$0xf]
                  %435 = vst [vmem:[%s429 + $0x8] sm:$0xf] %v434
                  %v436 = vld [vmem:[%s428 + $0x18] sm:$0xf]
                  %437 = vst [vmem:[%s429 + $0xc] sm:$0xf] %v436
                  %v438 = vld [vmem:[%s428 + $0x20] sm:$0xf]
                  %439 = vst [vmem:[%s429 + $0x10] sm:$0xf] %v438
                  %v440 = vld [vmem:[%s428 + $0x28] sm:$0xf]
                  %441 = vst [vmem:[%s429 + $0x14] sm:$0xf] %v440
                  %v442 = vld [vmem:[%s428 + $0x30] sm:$0xf]
                  %443 = vst [vmem:[%s429 + $0x18] sm:$0xf] %v442
                  %v444 = vld [vmem:[%s428 + $0x38] sm:$0xf]
                  %445 = vst [vmem:[%s429 + $0x1c] sm:$0xf] %v444
                  %v446 = vld [vmem:[%s428 + $0x40] sm:$0xf]
                  %447 = vst [vmem:[%s429 + $0x20] sm:$0xf] %v446
                  %v448 = vld [vmem:[%s428 + $0x48] sm:$0xf]
                  %449 = vst [vmem:[%s429 + $0x24] sm:$0xf] %v448
                  %v450 = vld [vmem:[%s428 + $0x50] sm:$0xf]
                  %451 = vst [vmem:[%s429 + $0x28] sm:$0xf] %v450
                  %v452 = vld [vmem:[%s428 + $0x58] sm:$0xf]
                  %453 = vst [vmem:[%s429 + $0x2c] sm:$0xf] %v452
                  %v454 = vld [vmem:[%s428 + $0x60] sm:$0xf]
                  %455 = vst [vmem:[%s429 + $0x30] sm:$0xf] %v454
                  %v456 = vld [vmem:[%s428 + $0x68] sm:$0xf]
                  %457 = vst [vmem:[%s429 + $0x34] sm:$0xf] %v456
                  %v458 = vld [vmem:[%s428 + $0x70] sm:$0xf]
                  %459 = vst [vmem:[%s429 + $0x38] sm:$0xf] %v458
                  %v460 = vld [vmem:[%s428 + $0x78] sm:$0xf]
                  %461 = vst [vmem:[%s429 + $0x3c] sm:$0xf] %v460
                  %v462 = vld [vmem:[%s428 + $0x80] sm:$0xf]
                  %463 = vst [vmem:[%s429 + $0x40] sm:$0xf] %v462
                  %v464 = vld [vmem:[%s428 + $0x88] sm:$0xf]
                  %465 = vst [vmem:[%s429 + $0x44] sm:$0xf] %v464
                  %v466 = vld [vmem:[%s428 + $0x90] sm:$0xf]
                  %467 = vst [vmem:[%s429 + $0x48] sm:$0xf] %v466
                  %v468 = vld [vmem:[%s428 + $0x98] sm:$0xf]
                  %469 = vst [vmem:[%s429 + $0x4c] sm:$0xf] %v468
                  %v470 = vld [vmem:[%s428 + $0xa0] sm:$0xf]
                  %471 = vst [vmem:[%s429 + $0x50] sm:$0xf] %v470
                  %v472 = vld [vmem:[%s428 + $0xa8] sm:$0xf]
                  %473 = vst [vmem:[%s429 + $0x54] sm:$0xf] %v472
                  %v474 = vld [vmem:[%s428 + $0xb0] sm:$0xf]
                  %475 = vst [vmem:[%s429 + $0x58] sm:$0xf] %v474
                  %v476 = vld [vmem:[%s428 + $0xb8] sm:$0xf]
                  %477 = vst [vmem:[%s429 + $0x5c] sm:$0xf] %v476
                  %v478 = vld [vmem:[%s428 + $0xc0] sm:$0xf]
                  %479 = vst [vmem:[%s429 + $0x60] sm:$0xf] %v478
                  %v480 = vld [vmem:[%s428 + $0xc8] sm:$0xf]
                  %481 = vst [vmem:[%s429 + $0x64] sm:$0xf] %v480
                  %v482 = vld [vmem:[%s428 + $0xd0] sm:$0xf]
                  %483 = vst [vmem:[%s429 + $0x68] sm:$0xf] %v482
                  %v484 = vld [vmem:[%s428 + $0xd8] sm:$0xf]
                  %485 = vst [vmem:[%s429 + $0x6c] sm:$0xf] %v484
                  %v486 = vld [vmem:[%s428 + $0xe0] sm:$0xf]
                  %487 = vst [vmem:[%s429 + $0x70] sm:$0xf] %v486
                  %v488 = vld [vmem:[%s428 + $0xe8] sm:$0xf]
                  %489 = vst [vmem:[%s429 + $0x74] sm:$0xf] %v488
                  %v490 = vld [vmem:[%s428 + $0xf0] sm:$0xf]
                  %491 = vst [vmem:[%s429 + $0x78] sm:$0xf] %v490
                  %v492 = vld [vmem:[%s428 + $0xf8] sm:$0xf]
                  %493 = vst [vmem:[%s429 + $0x7c] sm:$0xf] %v492
                  %v494 = vld [vmem:[%s428 + $0x100] sm:$0xf]
                  %495 = vst [vmem:[%s429 + $0x80] sm:$0xf] %v494
                  %v496 = vld [vmem:[%s428 + $0x108] sm:$0xf]
                  %497 = vst [vmem:[%s429 + $0x84] sm:$0xf] %v496
                  %v498 = vld [vmem:[%s428 + $0x110] sm:$0xf]
                  %499 = vst [vmem:[%s429 + $0x88] sm:$0xf] %v498
                  %v500 = vld [vmem:[%s428 + $0x118] sm:$0xf]
                  %501 = vst [vmem:[%s429 + $0x8c] sm:$0xf] %v500
                  %v502 = vld [vmem:[%s428 + $0x120] sm:$0xf]
                  %503 = vst [vmem:[%s429 + $0x90] sm:$0xf] %v502
                  %v504 = vld [vmem:[%s428 + $0x128] sm:$0xf]
                  %505 = vst [vmem:[%s429 + $0x94] sm:$0xf] %v504
                  %v506 = vld [vmem:[%s428 + $0x130] sm:$0xf]
                  %507 = vst [vmem:[%s429 + $0x98] sm:$0xf] %v506
                  %v508 = vld [vmem:[%s428 + $0x138] sm:$0xf]
                  %509 = vst [vmem:[%s429 + $0x9c] sm:$0xf] %v508
                  %v510 = vld [vmem:[%s428 + $0x140] sm:$0xf]
                  %511 = vst [vmem:[%s429 + $0xa0] sm:$0xf] %v510
                  %v512 = vld [vmem:[%s428 + $0x148] sm:$0xf]
                  %513 = vst [vmem:[%s429 + $0xa4] sm:$0xf] %v512
                  %v514 = vld [vmem:[%s428 + $0x150] sm:$0xf]
                  %515 = vst [vmem:[%s429 + $0xa8] sm:$0xf] %v514
                  %v516 = vld [vmem:[%s428 + $0x158] sm:$0xf]
                  %517 = vst [vmem:[%s429 + $0xac] sm:$0xf] %v516
                  %v518 = vld [vmem:[%s428 + $0x160] sm:$0xf]
                  %519 = vst [vmem:[%s429 + $0xb0] sm:$0xf] %v518
                  %v520 = vld [vmem:[%s428 + $0x168] sm:$0xf]
                  %521 = vst [vmem:[%s429 + $0xb4] sm:$0xf] %v520
                  %v522 = vld [vmem:[%s428 + $0x170] sm:$0xf]
                  %523 = vst [vmem:[%s429 + $0xb8] sm:$0xf] %v522
                  %v524 = vld [vmem:[%s428 + $0x178] sm:$0xf]
                  %525 = vst [vmem:[%s429 + $0xbc] sm:$0xf] %v524
                  %v526 = vld [vmem:[%s428 + $0x180] sm:$0xf]
                  %527 = vst [vmem:[%s429 + $0xc0] sm:$0xf] %v526
                  %v528 = vld [vmem:[%s428 + $0x188] sm:$0xf]
                  %529 = vst [vmem:[%s429 + $0xc4] sm:$0xf] %v528
                  %v530 = vld [vmem:[%s428 + $0x190] sm:$0xf]
                  %531 = vst [vmem:[%s429 + $0xc8] sm:$0xf] %v530
                  %v532 = vld [vmem:[%s428 + $0x198] sm:$0xf]
                  %533 = vst [vmem:[%s429 + $0xcc] sm:$0xf] %v532
                  %v534 = vld [vmem:[%s428 + $0x1a0] sm:$0xf]
                  %535 = vst [vmem:[%s429 + $0xd0] sm:$0xf] %v534
                  %v536 = vld [vmem:[%s428 + $0x1a8] sm:$0xf]
                  %537 = vst [vmem:[%s429 + $0xd4] sm:$0xf] %v536
                  %v538 = vld [vmem:[%s428 + $0x1b0] sm:$0xf]
                  %539 = vst [vmem:[%s429 + $0xd8] sm:$0xf] %v538
                  %v540 = vld [vmem:[%s428 + $0x1b8] sm:$0xf]
                  %541 = vst [vmem:[%s429 + $0xdc] sm:$0xf] %v540
                  %v542 = vld [vmem:[%s428 + $0x1c0] sm:$0xf]
                  %543 = vst [vmem:[%s429 + $0xe0] sm:$0xf] %v542
                  %v544 = vld [vmem:[%s428 + $0x1c8] sm:$0xf]
                  %545 = vst [vmem:[%s429 + $0xe4] sm:$0xf] %v544
                  %v546 = vld [vmem:[%s428 + $0x1d0] sm:$0xf]
                  %547 = vst [vmem:[%s429 + $0xe8] sm:$0xf] %v546
                  %v548 = vld [vmem:[%s428 + $0x1d8] sm:$0xf]
                  %549 = vst [vmem:[%s429 + $0xec] sm:$0xf] %v548
                  %v550 = vld [vmem:[%s428 + $0x1e0] sm:$0xf]
                  %551 = vst [vmem:[%s429 + $0xf0] sm:$0xf] %v550
                  %v552 = vld [vmem:[%s428 + $0x1e8] sm:$0xf]
                  %553 = vst [vmem:[%s429 + $0xf4] sm:$0xf] %v552
                  %v554 = vld [vmem:[%s428 + $0x1f0] sm:$0xf]
                  %555 = vst [vmem:[%s429 + $0xf8] sm:$0xf] %v554
                  %v556 = vld [vmem:[%s428 + $0x1f8] sm:$0xf]
                  %557 = vst [vmem:[%s429 + $0xfc] sm:$0xf] %v556
                  %v558 = vld [vmem:[%s428 + $0x200] sm:$0xf]
                  %559 = vst [vmem:[%s429 + $0x100] sm:$0xf] %v558
                  %v560 = vld [vmem:[%s428 + $0x208] sm:$0xf]
                  %561 = vst [vmem:[%s429 + $0x104] sm:$0xf] %v560
                  %v562 = vld [vmem:[%s428 + $0x210] sm:$0xf]
                  %563 = vst [vmem:[%s429 + $0x108] sm:$0xf] %v562
                  %v564 = vld [vmem:[%s428 + $0x218] sm:$0xf]
                  %565 = vst [vmem:[%s429 + $0x10c] sm:$0xf] %v564
                  %v566 = vld [vmem:[%s428 + $0x220] sm:$0xf]
                  %567 = vst [vmem:[%s429 + $0x110] sm:$0xf] %v566
                  %v568 = vld [vmem:[%s428 + $0x228] sm:$0xf]
                  %569 = vst [vmem:[%s429 + $0x114] sm:$0xf] %v568
                  %v570 = vld [vmem:[%s428 + $0x230] sm:$0xf]
                  %571 = vst [vmem:[%s429 + $0x118] sm:$0xf] %v570
                  %v572 = vld [vmem:[%s428 + $0x238] sm:$0xf]
                  %573 = vst [vmem:[%s429 + $0x11c] sm:$0xf] %v572
                  %v574 = vld [vmem:[%s428 + $0x240] sm:$0xf]
                  %575 = vst [vmem:[%s429 + $0x120] sm:$0xf] %v574
                  %v576 = vld [vmem:[%s428 + $0x248] sm:$0xf]
                  %577 = vst [vmem:[%s429 + $0x124] sm:$0xf] %v576
                  %v578 = vld [vmem:[%s428 + $0x250] sm:$0xf]
                  %579 = vst [vmem:[%s429 + $0x128] sm:$0xf] %v578
                  %v580 = vld [vmem:[%s428 + $0x258] sm:$0xf]
                  %581 = vst [vmem:[%s429 + $0x12c] sm:$0xf] %v580
                  %v582 = vld [vmem:[%s428 + $0x260] sm:$0xf]
                  %583 = vst [vmem:[%s429 + $0x130] sm:$0xf] %v582
                  %v584 = vld [vmem:[%s428 + $0x268] sm:$0xf]
                  %585 = vst [vmem:[%s429 + $0x134] sm:$0xf] %v584
                  %v586 = vld [vmem:[%s428 + $0x270] sm:$0xf]
                  %587 = vst [vmem:[%s429 + $0x138] sm:$0xf] %v586
                  %v588 = vld [vmem:[%s428 + $0x278] sm:$0xf]
                  %589 = vst [vmem:[%s429 + $0x13c] sm:$0xf] %v588
                  %v590 = vld [vmem:[%s428 + $0x280] sm:$0xf]
                  %591 = vst [vmem:[%s429 + $0x140] sm:$0xf] %v590
                  %v592 = vld [vmem:[%s428 + $0x288] sm:$0xf]
                  %593 = vst [vmem:[%s429 + $0x144] sm:$0xf] %v592
                  %v594 = vld [vmem:[%s428 + $0x290] sm:$0xf]
                  %595 = vst [vmem:[%s429 + $0x148] sm:$0xf] %v594
                  %v596 = vld [vmem:[%s428 + $0x298] sm:$0xf]
                  %597 = vst [vmem:[%s429 + $0x14c] sm:$0xf] %v596
                  %v598 = vld [vmem:[%s428 + $0x2a0] sm:$0xf]
                  %599 = vst [vmem:[%s429 + $0x150] sm:$0xf] %v598
                  %v600 = vld [vmem:[%s428 + $0x2a8] sm:$0xf]
                  %601 = vst [vmem:[%s429 + $0x154] sm:$0xf] %v600
                  %v602 = vld [vmem:[%s428 + $0x2b0] sm:$0xf]
                  %603 = vst [vmem:[%s429 + $0x158] sm:$0xf] %v602
                  %v604 = vld [vmem:[%s428 + $0x2b8] sm:$0xf]
                  %605 = vst [vmem:[%s429 + $0x15c] sm:$0xf] %v604
                  %v606 = vld [vmem:[%s428 + $0x2c0] sm:$0xf]
                  %607 = vst [vmem:[%s429 + $0x160] sm:$0xf] %v606
                  %v608 = vld [vmem:[%s428 + $0x2c8] sm:$0xf]
                  %609 = vst [vmem:[%s429 + $0x164] sm:$0xf] %v608
                  %v610 = vld [vmem:[%s428 + $0x2d0] sm:$0xf]
                  %611 = vst [vmem:[%s429 + $0x168] sm:$0xf] %v610
                  %v612 = vld [vmem:[%s428 + $0x2d8] sm:$0xf]
                  %613 = vst [vmem:[%s429 + $0x16c] sm:$0xf] %v612
                  %v614 = vld [vmem:[%s428 + $0x2e0] sm:$0xf]
                  %615 = vst [vmem:[%s429 + $0x170] sm:$0xf] %v614
                  %v616 = vld [vmem:[%s428 + $0x2e8] sm:$0xf]
                  %617 = vst [vmem:[%s429 + $0x174] sm:$0xf] %v616
                  %v618 = vld [vmem:[%s428 + $0x2f0] sm:$0xf]
                  %619 = vst [vmem:[%s429 + $0x178] sm:$0xf] %v618
                  %v620 = vld [vmem:[%s428 + $0x2f8] sm:$0xf]
                  %621 = vst [vmem:[%s429 + $0x17c] sm:$0xf] %v620
                  %v622 = vld [vmem:[%s428 + $0x300] sm:$0xf]
                  %623 = vst [vmem:[%s429 + $0x180] sm:$0xf] %v622
                  %v624 = vld [vmem:[%s428 + $0x308] sm:$0xf]
                  %625 = vst [vmem:[%s429 + $0x184] sm:$0xf] %v624
                  %v626 = vld [vmem:[%s428 + $0x310] sm:$0xf]
                  %627 = vst [vmem:[%s429 + $0x188] sm:$0xf] %v626
                  %v628 = vld [vmem:[%s428 + $0x318] sm:$0xf]
                  %629 = vst [vmem:[%s429 + $0x18c] sm:$0xf] %v628
                  %v630 = vld [vmem:[%s428 + $0x320] sm:$0xf]
                  %631 = vst [vmem:[%s429 + $0x190] sm:$0xf] %v630
                  %v632 = vld [vmem:[%s428 + $0x328] sm:$0xf]
                  %633 = vst [vmem:[%s429 + $0x194] sm:$0xf] %v632
                  %v634 = vld [vmem:[%s428 + $0x330] sm:$0xf]
                  %635 = vst [vmem:[%s429 + $0x198] sm:$0xf] %v634
                  %v636 = vld [vmem:[%s428 + $0x338] sm:$0xf]
                  %637 = vst [vmem:[%s429 + $0x19c] sm:$0xf] %v636
                  %v638 = vld [vmem:[%s428 + $0x340] sm:$0xf]
                  %639 = vst [vmem:[%s429 + $0x1a0] sm:$0xf] %v638
                  %v640 = vld [vmem:[%s428 + $0x348] sm:$0xf]
                  %641 = vst [vmem:[%s429 + $0x1a4] sm:$0xf] %v640
                  %v642 = vld [vmem:[%s428 + $0x350] sm:$0xf]
                  %643 = vst [vmem:[%s429 + $0x1a8] sm:$0xf] %v642
                  %v644 = vld [vmem:[%s428 + $0x358] sm:$0xf]
                  %645 = vst [vmem:[%s429 + $0x1ac] sm:$0xf] %v644
                  %v646 = vld [vmem:[%s428 + $0x360] sm:$0xf]
                  %647 = vst [vmem:[%s429 + $0x1b0] sm:$0xf] %v646
                  %v648 = vld [vmem:[%s428 + $0x368] sm:$0xf]
                  %649 = vst [vmem:[%s429 + $0x1b4] sm:$0xf] %v648
                  %v650 = vld [vmem:[%s428 + $0x370] sm:$0xf]
                  %651 = vst [vmem:[%s429 + $0x1b8] sm:$0xf] %v650
                  %v652 = vld [vmem:[%s428 + $0x378] sm:$0xf]
                  %653 = vst [vmem:[%s429 + $0x1bc] sm:$0xf] %v652
                  %v654 = vld [vmem:[%s428 + $0x380] sm:$0xf]
                  %655 = vst [vmem:[%s429 + $0x1c0] sm:$0xf] %v654
                  %v656 = vld [vmem:[%s428 + $0x388] sm:$0xf]
                  %657 = vst [vmem:[%s429 + $0x1c4] sm:$0xf] %v656
                  %v658 = vld [vmem:[%s428 + $0x390] sm:$0xf]
                  %659 = vst [vmem:[%s429 + $0x1c8] sm:$0xf] %v658
                  %v660 = vld [vmem:[%s428 + $0x398] sm:$0xf]
                  %661 = vst [vmem:[%s429 + $0x1cc] sm:$0xf] %v660
                  %v662 = vld [vmem:[%s428 + $0x3a0] sm:$0xf]
                  %663 = vst [vmem:[%s429 + $0x1d0] sm:$0xf] %v662
                  %v664 = vld [vmem:[%s428 + $0x3a8] sm:$0xf]
                  %665 = vst [vmem:[%s429 + $0x1d4] sm:$0xf] %v664
                  %v666 = vld [vmem:[%s428 + $0x3b0] sm:$0xf]
                  %667 = vst [vmem:[%s429 + $0x1d8] sm:$0xf] %v666
                  %v668 = vld [vmem:[%s428 + $0x3b8] sm:$0xf]
                  %669 = vst [vmem:[%s429 + $0x1dc] sm:$0xf] %v668
                  %v670 = vld [vmem:[%s428 + $0x3c0] sm:$0xf]
                  %671 = vst [vmem:[%s429 + $0x1e0] sm:$0xf] %v670
                  %v672 = vld [vmem:[%s428 + $0x3c8] sm:$0xf]
                  %673 = vst [vmem:[%s429 + $0x1e4] sm:$0xf] %v672
                  %v674 = vld [vmem:[%s428 + $0x3d0] sm:$0xf]
                  %675 = vst [vmem:[%s429 + $0x1e8] sm:$0xf] %v674
                  %v676 = vld [vmem:[%s428 + $0x3d8] sm:$0xf]
                  %677 = vst [vmem:[%s429 + $0x1ec] sm:$0xf] %v676
                  %v678 = vld [vmem:[%s428 + $0x3e0] sm:$0xf]
                  %679 = vst [vmem:[%s429 + $0x1f0] sm:$0xf] %v678
                  %v680 = vld [vmem:[%s428 + $0x3e8] sm:$0xf]
                  %681 = vst [vmem:[%s429 + $0x1f4] sm:$0xf] %v680
                  %v682 = vld [vmem:[%s428 + $0x3f0] sm:$0xf]
                  %683 = vst [vmem:[%s429 + $0x1f8] sm:$0xf] %v682
                  %v684 = vld [vmem:[%s428 + $0x3f8] sm:$0xf]
                  %685 = vst [vmem:[%s429 + $0x1fc] sm:$0xf] %v684
                $region63: #{tybalt_vae_forward.5} parent=50 // loop_footer
                  %s427 = sadd.s32 1, %s423
                $region64: #{tybalt_vae_forward.5} parent=50 // loop_footer_branch
                  %422 = sbr.rel target = $region60
                $region65: #{tybalt_vae_forward.5} parent=50 // loop_exit
                  _
              $region51: #{tybalt_vae_forward.5} parent=35 // pred_fallthru
                _
            $region36: #{tybalt_vae_forward.5} parent=31 // pred_fallthru
              _
            // Predicated region
            $region37: #{tybalt_vae_forward.5} parent=31 // pred_check
              _
            $region38: #{tybalt_vae_forward.5} parent=31 // pred_check_branch
              %145 = sbr.rel (0) target = $region40
            $region39: #{tybalt_vae_forward.5} parent=31 // pred_region
              loop: start=0, step=1, limit=1
              $region41: #{tybalt_vae_forward.5} parent=39 // loop_pre_header
                _
              $region42: #{tybalt_vae_forward.5} parent=39 // loop_header
                %s148 = sphi 0, %s152
                %p149 = scmp.ge.s32.totalorder %s148, 1
                %s153 = sphi %s139, %s139
                %s154 = sphi %s137, %s137
              $region43: #{tybalt_vae_forward.5} parent=39 // loop_header_branch
                %151 = sbr.rel (%p149) target = $region47
              $region44: #{tybalt_vae_forward.5} parent=39 // loop_body
                %v155 = vld [vmem:[%s153] sm:$0xf]
                %156 = vst [vmem:[%s154] sm:$0xf] %v155
                %v157 = vld [vmem:[%s153 + $0x8] sm:$0xf]
                %158 = vst [vmem:[%s154 + $0x4] sm:$0xf] %v157
                %v159 = vld [vmem:[%s153 + $0x10] sm:$0xf]
                %160 = vst [vmem:[%s154 + $0x8] sm:$0xf] %v159
                %v161 = vld [vmem:[%s153 + $0x18] sm:$0xf]
                %162 = vst [vmem:[%s154 + $0xc] sm:$0xf] %v161
                %v163 = vld [vmem:[%s153 + $0x20] sm:$0xf]
                %164 = vst [vmem:[%s154 + $0x10] sm:$0xf] %v163
                %v165 = vld [vmem:[%s153 + $0x28] sm:$0xf]
                %166 = vst [vmem:[%s154 + $0x14] sm:$0xf] %v165
                %v167 = vld [vmem:[%s153 + $0x30] sm:$0xf]
                %168 = vst [vmem:[%s154 + $0x18] sm:$0xf] %v167
                %v169 = vld [vmem:[%s153 + $0x38] sm:$0xf]
                %170 = vst [vmem:[%s154 + $0x1c] sm:$0xf] %v169
                %v171 = vld [vmem:[%s153 + $0x40] sm:$0xf]
                %172 = vst [vmem:[%s154 + $0x20] sm:$0xf] %v171
                %v173 = vld [vmem:[%s153 + $0x48] sm:$0xf]
                %174 = vst [vmem:[%s154 + $0x24] sm:$0xf] %v173
                %v175 = vld [vmem:[%s153 + $0x50] sm:$0xf]
                %176 = vst [vmem:[%s154 + $0x28] sm:$0xf] %v175
                %v177 = vld [vmem:[%s153 + $0x58] sm:$0xf]
                %178 = vst [vmem:[%s154 + $0x2c] sm:$0xf] %v177
                %v179 = vld [vmem:[%s153 + $0x60] sm:$0xf]
                %180 = vst [vmem:[%s154 + $0x30] sm:$0xf] %v179
                %v181 = vld [vmem:[%s153 + $0x68] sm:$0xf]
                %182 = vst [vmem:[%s154 + $0x34] sm:$0xf] %v181
                %v183 = vld [vmem:[%s153 + $0x70] sm:$0xf]
                %184 = vst [vmem:[%s154 + $0x38] sm:$0xf] %v183
                %v185 = vld [vmem:[%s153 + $0x78] sm:$0xf]
                %186 = vst [vmem:[%s154 + $0x3c] sm:$0xf] %v185
                %v187 = vld [vmem:[%s153 + $0x80] sm:$0xf]
                %188 = vst [vmem:[%s154 + $0x40] sm:$0xf] %v187
                %v189 = vld [vmem:[%s153 + $0x88] sm:$0xf]
                %190 = vst [vmem:[%s154 + $0x44] sm:$0xf] %v189
                %v191 = vld [vmem:[%s153 + $0x90] sm:$0xf]
                %192 = vst [vmem:[%s154 + $0x48] sm:$0xf] %v191
                %v193 = vld [vmem:[%s153 + $0x98] sm:$0xf]
                %194 = vst [vmem:[%s154 + $0x4c] sm:$0xf] %v193
                %v195 = vld [vmem:[%s153 + $0xa0] sm:$0xf]
                %196 = vst [vmem:[%s154 + $0x50] sm:$0xf] %v195
                %v197 = vld [vmem:[%s153 + $0xa8] sm:$0xf]
                %198 = vst [vmem:[%s154 + $0x54] sm:$0xf] %v197
                %v199 = vld [vmem:[%s153 + $0xb0] sm:$0xf]
                %200 = vst [vmem:[%s154 + $0x58] sm:$0xf] %v199
                %v201 = vld [vmem:[%s153 + $0xb8] sm:$0xf]
                %202 = vst [vmem:[%s154 + $0x5c] sm:$0xf] %v201
                %v203 = vld [vmem:[%s153 + $0xc0] sm:$0xf]
                %204 = vst [vmem:[%s154 + $0x60] sm:$0xf] %v203
                %v205 = vld [vmem:[%s153 + $0xc8] sm:$0xf]
                %206 = vst [vmem:[%s154 + $0x64] sm:$0xf] %v205
                %v207 = vld [vmem:[%s153 + $0xd0] sm:$0xf]
                %208 = vst [vmem:[%s154 + $0x68] sm:$0xf] %v207
                %v209 = vld [vmem:[%s153 + $0xd8] sm:$0xf]
                %210 = vst [vmem:[%s154 + $0x6c] sm:$0xf] %v209
                %v211 = vld [vmem:[%s153 + $0xe0] sm:$0xf]
                %212 = vst [vmem:[%s154 + $0x70] sm:$0xf] %v211
                %v213 = vld [vmem:[%s153 + $0xe8] sm:$0xf]
                %214 = vst [vmem:[%s154 + $0x74] sm:$0xf] %v213
                %v215 = vld [vmem:[%s153 + $0xf0] sm:$0xf]
                %216 = vst [vmem:[%s154 + $0x78] sm:$0xf] %v215
                %v217 = vld [vmem:[%s153 + $0xf8] sm:$0xf]
                %218 = vst [vmem:[%s154 + $0x7c] sm:$0xf] %v217
                %v219 = vld [vmem:[%s153 + $0x100] sm:$0xf]
                %220 = vst [vmem:[%s154 + $0x80] sm:$0xf] %v219
                %v221 = vld [vmem:[%s153 + $0x108] sm:$0xf]
                %222 = vst [vmem:[%s154 + $0x84] sm:$0xf] %v221
                %v223 = vld [vmem:[%s153 + $0x110] sm:$0xf]
                %224 = vst [vmem:[%s154 + $0x88] sm:$0xf] %v223
                %v225 = vld [vmem:[%s153 + $0x118] sm:$0xf]
                %226 = vst [vmem:[%s154 + $0x8c] sm:$0xf] %v225
                %v227 = vld [vmem:[%s153 + $0x120] sm:$0xf]
                %228 = vst [vmem:[%s154 + $0x90] sm:$0xf] %v227
                %v229 = vld [vmem:[%s153 + $0x128] sm:$0xf]
                %230 = vst [vmem:[%s154 + $0x94] sm:$0xf] %v229
                %v231 = vld [vmem:[%s153 + $0x130] sm:$0xf]
                %232 = vst [vmem:[%s154 + $0x98] sm:$0xf] %v231
                %v233 = vld [vmem:[%s153 + $0x138] sm:$0xf]
                %234 = vst [vmem:[%s154 + $0x9c] sm:$0xf] %v233
                %v235 = vld [vmem:[%s153 + $0x140] sm:$0xf]
                %236 = vst [vmem:[%s154 + $0xa0] sm:$0xf] %v235
                %v237 = vld [vmem:[%s153 + $0x148] sm:$0xf]
                %238 = vst [vmem:[%s154 + $0xa4] sm:$0xf] %v237
                %v239 = vld [vmem:[%s153 + $0x150] sm:$0xf]
                %240 = vst [vmem:[%s154 + $0xa8] sm:$0xf] %v239
                %v241 = vld [vmem:[%s153 + $0x158] sm:$0xf]
                %242 = vst [vmem:[%s154 + $0xac] sm:$0xf] %v241
                %v243 = vld [vmem:[%s153 + $0x160] sm:$0xf]
                %244 = vst [vmem:[%s154 + $0xb0] sm:$0xf] %v243
                %v245 = vld [vmem:[%s153 + $0x168] sm:$0xf]
                %246 = vst [vmem:[%s154 + $0xb4] sm:$0xf] %v245
                %v247 = vld [vmem:[%s153 + $0x170] sm:$0xf]
                %248 = vst [vmem:[%s154 + $0xb8] sm:$0xf] %v247
                %v249 = vld [vmem:[%s153 + $0x178] sm:$0xf]
                %250 = vst [vmem:[%s154 + $0xbc] sm:$0xf] %v249
                %v251 = vld [vmem:[%s153 + $0x180] sm:$0xf]
                %252 = vst [vmem:[%s154 + $0xc0] sm:$0xf] %v251
                %v253 = vld [vmem:[%s153 + $0x188] sm:$0xf]
                %254 = vst [vmem:[%s154 + $0xc4] sm:$0xf] %v253
                %v255 = vld [vmem:[%s153 + $0x190] sm:$0xf]
                %256 = vst [vmem:[%s154 + $0xc8] sm:$0xf] %v255
                %v257 = vld [vmem:[%s153 + $0x198] sm:$0xf]
                %258 = vst [vmem:[%s154 + $0xcc] sm:$0xf] %v257
                %v259 = vld [vmem:[%s153 + $0x1a0] sm:$0xf]
                %260 = vst [vmem:[%s154 + $0xd0] sm:$0xf] %v259
                %v261 = vld [vmem:[%s153 + $0x1a8] sm:$0xf]
                %262 = vst [vmem:[%s154 + $0xd4] sm:$0xf] %v261
                %v263 = vld [vmem:[%s153 + $0x1b0] sm:$0xf]
                %264 = vst [vmem:[%s154 + $0xd8] sm:$0xf] %v263
                %v265 = vld [vmem:[%s153 + $0x1b8] sm:$0xf]
                %266 = vst [vmem:[%s154 + $0xdc] sm:$0xf] %v265
                %v267 = vld [vmem:[%s153 + $0x1c0] sm:$0xf]
                %268 = vst [vmem:[%s154 + $0xe0] sm:$0xf] %v267
                %v269 = vld [vmem:[%s153 + $0x1c8] sm:$0xf]
                %270 = vst [vmem:[%s154 + $0xe4] sm:$0xf] %v269
                %v271 = vld [vmem:[%s153 + $0x1d0] sm:$0xf]
                %272 = vst [vmem:[%s154 + $0xe8] sm:$0xf] %v271
                %v273 = vld [vmem:[%s153 + $0x1d8] sm:$0xf]
                %274 = vst [vmem:[%s154 + $0xec] sm:$0xf] %v273
                %v275 = vld [vmem:[%s153 + $0x1e0] sm:$0xf]
                %276 = vst [vmem:[%s154 + $0xf0] sm:$0xf] %v275
                %v277 = vld [vmem:[%s153 + $0x1e8] sm:$0xf]
                %278 = vst [vmem:[%s154 + $0xf4] sm:$0xf] %v277
                %v279 = vld [vmem:[%s153 + $0x1f0] sm:$0xf]
                %280 = vst [vmem:[%s154 + $0xf8] sm:$0xf] %v279
                %v281 = vld [vmem:[%s153 + $0x1f8] sm:$0xf]
                %282 = vst [vmem:[%s154 + $0xfc] sm:$0xf] %v281
                %v283 = vld [vmem:[%s153 + $0x200] sm:$0xf]
                %284 = vst [vmem:[%s154 + $0x100] sm:$0xf] %v283
                %v285 = vld [vmem:[%s153 + $0x208] sm:$0xf]
                %286 = vst [vmem:[%s154 + $0x104] sm:$0xf] %v285
                %v287 = vld [vmem:[%s153 + $0x210] sm:$0xf]
                %288 = vst [vmem:[%s154 + $0x108] sm:$0xf] %v287
                %v289 = vld [vmem:[%s153 + $0x218] sm:$0xf]
                %290 = vst [vmem:[%s154 + $0x10c] sm:$0xf] %v289
                %v291 = vld [vmem:[%s153 + $0x220] sm:$0xf]
                %292 = vst [vmem:[%s154 + $0x110] sm:$0xf] %v291
                %v293 = vld [vmem:[%s153 + $0x228] sm:$0xf]
                %294 = vst [vmem:[%s154 + $0x114] sm:$0xf] %v293
                %v295 = vld [vmem:[%s153 + $0x230] sm:$0xf]
                %296 = vst [vmem:[%s154 + $0x118] sm:$0xf] %v295
                %v297 = vld [vmem:[%s153 + $0x238] sm:$0xf]
                %298 = vst [vmem:[%s154 + $0x11c] sm:$0xf] %v297
                %v299 = vld [vmem:[%s153 + $0x240] sm:$0xf]
                %300 = vst [vmem:[%s154 + $0x120] sm:$0xf] %v299
                %v301 = vld [vmem:[%s153 + $0x248] sm:$0xf]
                %302 = vst [vmem:[%s154 + $0x124] sm:$0xf] %v301
                %v303 = vld [vmem:[%s153 + $0x250] sm:$0xf]
                %304 = vst [vmem:[%s154 + $0x128] sm:$0xf] %v303
                %v305 = vld [vmem:[%s153 + $0x258] sm:$0xf]
                %306 = vst [vmem:[%s154 + $0x12c] sm:$0xf] %v305
                %v307 = vld [vmem:[%s153 + $0x260] sm:$0xf]
                %308 = vst [vmem:[%s154 + $0x130] sm:$0xf] %v307
                %v309 = vld [vmem:[%s153 + $0x268] sm:$0xf]
                %310 = vst [vmem:[%s154 + $0x134] sm:$0xf] %v309
                %v311 = vld [vmem:[%s153 + $0x270] sm:$0xf]
                %312 = vst [vmem:[%s154 + $0x138] sm:$0xf] %v311
                %v313 = vld [vmem:[%s153 + $0x278] sm:$0xf]
                %314 = vst [vmem:[%s154 + $0x13c] sm:$0xf] %v313
                %v315 = vld [vmem:[%s153 + $0x280] sm:$0xf]
                %316 = vst [vmem:[%s154 + $0x140] sm:$0xf] %v315
                %v317 = vld [vmem:[%s153 + $0x288] sm:$0xf]
                %318 = vst [vmem:[%s154 + $0x144] sm:$0xf] %v317
                %v319 = vld [vmem:[%s153 + $0x290] sm:$0xf]
                %320 = vst [vmem:[%s154 + $0x148] sm:$0xf] %v319
                %v321 = vld [vmem:[%s153 + $0x298] sm:$0xf]
                %322 = vst [vmem:[%s154 + $0x14c] sm:$0xf] %v321
                %v323 = vld [vmem:[%s153 + $0x2a0] sm:$0xf]
                %324 = vst [vmem:[%s154 + $0x150] sm:$0xf] %v323
                %v325 = vld [vmem:[%s153 + $0x2a8] sm:$0xf]
                %326 = vst [vmem:[%s154 + $0x154] sm:$0xf] %v325
                %v327 = vld [vmem:[%s153 + $0x2b0] sm:$0xf]
                %328 = vst [vmem:[%s154 + $0x158] sm:$0xf] %v327
                %v329 = vld [vmem:[%s153 + $0x2b8] sm:$0xf]
                %330 = vst [vmem:[%s154 + $0x15c] sm:$0xf] %v329
                %v331 = vld [vmem:[%s153 + $0x2c0] sm:$0xf]
                %332 = vst [vmem:[%s154 + $0x160] sm:$0xf] %v331
                %v333 = vld [vmem:[%s153 + $0x2c8] sm:$0xf]
                %334 = vst [vmem:[%s154 + $0x164] sm:$0xf] %v333
                %v335 = vld [vmem:[%s153 + $0x2d0] sm:$0xf]
                %336 = vst [vmem:[%s154 + $0x168] sm:$0xf] %v335
                %v337 = vld [vmem:[%s153 + $0x2d8] sm:$0xf]
                %338 = vst [vmem:[%s154 + $0x16c] sm:$0xf] %v337
                %v339 = vld [vmem:[%s153 + $0x2e0] sm:$0xf]
                %340 = vst [vmem:[%s154 + $0x170] sm:$0xf] %v339
                %v341 = vld [vmem:[%s153 + $0x2e8] sm:$0xf]
                %342 = vst [vmem:[%s154 + $0x174] sm:$0xf] %v341
                %v343 = vld [vmem:[%s153 + $0x2f0] sm:$0xf]
                %344 = vst [vmem:[%s154 + $0x178] sm:$0xf] %v343
                %v345 = vld [vmem:[%s153 + $0x2f8] sm:$0xf]
                %346 = vst [vmem:[%s154 + $0x17c] sm:$0xf] %v345
                %v347 = vld [vmem:[%s153 + $0x300] sm:$0xf]
                %348 = vst [vmem:[%s154 + $0x180] sm:$0xf] %v347
                %v349 = vld [vmem:[%s153 + $0x308] sm:$0xf]
                %350 = vst [vmem:[%s154 + $0x184] sm:$0xf] %v349
                %v351 = vld [vmem:[%s153 + $0x310] sm:$0xf]
                %352 = vst [vmem:[%s154 + $0x188] sm:$0xf] %v351
                %v353 = vld [vmem:[%s153 + $0x318] sm:$0xf]
                %354 = vst [vmem:[%s154 + $0x18c] sm:$0xf] %v353
                %v355 = vld [vmem:[%s153 + $0x320] sm:$0xf]
                %356 = vst [vmem:[%s154 + $0x190] sm:$0xf] %v355
                %v357 = vld [vmem:[%s153 + $0x328] sm:$0xf]
                %358 = vst [vmem:[%s154 + $0x194] sm:$0xf] %v357
                %v359 = vld [vmem:[%s153 + $0x330] sm:$0xf]
                %360 = vst [vmem:[%s154 + $0x198] sm:$0xf] %v359
                %v361 = vld [vmem:[%s153 + $0x338] sm:$0xf]
                %362 = vst [vmem:[%s154 + $0x19c] sm:$0xf] %v361
                %v363 = vld [vmem:[%s153 + $0x340] sm:$0xf]
                %364 = vst [vmem:[%s154 + $0x1a0] sm:$0xf] %v363
                %v365 = vld [vmem:[%s153 + $0x348] sm:$0xf]
                %366 = vst [vmem:[%s154 + $0x1a4] sm:$0xf] %v365
                %v367 = vld [vmem:[%s153 + $0x350] sm:$0xf]
                %368 = vst [vmem:[%s154 + $0x1a8] sm:$0xf] %v367
                %v369 = vld [vmem:[%s153 + $0x358] sm:$0xf]
                %370 = vst [vmem:[%s154 + $0x1ac] sm:$0xf] %v369
                %v371 = vld [vmem:[%s153 + $0x360] sm:$0xf]
                %372 = vst [vmem:[%s154 + $0x1b0] sm:$0xf] %v371
                %v373 = vld [vmem:[%s153 + $0x368] sm:$0xf]
                %374 = vst [vmem:[%s154 + $0x1b4] sm:$0xf] %v373
                %v375 = vld [vmem:[%s153 + $0x370] sm:$0xf]
                %376 = vst [vmem:[%s154 + $0x1b8] sm:$0xf] %v375
                %v377 = vld [vmem:[%s153 + $0x378] sm:$0xf]
                %378 = vst [vmem:[%s154 + $0x1bc] sm:$0xf] %v377
                %v379 = vld [vmem:[%s153 + $0x380] sm:$0xf]
                %380 = vst [vmem:[%s154 + $0x1c0] sm:$0xf] %v379
                %v381 = vld [vmem:[%s153 + $0x388] sm:$0xf]
                %382 = vst [vmem:[%s154 + $0x1c4] sm:$0xf] %v381
                %v383 = vld [vmem:[%s153 + $0x390] sm:$0xf]
                %384 = vst [vmem:[%s154 + $0x1c8] sm:$0xf] %v383
                %v385 = vld [vmem:[%s153 + $0x398] sm:$0xf]
                %386 = vst [vmem:[%s154 + $0x1cc] sm:$0xf] %v385
                %v387 = vld [vmem:[%s153 + $0x3a0] sm:$0xf]
                %388 = vst [vmem:[%s154 + $0x1d0] sm:$0xf] %v387
                %v389 = vld [vmem:[%s153 + $0x3a8] sm:$0xf]
                %390 = vst [vmem:[%s154 + $0x1d4] sm:$0xf] %v389
                %v391 = vld [vmem:[%s153 + $0x3b0] sm:$0xf]
                %392 = vst [vmem:[%s154 + $0x1d8] sm:$0xf] %v391
                %v393 = vld [vmem:[%s153 + $0x3b8] sm:$0xf]
                %394 = vst [vmem:[%s154 + $0x1dc] sm:$0xf] %v393
                %v395 = vld [vmem:[%s153 + $0x3c0] sm:$0xf]
                %396 = vst [vmem:[%s154 + $0x1e0] sm:$0xf] %v395
                %v397 = vld [vmem:[%s153 + $0x3c8] sm:$0xf]
                %398 = vst [vmem:[%s154 + $0x1e4] sm:$0xf] %v397
                %v399 = vld [vmem:[%s153 + $0x3d0] sm:$0xf]
                %400 = vst [vmem:[%s154 + $0x1e8] sm:$0xf] %v399
                %v401 = vld [vmem:[%s153 + $0x3d8] sm:$0xf]
                %402 = vst [vmem:[%s154 + $0x1ec] sm:$0xf] %v401
                %v403 = vld [vmem:[%s153 + $0x3e0] sm:$0xf]
                %404 = vst [vmem:[%s154 + $0x1f0] sm:$0xf] %v403
                %v405 = vld [vmem:[%s153 + $0x3e8] sm:$0xf]
                %406 = vst [vmem:[%s154 + $0x1f4] sm:$0xf] %v405
                %v407 = vld [vmem:[%s153 + $0x3f0] sm:$0xf]
                %408 = vst [vmem:[%s154 + $0x1f8] sm:$0xf] %v407
                %v409 = vld [vmem:[%s153 + $0x3f8] sm:$0xf]
                %410 = vst [vmem:[%s154 + $0x1fc] sm:$0xf] %v409
              $region45: #{tybalt_vae_forward.5} parent=39 // loop_footer
                %s152 = sadd.s32 1, %s148
              $region46: #{tybalt_vae_forward.5} parent=39 // loop_footer_branch
                %147 = sbr.rel target = $region42
              $region47: #{tybalt_vae_forward.5} parent=39 // loop_exit
                _
            $region40: #{tybalt_vae_forward.5} parent=31 // pred_fallthru
              _
          $region32: #{tybalt_vae_forward.5} parent=27 // pred_fallthru
            _
          %686 = vnop
        $region28: #{tybalt_vae_forward.5} parent=23 // pred_fallthru
          _
      $region24: #{tybalt_vae_forward.5} parent=5 // pred_fallthru
        _
      %p687 = scmp.le.s32.totalorder 1, %s12
      %p688 = scmp.lt.s32.totalorder %s12, 3
      %p689 = pnand %p687, %p688
      %p690 = pneg %p689
      // Predicated region
      $region66: #{tybalt_vae_forward.5} parent=5 // pred_check
        _
      $region67: #{tybalt_vae_forward.5} parent=5 // pred_check_branch
        %692 = sbr.rel (%p689) target = $region69
      $region68: #{tybalt_vae_forward.5} parent=5 // pred_region
        %s693 = ssub.s32 %s12, 1
        %s694 = sand.u32 %s46, 1
        %s695 = sand.u32 %s46, 1
        %s696 = smul.addr %s695, 512
        %s697 = scalar_lea.vmem [#allocation2], %s696
        // Predicated region
        $region70: #{tybalt_vae_forward.5} parent=68 // pred_check
          %p698 = pneg %p59
        $region71: #{tybalt_vae_forward.5} parent=68 // pred_check_branch
          %700 = sbr.rel (%p698) target = $region73
        $region72: #{tybalt_vae_forward.5} parent=68 // pred_region
          _
        $region73: #{tybalt_vae_forward.5} parent=68 // pred_fallthru
          _
        %p701 = pneg %p33
        %p702 = pneg %p30
        %s703 = sand.u32 %s46, 1
        %s704 = sand.u32 %s46, 1
        %s705 = smul.addr %s704, 512
        %s706 = scalar_lea.vmem [#allocation2], %s705
        %p707 = pneg %p59
        %p708 = pneg %p56
        %p709 = pneg %p80
        %p710 = pneg %p77
        %p711 = pneg %p106
        %p712 = pneg %p103
        %s713 = sand.u32 %s93, 1
        %s714 = scalar_lea.sflag [#allocation4], %s713
        %s715 = sand.u32 %s93, 1
        %s716 = smul.addr %s715, 8
        %s717 = scalar_lea.vmem [#allocation3], %s716
        %s719 = smul.u32 %s17, 128
        %v720 = vld [vmem:[%s0] sm:$0xff]
        %v721 = vld [vmem:[%s0 + $0x8] sm:$0xff]
        %v722 = vld [vmem:[%s0 + $0x10] sm:$0xff]
        %v723 = vld [vmem:[%s0 + $0x18] sm:$0xff]
        %v724 = vld [vmem:[%s697] sm:$0xf]
        %v725 = vld [vmem:[%s697 + $0x4] sm:$0xf]
        %v726 = vld [vmem:[%s697 + $0x8] sm:$0xf]
        %v727 = vld [vmem:[%s697 + $0xc] sm:$0xf]
        %v728 = vld [vmem:[%s697 + $0x10] sm:$0xf]
        %v729 = vld [vmem:[%s697 + $0x14] sm:$0xf]
        %v730 = vld [vmem:[%s697 + $0x18] sm:$0xf]
        %v731 = vld [vmem:[%s697 + $0x1c] sm:$0xf]
        %v732 = vld [vmem:[%s697 + $0x20] sm:$0xf]
        %v733 = vld [vmem:[%s697 + $0x24] sm:$0xf]
        %v734 = vld [vmem:[%s697 + $0x28] sm:$0xf]
        %v735 = vld [vmem:[%s697 + $0x2c] sm:$0xf]
        %v736 = vld [vmem:[%s697 + $0x30] sm:$0xf]
        %v737 = vld [vmem:[%s697 + $0x34] sm:$0xf]
        %v738 = vld [vmem:[%s697 + $0x38] sm:$0xf]
        %v739 = vld [vmem:[%s697 + $0x3c] sm:$0xf]
        %v740 = vld [vmem:[%s697 + $0x40] sm:$0xf]
        %v741 = vld [vmem:[%s697 + $0x44] sm:$0xf]
        %v742 = vld [vmem:[%s697 + $0x48] sm:$0xf]
        %v743 = vld [vmem:[%s697 + $0x4c] sm:$0xf]
        %v744 = vld [vmem:[%s697 + $0x50] sm:$0xf]
        %v745 = vld [vmem:[%s697 + $0x54] sm:$0xf]
        %v746 = vld [vmem:[%s697 + $0x58] sm:$0xf]
        %v747 = vld [vmem:[%s697 + $0x5c] sm:$0xf]
        %v748 = vld [vmem:[%s697 + $0x60] sm:$0xf]
        %v749 = vld [vmem:[%s697 + $0x64] sm:$0xf]
        %v750 = vld [vmem:[%s697 + $0x68] sm:$0xf]
        %v751 = vld [vmem:[%s697 + $0x6c] sm:$0xf]
        %v752 = vld [vmem:[%s697 + $0x70] sm:$0xf]
        %v753 = vld [vmem:[%s697 + $0x74] sm:$0xf]
        %v754 = vld [vmem:[%s697 + $0x78] sm:$0xf]
        %v755 = vld [vmem:[%s697 + $0x7c] sm:$0xf]
        %v756 = vld [vmem:[%s697 + $0x80] sm:$0xf]
        %v757 = vld [vmem:[%s697 + $0x84] sm:$0xf]
        %v758 = vld [vmem:[%s697 + $0x88] sm:$0xf]
        %v759 = vld [vmem:[%s697 + $0x8c] sm:$0xf]
        %v760 = vld [vmem:[%s697 + $0x90] sm:$0xf]
        %v761 = vld [vmem:[%s697 + $0x94] sm:$0xf]
        %v762 = vld [vmem:[%s697 + $0x98] sm:$0xf]
        %v763 = vld [vmem:[%s697 + $0x9c] sm:$0xf]
        %v764 = vld [vmem:[%s697 + $0xa0] sm:$0xf]
        %v765 = vld [vmem:[%s697 + $0xa4] sm:$0xf]
        %v766 = vld [vmem:[%s697 + $0xa8] sm:$0xf]
        %v767 = vld [vmem:[%s697 + $0xac] sm:$0xf]
        %v768 = vld [vmem:[%s697 + $0xb0] sm:$0xf]
        %v769 = vld [vmem:[%s697 + $0xb4] sm:$0xf]
        %v770 = vld [vmem:[%s697 + $0xb8] sm:$0xf]
        %v771 = vld [vmem:[%s697 + $0xbc] sm:$0xf]
        %v772 = vld [vmem:[%s697 + $0xc0] sm:$0xf]
        %v773 = vld [vmem:[%s697 + $0xc4] sm:$0xf]
        %v774 = vld [vmem:[%s697 + $0xc8] sm:$0xf]
        %v775 = vld [vmem:[%s697 + $0xcc] sm:$0xf]
        %v776 = vld [vmem:[%s697 + $0xd0] sm:$0xf]
        %v777 = vld [vmem:[%s697 + $0xd4] sm:$0xf]
        %v778 = vld [vmem:[%s697 + $0xd8] sm:$0xf]
        %v779 = vld [vmem:[%s697 + $0xdc] sm:$0xf]
        %v780 = vld [vmem:[%s697 + $0xe0] sm:$0xf]
        %v781 = vld [vmem:[%s697 + $0xe4] sm:$0xf]
        %v782 = vld [vmem:[%s697 + $0xe8] sm:$0xf]
        %v783 = vld [vmem:[%s697 + $0xec] sm:$0xf]
        %v784 = vld [vmem:[%s697 + $0xf0] sm:$0xf]
        %v785 = vld [vmem:[%s697 + $0xf4] sm:$0xf]
        %v786 = vld [vmem:[%s697 + $0xf8] sm:$0xf]
        %v787 = vld [vmem:[%s697 + $0xfc] sm:$0xf]
        %v788 = vld [vmem:[%s697 + $0x100] sm:$0xf]
        %v789 = vld [vmem:[%s697 + $0x104] sm:$0xf]
        %v790 = vld [vmem:[%s697 + $0x108] sm:$0xf]
        %v791 = vld [vmem:[%s697 + $0x10c] sm:$0xf]
        %v792 = vld [vmem:[%s697 + $0x110] sm:$0xf]
        %v793 = vld [vmem:[%s697 + $0x114] sm:$0xf]
        %v794 = vld [vmem:[%s697 + $0x118] sm:$0xf]
        %v795 = vld [vmem:[%s697 + $0x11c] sm:$0xf]
        %v796 = vld [vmem:[%s697 + $0x120] sm:$0xf]
        %v797 = vld [vmem:[%s697 + $0x124] sm:$0xf]
        %v798 = vld [vmem:[%s697 + $0x128] sm:$0xf]
        %v799 = vld [vmem:[%s697 + $0x12c] sm:$0xf]
        %v800 = vld [vmem:[%s697 + $0x130] sm:$0xf]
        %v801 = vld [vmem:[%s697 + $0x134] sm:$0xf]
        %v802 = vld [vmem:[%s697 + $0x138] sm:$0xf]
        %v803 = vld [vmem:[%s697 + $0x13c] sm:$0xf]
        %v804 = vld [vmem:[%s697 + $0x140] sm:$0xf]
        %v805 = vld [vmem:[%s697 + $0x144] sm:$0xf]
        %v806 = vld [vmem:[%s697 + $0x148] sm:$0xf]
        %v807 = vld [vmem:[%s697 + $0x14c] sm:$0xf]
        %v808 = vld [vmem:[%s697 + $0x150] sm:$0xf]
        %v809 = vld [vmem:[%s697 + $0x154] sm:$0xf]
        %v810 = vld [vmem:[%s697 + $0x158] sm:$0xf]
        %v811 = vld [vmem:[%s697 + $0x15c] sm:$0xf]
        %v812 = vld [vmem:[%s697 + $0x160] sm:$0xf]
        %v813 = vld [vmem:[%s697 + $0x164] sm:$0xf]
        %v814 = vld [vmem:[%s697 + $0x168] sm:$0xf]
        %v815 = vld [vmem:[%s697 + $0x16c] sm:$0xf]
        %v816 = vld [vmem:[%s697 + $0x170] sm:$0xf]
        %v817 = vld [vmem:[%s697 + $0x174] sm:$0xf]
        %v818 = vld [vmem:[%s697 + $0x178] sm:$0xf]
        %v819 = vld [vmem:[%s697 + $0x17c] sm:$0xf]
        %v820 = vld [vmem:[%s697 + $0x180] sm:$0xf]
        %v821 = vld [vmem:[%s697 + $0x184] sm:$0xf]
        %v822 = vld [vmem:[%s697 + $0x188] sm:$0xf]
        %v823 = vld [vmem:[%s697 + $0x18c] sm:$0xf]
        %v824 = vld [vmem:[%s697 + $0x190] sm:$0xf]
        %v825 = vld [vmem:[%s697 + $0x194] sm:$0xf]
        %v826 = vld [vmem:[%s697 + $0x198] sm:$0xf]
        %v827 = vld [vmem:[%s697 + $0x19c] sm:$0xf]
        %v828 = vld [vmem:[%s697 + $0x1a0] sm:$0xf]
        %v829 = vld [vmem:[%s697 + $0x1a4] sm:$0xf]
        %v830 = vld [vmem:[%s697 + $0x1a8] sm:$0xf]
        %v831 = vld [vmem:[%s697 + $0x1ac] sm:$0xf]
        %v832 = vld [vmem:[%s697 + $0x1b0] sm:$0xf]
        %v833 = vld [vmem:[%s697 + $0x1b4] sm:$0xf]
        %v834 = vld [vmem:[%s697 + $0x1b8] sm:$0xf]
        %v835 = vld [vmem:[%s697 + $0x1bc] sm:$0xf]
        %v836 = vld [vmem:[%s697 + $0x1c0] sm:$0xf]
        %v837 = vld [vmem:[%s697 + $0x1c4] sm:$0xf]
        %v838 = vld [vmem:[%s697 + $0x1c8] sm:$0xf]
        %v839 = vld [vmem:[%s697 + $0x1cc] sm:$0xf]
        %v840 = vld [vmem:[%s697 + $0x1d0] sm:$0xf]
        %v841 = vld [vmem:[%s697 + $0x1d4] sm:$0xf]
        %v842 = vld [vmem:[%s697 + $0x1d8] sm:$0xf]
        %v843 = vld [vmem:[%s697 + $0x1dc] sm:$0xf]
        %v844 = vld [vmem:[%s697 + $0x1e0] sm:$0xf]
        %v845 = vld [vmem:[%s697 + $0x1e4] sm:$0xf]
        %v846 = vld [vmem:[%s697 + $0x1e8] sm:$0xf]
        %v847 = vld [vmem:[%s697 + $0x1ec] sm:$0xf]
        %v848 = vld [vmem:[%s697 + $0x1f0] sm:$0xf]
        %v849 = vld [vmem:[%s697 + $0x1f4] sm:$0xf]
        %v850 = vld [vmem:[%s697 + $0x1f8] sm:$0xf]
        %v851 = vld [vmem:[%s697 + $0x1fc] sm:$0xf]
        %s852 = sshra.s32 %s719, 7
        %s853 = sand.u32 %s719, 127
        %s854 = scalar_lea.vmem %s2, %s852
        %v855 = vld [vmem:[%s854] sm:$0x1]
        %v857 = vlaneseq
        %v858 = vshrl.u32 %v857, 7
        %v859 = vsub.s32 0, %v858
        %v860 = vrot.slane %v855, %v859
        %v866 = vunpack.c.l.b16 %v720
        %v867 = vunpack.c.h.b16 %v720
        %v868 = vunpack.c.l.b16 %v721
        %v869 = vunpack.c.h.b16 %v721
        %v870 = vunpack.c.l.b16 %v722
        %v871 = vunpack.c.h.b16 %v722
        %v872 = vunpack.c.l.b16 %v723
        %v873 = vunpack.c.h.b16 %v723
        %v874 = vpack.c.b16 %v866, %v866
        %v875 = vpack.c.b16 %v867, %v867
        %v876 = vpack.c.b16 %v868, %v868
        %v877 = vpack.c.b16 %v869, %v869
        %v878 = vpack.c.b16 %v870, %v870
        %v879 = vpack.c.b16 %v871, %v871
        %v880 = vpack.c.b16 %v872, %v872
        %v881 = vpack.c.b16 %v873, %v873
        %v1018 = vunpack.c.l.b16 %v724
        %v1019 = vunpack.c.l.b16 %v725
        %v1020 = vunpack.c.l.b16 %v726
        %v1021 = vunpack.c.l.b16 %v727
        %v1022 = vunpack.c.l.b16 %v728
        %v1023 = vunpack.c.l.b16 %v729
        %v1024 = vunpack.c.l.b16 %v730
        %v1025 = vunpack.c.l.b16 %v731
        %v1026 = vunpack.c.l.b16 %v732
        %v1027 = vunpack.c.l.b16 %v733
        %v1028 = vunpack.c.l.b16 %v734
        %v1029 = vunpack.c.l.b16 %v735
        %v1030 = vunpack.c.l.b16 %v736
        %v1031 = vunpack.c.l.b16 %v737
        %v1032 = vunpack.c.l.b16 %v738
        %v1033 = vunpack.c.l.b16 %v739
        %v1034 = vunpack.c.l.b16 %v740
        %v1035 = vunpack.c.l.b16 %v741
        %v1036 = vunpack.c.l.b16 %v742
        %v1037 = vunpack.c.l.b16 %v743
        %v1038 = vunpack.c.l.b16 %v744
        %v1039 = vunpack.c.l.b16 %v745
        %v1040 = vunpack.c.l.b16 %v746
        %v1041 = vunpack.c.l.b16 %v747
        %v1042 = vunpack.c.l.b16 %v748
        %v1043 = vunpack.c.l.b16 %v749
        %v1044 = vunpack.c.l.b16 %v750
        %v1045 = vunpack.c.l.b16 %v751
        %v1046 = vunpack.c.l.b16 %v752
        %v1047 = vunpack.c.l.b16 %v753
        %v1048 = vunpack.c.l.b16 %v754
        %v1049 = vunpack.c.l.b16 %v755
        %v1050 = vunpack.c.l.b16 %v756
        %v1051 = vunpack.c.l.b16 %v757
        %v1052 = vunpack.c.l.b16 %v758
        %v1053 = vunpack.c.l.b16 %v759
        %v1054 = vunpack.c.l.b16 %v760
        %v1055 = vunpack.c.l.b16 %v761
        %v1056 = vunpack.c.l.b16 %v762
        %v1057 = vunpack.c.l.b16 %v763
        %v1058 = vunpack.c.l.b16 %v764
        %v1059 = vunpack.c.l.b16 %v765
        %v1060 = vunpack.c.l.b16 %v766
        %v1061 = vunpack.c.l.b16 %v767
        %v1062 = vunpack.c.l.b16 %v768
        %v1063 = vunpack.c.l.b16 %v769
        %v1064 = vunpack.c.l.b16 %v770
        %v1065 = vunpack.c.l.b16 %v771
        %v1066 = vunpack.c.l.b16 %v772
        %v1067 = vunpack.c.l.b16 %v773
        %v1068 = vunpack.c.l.b16 %v774
        %v1069 = vunpack.c.l.b16 %v775
        %v1070 = vunpack.c.l.b16 %v776
        %v1071 = vunpack.c.l.b16 %v777
        %v1072 = vunpack.c.l.b16 %v778
        %v1073 = vunpack.c.l.b16 %v779
        %v1074 = vunpack.c.l.b16 %v780
        %v1075 = vunpack.c.l.b16 %v781
        %v1076 = vunpack.c.l.b16 %v782
        %v1077 = vunpack.c.l.b16 %v783
        %v1078 = vunpack.c.l.b16 %v784
        %v1079 = vunpack.c.l.b16 %v785
        %v1080 = vunpack.c.l.b16 %v786
        %v1081 = vunpack.c.l.b16 %v787
        %v1082 = vunpack.c.l.b16 %v788
        %v1083 = vunpack.c.l.b16 %v789
        %v1084 = vunpack.c.l.b16 %v790
        %v1085 = vunpack.c.l.b16 %v791
        %v1086 = vunpack.c.l.b16 %v792
        %v1087 = vunpack.c.l.b16 %v793
        %v1088 = vunpack.c.l.b16 %v794
        %v1089 = vunpack.c.l.b16 %v795
        %v1090 = vunpack.c.l.b16 %v796
        %v1091 = vunpack.c.l.b16 %v797
        %v1092 = vunpack.c.l.b16 %v798
        %v1093 = vunpack.c.l.b16 %v799
        %v1094 = vunpack.c.l.b16 %v800
        %v1095 = vunpack.c.l.b16 %v801
        %v1096 = vunpack.c.l.b16 %v802
        %v1097 = vunpack.c.l.b16 %v803
        %v1098 = vunpack.c.l.b16 %v804
        %v1099 = vunpack.c.l.b16 %v805
        %v1100 = vunpack.c.l.b16 %v806
        %v1101 = vunpack.c.l.b16 %v807
        %v1102 = vunpack.c.l.b16 %v808
        %v1103 = vunpack.c.l.b16 %v809
        %v1104 = vunpack.c.l.b16 %v810
        %v1105 = vunpack.c.l.b16 %v811
        %v1106 = vunpack.c.l.b16 %v812
        %v1107 = vunpack.c.l.b16 %v813
        %v1108 = vunpack.c.l.b16 %v814
        %v1109 = vunpack.c.l.b16 %v815
        %v1110 = vunpack.c.l.b16 %v816
        %v1111 = vunpack.c.l.b16 %v817
        %v1112 = vunpack.c.l.b16 %v818
        %v1113 = vunpack.c.l.b16 %v819
        %v1114 = vunpack.c.l.b16 %v820
        %v1115 = vunpack.c.l.b16 %v821
        %v1116 = vunpack.c.l.b16 %v822
        %v1117 = vunpack.c.l.b16 %v823
        %v1118 = vunpack.c.l.b16 %v824
        %v1119 = vunpack.c.l.b16 %v825
        %v1120 = vunpack.c.l.b16 %v826
        %v1121 = vunpack.c.l.b16 %v827
        %v1122 = vunpack.c.l.b16 %v828
        %v1123 = vunpack.c.l.b16 %v829
        %v1124 = vunpack.c.l.b16 %v830
        %v1125 = vunpack.c.l.b16 %v831
        %v1126 = vunpack.c.l.b16 %v832
        %v1127 = vunpack.c.l.b16 %v833
        %v1128 = vunpack.c.l.b16 %v834
        %v1129 = vunpack.c.l.b16 %v835
        %v1130 = vunpack.c.l.b16 %v836
        %v1131 = vunpack.c.l.b16 %v837
        %v1132 = vunpack.c.l.b16 %v838
        %v1133 = vunpack.c.l.b16 %v839
        %v1134 = vunpack.c.l.b16 %v840
        %v1135 = vunpack.c.l.b16 %v841
        %v1136 = vunpack.c.l.b16 %v842
        %v1137 = vunpack.c.l.b16 %v843
        %v1138 = vunpack.c.l.b16 %v844
        %v1139 = vunpack.c.l.b16 %v845
        %v1140 = vunpack.c.l.b16 %v846
        %v1141 = vunpack.c.l.b16 %v847
        %v1142 = vunpack.c.l.b16 %v848
        %v1143 = vunpack.c.l.b16 %v849
        %v1144 = vunpack.c.l.b16 %v850
        %v1145 = vunpack.c.l.b16 %v851
        %v1146 = vpack.c.b16 %v1019, %v1018
        %v1147 = vpack.c.b16 %v1021, %v1020
        %v1148 = vpack.c.b16 %v1023, %v1022
        %v1149 = vpack.c.b16 %v1025, %v1024
        %v1150 = vpack.c.b16 %v1027, %v1026
        %v1151 = vpack.c.b16 %v1029, %v1028
        %v1152 = vpack.c.b16 %v1031, %v1030
        %v1153 = vpack.c.b16 %v1033, %v1032
        %v1154 = vpack.c.b16 %v1035, %v1034
        %v1155 = vpack.c.b16 %v1037, %v1036
        %v1156 = vpack.c.b16 %v1039, %v1038
        %v1157 = vpack.c.b16 %v1041, %v1040
        %v1158 = vpack.c.b16 %v1043, %v1042
        %v1159 = vpack.c.b16 %v1045, %v1044
        %v1160 = vpack.c.b16 %v1047, %v1046
        %v1161 = vpack.c.b16 %v1049, %v1048
        %v1162 = vpack.c.b16 %v1051, %v1050
        %v1163 = vpack.c.b16 %v1053, %v1052
        %v1164 = vpack.c.b16 %v1055, %v1054
        %v1165 = vpack.c.b16 %v1057, %v1056
        %v1166 = vpack.c.b16 %v1059, %v1058
        %v1167 = vpack.c.b16 %v1061, %v1060
        %v1168 = vpack.c.b16 %v1063, %v1062
        %v1169 = vpack.c.b16 %v1065, %v1064
        %v1170 = vpack.c.b16 %v1067, %v1066
        %v1171 = vpack.c.b16 %v1069, %v1068
        %v1172 = vpack.c.b16 %v1071, %v1070
        %v1173 = vpack.c.b16 %v1073, %v1072
        %v1174 = vpack.c.b16 %v1075, %v1074
        %v1175 = vpack.c.b16 %v1077, %v1076
        %v1176 = vpack.c.b16 %v1079, %v1078
        %v1177 = vpack.c.b16 %v1081, %v1080
        %v1178 = vpack.c.b16 %v1083, %v1082
        %v1179 = vpack.c.b16 %v1085, %v1084
        %v1180 = vpack.c.b16 %v1087, %v1086
        %v1181 = vpack.c.b16 %v1089, %v1088
        %v1182 = vpack.c.b16 %v1091, %v1090
        %v1183 = vpack.c.b16 %v1093, %v1092
        %v1184 = vpack.c.b16 %v1095, %v1094
        %v1185 = vpack.c.b16 %v1097, %v1096
        %v1186 = vpack.c.b16 %v1099, %v1098
        %v1187 = vpack.c.b16 %v1101, %v1100
        %v1188 = vpack.c.b16 %v1103, %v1102
        %v1189 = vpack.c.b16 %v1105, %v1104
        %v1190 = vpack.c.b16 %v1107, %v1106
        %v1191 = vpack.c.b16 %v1109, %v1108
        %v1192 = vpack.c.b16 %v1111, %v1110
        %v1193 = vpack.c.b16 %v1113, %v1112
        %v1194 = vpack.c.b16 %v1115, %v1114
        %v1195 = vpack.c.b16 %v1117, %v1116
        %v1196 = vpack.c.b16 %v1119, %v1118
        %v1197 = vpack.c.b16 %v1121, %v1120
        %v1198 = vpack.c.b16 %v1123, %v1122
        %v1199 = vpack.c.b16 %v1125, %v1124
        %v1200 = vpack.c.b16 %v1127, %v1126
        %v1201 = vpack.c.b16 %v1129, %v1128
        %v1202 = vpack.c.b16 %v1131, %v1130
        %v1203 = vpack.c.b16 %v1133, %v1132
        %v1204 = vpack.c.b16 %v1135, %v1134
        %v1205 = vpack.c.b16 %v1137, %v1136
        %v1206 = vpack.c.b16 %v1139, %v1138
        %v1207 = vpack.c.b16 %v1141, %v1140
        %v1208 = vpack.c.b16 %v1143, %v1142
        %v1209 = vpack.c.b16 %v1145, %v1144
        %1274 = vmatprep.subr.bf16.mxu0 0
        %1275 = vmatpush1.bf16.msra.mxu0 %v1146
        %1276 = vmatprep.subr.bf16.mxu0 0
        %1277 = vmatpush1.bf16.msra.mxu0 %v1147
        %1278 = vmatprep.subr.bf16.mxu0 0
        %1279 = vmatpush1.bf16.msra.mxu0 %v1148
        %1280 = vmatprep.subr.bf16.mxu0 0
        %1281 = vmatpush1.bf16.msra.mxu0 %v1149
        %1282 = vmatprep.subr.bf16.mxu0 0
        %1283 = vmatpush1.bf16.msra.mxu0 %v1150
        %1284 = vmatprep.subr.bf16.mxu0 0
        %1285 = vmatpush1.bf16.msra.mxu0 %v1151
        %1286 = vmatprep.subr.bf16.mxu0 0
        %1287 = vmatpush1.bf16.msra.mxu0 %v1152
        %1288 = vmatprep.subr.bf16.mxu0 0
        %1289 = vmatpush1.bf16.msra.mxu0 %v1153
        %1290 = vmatprep.subr.bf16.mxu0 0
        %1291 = vmatpush1.bf16.msra.mxu0 %v1154
        %1292 = vmatprep.subr.bf16.mxu0 0
        %1293 = vmatpush1.bf16.msra.mxu0 %v1155
        %1294 = vmatprep.subr.bf16.mxu0 0
        %1295 = vmatpush1.bf16.msra.mxu0 %v1156
        %1296 = vmatprep.subr.bf16.mxu0 0
        %1297 = vmatpush1.bf16.msra.mxu0 %v1157
        %1298 = vmatprep.subr.bf16.mxu0 0
        %1299 = vmatpush1.bf16.msra.mxu0 %v1158
        %1300 = vmatprep.subr.bf16.mxu0 0
        %1301 = vmatpush1.bf16.msra.mxu0 %v1159
        %1302 = vmatprep.subr.bf16.mxu0 0
        %1303 = vmatpush1.bf16.msra.mxu0 %v1160
        %1304 = vmatprep.subr.bf16.mxu0 0
        %1305 = vmatpush1.bf16.msra.mxu0 %v1161
        %1306 = vmatprep.mubr.bf16.mxu0 %v875
        %1307 = vmatmul.mubr.bf16.gmra.mrb[0].mxu0 %v874
        %v1308 = vpop.f32.mrb[0].mxu0
        %v1309 = vadd.f32 %v860, %v1308
        %v1310 = vpop.f32.mrb[0].mxu0
        %v1311 = vpop.f32.mrb[0].mxu0
        %v1312 = vpop.f32.mrb[0].mxu0
        %1313 = vdwg.mxu0
        %1314 = vmatprep.subr.bf16.mxu0 0
        %1315 = vmatpush1.bf16.msra.mxu0 %v1162
        %1316 = vmatprep.subr.bf16.mxu0 0
        %1317 = vmatpush1.bf16.msra.mxu0 %v1163
        %1318 = vmatprep.subr.bf16.mxu0 0
        %1319 = vmatpush1.bf16.msra.mxu0 %v1164
        %1320 = vmatprep.subr.bf16.mxu0 0
        %1321 = vmatpush1.bf16.msra.mxu0 %v1165
        %1322 = vmatprep.subr.bf16.mxu0 0
        %1323 = vmatpush1.bf16.msra.mxu0 %v1166
        %1324 = vmatprep.subr.bf16.mxu0 0
        %1325 = vmatpush1.bf16.msra.mxu0 %v1167
        %1326 = vmatprep.subr.bf16.mxu0 0
        %1327 = vmatpush1.bf16.msra.mxu0 %v1168
        %1328 = vmatprep.subr.bf16.mxu0 0
        %1329 = vmatpush1.bf16.msra.mxu0 %v1169
        %1330 = vmatprep.subr.bf16.mxu0 0
        %1331 = vmatpush1.bf16.msra.mxu0 %v1170
        %1332 = vmatprep.subr.bf16.mxu0 0
        %1333 = vmatpush1.bf16.msra.mxu0 %v1171
        %1334 = vmatprep.subr.bf16.mxu0 0
        %1335 = vmatpush1.bf16.msra.mxu0 %v1172
        %1336 = vmatprep.subr.bf16.mxu0 0
        %1337 = vmatpush1.bf16.msra.mxu0 %v1173
        %1338 = vmatprep.subr.bf16.mxu0 0
        %1339 = vmatpush1.bf16.msra.mxu0 %v1174
        %1340 = vmatprep.subr.bf16.mxu0 0
        %1341 = vmatpush1.bf16.msra.mxu0 %v1175
        %1342 = vmatprep.subr.bf16.mxu0 0
        %1343 = vmatpush1.bf16.msra.mxu0 %v1176
        %1344 = vmatprep.subr.bf16.mxu0 0
        %1345 = vmatpush1.bf16.msra.mxu0 %v1177
        %1346 = vmatprep.mubr.bf16.mxu0 %v877
        %1347 = vmatmul.mubr.bf16.gmra.mrb[0].mxu0 %v876
        %v1348 = vpop.f32.mrb[0].mxu0
        %v1349 = vadd.f32 %v1309, %v1348
        %v1350 = vpop.f32.mrb[0].mxu0
        %v1351 = vpop.f32.mrb[0].mxu0
        %v1352 = vpop.f32.mrb[0].mxu0
        %1353 = vdwg.mxu0
        %1354 = vmatprep.subr.bf16.mxu0 0
        %1355 = vmatpush1.bf16.msra.mxu0 %v1178
        %1356 = vmatprep.subr.bf16.mxu0 0
        %1357 = vmatpush1.bf16.msra.mxu0 %v1179
        %1358 = vmatprep.subr.bf16.mxu0 0
        %1359 = vmatpush1.bf16.msra.mxu0 %v1180
        %1360 = vmatprep.subr.bf16.mxu0 0
        %1361 = vmatpush1.bf16.msra.mxu0 %v1181
        %1362 = vmatprep.subr.bf16.mxu0 0
        %1363 = vmatpush1.bf16.msra.mxu0 %v1182
        %1364 = vmatprep.subr.bf16.mxu0 0
        %1365 = vmatpush1.bf16.msra.mxu0 %v1183
        %1366 = vmatprep.subr.bf16.mxu0 0
        %1367 = vmatpush1.bf16.msra.mxu0 %v1184
        %1368 = vmatprep.subr.bf16.mxu0 0
        %1369 = vmatpush1.bf16.msra.mxu0 %v1185
        %1370 = vmatprep.subr.bf16.mxu0 0
        %1371 = vmatpush1.bf16.msra.mxu0 %v1186
        %1372 = vmatprep.subr.bf16.mxu0 0
        %1373 = vmatpush1.bf16.msra.mxu0 %v1187
        %1374 = vmatprep.subr.bf16.mxu0 0
        %1375 = vmatpush1.bf16.msra.mxu0 %v1188
        %1376 = vmatprep.subr.bf16.mxu0 0
        %1377 = vmatpush1.bf16.msra.mxu0 %v1189
        %1378 = vmatprep.subr.bf16.mxu0 0
        %1379 = vmatpush1.bf16.msra.mxu0 %v1190
        %1380 = vmatprep.subr.bf16.mxu0 0
        %1381 = vmatpush1.bf16.msra.mxu0 %v1191
        %1382 = vmatprep.subr.bf16.mxu0 0
        %1383 = vmatpush1.bf16.msra.mxu0 %v1192
        %1384 = vmatprep.subr.bf16.mxu0 0
        %1385 = vmatpush1.bf16.msra.mxu0 %v1193
        %1386 = vmatprep.mubr.bf16.mxu0 %v879
        %1387 = vmatmul.mubr.bf16.gmra.mrb[0].mxu0 %v878
        %v1388 = vpop.f32.mrb[0].mxu0
        %v1389 = vadd.f32 %v1349, %v1388
        %v1390 = vpop.f32.mrb[0].mxu0
        %v1391 = vpop.f32.mrb[0].mxu0
        %v1392 = vpop.f32.mrb[0].mxu0
        %1393 = vdwg.mxu0
        %1394 = vmatprep.subr.bf16.mxu0 0
        %1395 = vmatpush1.bf16.msra.mxu0 %v1194
        %1396 = vmatprep.subr.bf16.mxu0 0
        %1397 = vmatpush1.bf16.msra.mxu0 %v1195
        %1398 = vmatprep.subr.bf16.mxu0 0
        %1399 = vmatpush1.bf16.msra.mxu0 %v1196
        %1400 = vmatprep.subr.bf16.mxu0 0
        %1401 = vmatpush1.bf16.msra.mxu0 %v1197
        %1402 = vmatprep.subr.bf16.mxu0 0
        %1403 = vmatpush1.bf16.msra.mxu0 %v1198
        %1404 = vmatprep.subr.bf16.mxu0 0
        %1405 = vmatpush1.bf16.msra.mxu0 %v1199
        %1406 = vmatprep.subr.bf16.mxu0 0
        %1407 = vmatpush1.bf16.msra.mxu0 %v1200
        %1408 = vmatprep.subr.bf16.mxu0 0
        %1409 = vmatpush1.bf16.msra.mxu0 %v1201
        %1410 = vmatprep.subr.bf16.mxu0 0
        %1411 = vmatpush1.bf16.msra.mxu0 %v1202
        %1412 = vmatprep.subr.bf16.mxu0 0
        %1413 = vmatpush1.bf16.msra.mxu0 %v1203
        %1414 = vmatprep.subr.bf16.mxu0 0
        %1415 = vmatpush1.bf16.msra.mxu0 %v1204
        %1416 = vmatprep.subr.bf16.mxu0 0
        %1417 = vmatpush1.bf16.msra.mxu0 %v1205
        %1418 = vmatprep.subr.bf16.mxu0 0
        %1419 = vmatpush1.bf16.msra.mxu0 %v1206
        %1420 = vmatprep.subr.bf16.mxu0 0
        %1421 = vmatpush1.bf16.msra.mxu0 %v1207
        %1422 = vmatprep.subr.bf16.mxu0 0
        %1423 = vmatpush1.bf16.msra.mxu0 %v1208
        %1424 = vmatprep.subr.bf16.mxu0 0
        %1425 = vmatpush1.bf16.msra.mxu0 %v1209
        %1426 = vmatprep.mubr.bf16.mxu0 %v881
        %1427 = vmatmul.mubr.bf16.gmra.mrb[0].mxu0 %v880
        %v1428 = vpop.f32.mrb[0].mxu0
        %v1429 = vadd.f32 %v1389, %v1428
        %v1430 = vpop.f32.mrb[0].mxu0
        %v1431 = vpop.f32.mrb[0].mxu0
        %v1432 = vpop.f32.mrb[0].mxu0
        %1433 = vdwg.mxu0
        %v1434 = vmul.f32 %v1429, 0.5
        %v1435 = vtanh.pop %v1434
        %v1436 = vmul.f32 %v1435, 0.5
        %v1437 = vadd.f32 %v1436, 0.5
        %1438 = vst [vmem:[%s717] sm:$0xff] %v1437
        %s1439 = sand.u32 %s93, 1
        %s1440 = scalar_lea.sflag [#allocation4], %s1439
        %s1441 = sand.u32 %s93, 1
        %s1442 = smul.addr %s1441, 8
        %s1443 = scalar_lea.vmem [#allocation3], %s1442
        // Predicated region
        $region74: #{tybalt_vae_forward.5} parent=68 // pred_check
          %p1444 = pneg %p103
        $region75: #{tybalt_vae_forward.5} parent=68 // pred_check_branch
          %1446 = sbr.rel (%p1444) target = $region77
        $region76: #{tybalt_vae_forward.5} parent=68 // pred_region
          %s1448 = ssub.s32 128, 128
          %1449 = vsyncadd %s1440, %s1448
          %s1450 = smul.addr %s17, 128
          %s1451 = scalar_lea.hbm %s3, %s1450
          %s1453 = sshll.u32 %s1443, 4
          %s1454 = int_to_ptr.vmem [resolvable:$true] %s1453
          %1456 = dma.vmem_to_hbm [thread:$0]  %s1454, 128, %s1451, %s1440
        $region77: #{tybalt_vae_forward.5} parent=68 // pred_fallthru
          _
      $region69: #{tybalt_vae_forward.5} parent=5 // pred_fallthru
        _
      %p1457 = scmp.le.s32.totalorder 2, %s12
      // Predicated region
      $region78: #{tybalt_vae_forward.5} parent=5 // pred_check
        %p1458 = pneg %p1457
      $region79: #{tybalt_vae_forward.5} parent=5 // pred_check_branch
        %1460 = sbr.rel (%p1458) target = $region81
      $region80: #{tybalt_vae_forward.5} parent=5 // pred_region
        %s1461 = ssub.s32 %s12, 2
        // Predicated region
        $region82: #{tybalt_vae_forward.5} parent=80 // pred_check
          %p1462 = pneg %p109
        $region83: #{tybalt_vae_forward.5} parent=80 // pred_check_branch
          %1464 = sbr.rel (%p1462) target = $region85
        $region84: #{tybalt_vae_forward.5} parent=80 // pred_region
          %s1465 = sand.u32 %s94, 1
          %s1466 = scalar_lea.sflag [#allocation4], %s1465
          %s1467 = sand.u32 %s94, 1
          %s1468 = smul.addr %s1467, 8
          %s1469 = scalar_lea.vmem [#allocation3], %s1468
          %1470 = dma.done %s1466, 128
        $region85: #{tybalt_vae_forward.5} parent=80 // pred_fallthru
          _
      $region81: #{tybalt_vae_forward.5} parent=5 // pred_fallthru
        _
    $region6: #{tybalt_vae_forward.5} parent=1 // loop_footer
      %s16 = sadd.s32 1, %s12
    $region7: #{tybalt_vae_forward.5} parent=1 // loop_footer_branch
      %11 = sbr.rel target = $region3
    $region8: #{tybalt_vae_forward.5} parent=1 // loop_exit
      _
    %1471 = vsyncpa [#allocation4], 1
    %s1472 = scalar_lea.sflag [#allocation4], 1
    %1473 = vsyncpa %s1472, 1

// kernel: tybalt_vae_forward.4
$region0: #{tybalt_vae_forward.4}
  #allocation0 [shape = 'u32[]', space=smem, size = 0x4, offset = 0x4, fixed_abs, tag = 'smem constant byte address 0x4 - core index']
  #allocation1 [shape = 'u32[144,128]{1,0:T(1,128)}', space=vmem, size = 0x12000, scoped, tag = 'internal scratch']
  %s0 = inlined_call_operand.vmem [shape: bf16[8,1024], index: 0, kind: input, shape index: {}]
  %s1 = inlined_call_operand.vmem [shape: bf16[1024,128], index: 1, kind: input, shape index: {}]
  %s2 = inlined_call_operand.vmem [shape: f32[1,128], index: 2, kind: input, shape index: {}]
  %s3 = inlined_call_operand.vmem [shape: bf16[128,1024], index: 3, kind: input, shape index: {}]
  %s4 = inlined_call_operand.vmem [shape: f32[1,1024], index: 4, kind: input, shape index: {}]
  %s5 = inlined_call_operand.vmem [shape: f32[8,128], index: 5, kind: output, shape index: {0}]
  %s6 = inlined_call_operand.vmem [shape: bf16[8,1024], index: 6, kind: output, shape index: {1}]
  %7 = xla_tuple %s5, %s6
  %s8 = sld [smem:[#allocation0]]
  $region38: #{tybalt_vae_forward.4} parent=0
    _
  %s10 = ssub.s32 1, %s8
  %s11 = scalar_select 0, %s10, %s8
  // Predicated region
  $region2: #{tybalt_vae_forward.4} parent=0 // pred_check
    _
  $region3: #{tybalt_vae_forward.4} parent=0 // pred_check_branch
    %13 = sbr.rel (0) target = $region5
  $region4: #{tybalt_vae_forward.4} parent=0 // pred_region
    _
  $region5: #{tybalt_vae_forward.4} parent=0 // pred_fallthru
    _
  // Predicated region
  $region6: #{tybalt_vae_forward.4} parent=0 // pred_check
    _
  $region7: #{tybalt_vae_forward.4} parent=0 // pred_check_branch
    %15 = sbr.rel (0) target = $region9
  $region8: #{tybalt_vae_forward.4} parent=0 // pred_region
    _
  $region9: #{tybalt_vae_forward.4} parent=0 // pred_fallthru
    _
  // Predicated region
  $region10: #{tybalt_vae_forward.4} parent=0 // pred_check
    _
  $region11: #{tybalt_vae_forward.4} parent=0 // pred_check_branch
    %17 = sbr.rel (0) target = $region13
  $region12: #{tybalt_vae_forward.4} parent=0 // pred_region
    _
  $region13: #{tybalt_vae_forward.4} parent=0 // pred_fallthru
    _
  // Predicated region
  $region14: #{tybalt_vae_forward.4} parent=0 // pred_check
    _
  $region15: #{tybalt_vae_forward.4} parent=0 // pred_check_branch
    %19 = sbr.rel (0) target = $region17
  $region16: #{tybalt_vae_forward.4} parent=0 // pred_region
    _
  $region17: #{tybalt_vae_forward.4} parent=0 // pred_fallthru
    _
  // Predicated region
  $region18: #{tybalt_vae_forward.4} parent=0 // pred_check
    _
  $region19: #{tybalt_vae_forward.4} parent=0 // pred_check_branch
    %21 = sbr.rel (0) target = $region21
  $region20: #{tybalt_vae_forward.4} parent=0 // pred_region
    _
  $region21: #{tybalt_vae_forward.4} parent=0 // pred_fallthru
    _
  %v23 = vld [vmem:[%s0] sm:$0xff]
  %v24 = vld [vmem:[%s0 + $0x8] sm:$0xff]
  %v25 = vld [vmem:[%s0 + $0x10] sm:$0xff]
  %v26 = vld [vmem:[%s0 + $0x18] sm:$0xff]
  %v27 = vld [vmem:[%s1] sm:$0xf]
  %v28 = vld [vmem:[%s1 + $0x4] sm:$0xf]
  %v29 = vld [vmem:[%s1 + $0x8] sm:$0xf]
  %v30 = vld [vmem:[%s1 + $0xc] sm:$0xf]
  %v31 = vld [vmem:[%s1 + $0x10] sm:$0xf]
  %v32 = vld [vmem:[%s1 + $0x14] sm:$0xf]
  %v33 = vld [vmem:[%s1 + $0x18] sm:$0xf]
  %v34 = vld [vmem:[%s1 + $0x1c] sm:$0xf]
  %v35 = vld [vmem:[%s1 + $0x20] sm:$0xf]
  %v36 = vld [vmem:[%s1 + $0x24] sm:$0xf]
  %v37 = vld [vmem:[%s1 + $0x28] sm:$0xf]
  %v38 = vld [vmem:[%s1 + $0x2c] sm:$0xf]
  %v39 = vld [vmem:[%s1 + $0x30] sm:$0xf]
  %v40 = vld [vmem:[%s1 + $0x34] sm:$0xf]
  %v41 = vld [vmem:[%s1 + $0x38] sm:$0xf]
  %v42 = vld [vmem:[%s1 + $0x3c] sm:$0xf]
  %v43 = vld [vmem:[%s1 + $0x40] sm:$0xf]
  %v44 = vld [vmem:[%s1 + $0x44] sm:$0xf]
  %v45 = vld [vmem:[%s1 + $0x48] sm:$0xf]
  %v46 = vld [vmem:[%s1 + $0x4c] sm:$0xf]
  %v47 = vld [vmem:[%s1 + $0x50] sm:$0xf]
  %v48 = vld [vmem:[%s1 + $0x54] sm:$0xf]
  %v49 = vld [vmem:[%s1 + $0x58] sm:$0xf]
  %v50 = vld [vmem:[%s1 + $0x5c] sm:$0xf]
  %v51 = vld [vmem:[%s1 + $0x60] sm:$0xf]
  %v52 = vld [vmem:[%s1 + $0x64] sm:$0xf]
  %v53 = vld [vmem:[%s1 + $0x68] sm:$0xf]
  %v54 = vld [vmem:[%s1 + $0x6c] sm:$0xf]
  %v55 = vld [vmem:[%s1 + $0x70] sm:$0xf]
  %v56 = vld [vmem:[%s1 + $0x74] sm:$0xf]
  %v57 = vld [vmem:[%s1 + $0x78] sm:$0xf]
  %v58 = vld [vmem:[%s1 + $0x7c] sm:$0xf]
  %v59 = vld [vmem:[%s1 + $0x80] sm:$0xf]
  %v60 = vld [vmem:[%s1 + $0x84] sm:$0xf]
  %v61 = vld [vmem:[%s1 + $0x88] sm:$0xf]
  %v62 = vld [vmem:[%s1 + $0x8c] sm:$0xf]
  %v63 = vld [vmem:[%s1 + $0x90] sm:$0xf]
  %v64 = vld [vmem:[%s1 + $0x94] sm:$0xf]
  %v65 = vld [vmem:[%s1 + $0x98] sm:$0xf]
  %v66 = vld [vmem:[%s1 + $0x9c] sm:$0xf]
  %v67 = vld [vmem:[%s1 + $0xa0] sm:$0xf]
  %v68 = vld [vmem:[%s1 + $0xa4] sm:$0xf]
  %v69 = vld [vmem:[%s1 + $0xa8] sm:$0xf]
  %v70 = vld [vmem:[%s1 + $0xac] sm:$0xf]
  %v71 = vld [vmem:[%s1 + $0xb0] sm:$0xf]
  %v72 = vld [vmem:[%s1 + $0xb4] sm:$0xf]
  %v73 = vld [vmem:[%s1 + $0xb8] sm:$0xf]
  %v74 = vld [vmem:[%s1 + $0xbc] sm:$0xf]
  %v75 = vld [vmem:[%s1 + $0xc0] sm:$0xf]
  %v76 = vld [vmem:[%s1 + $0xc4] sm:$0xf]
  %v77 = vld [vmem:[%s1 + $0xc8] sm:$0xf]
  %v78 = vld [vmem:[%s1 + $0xcc] sm:$0xf]
  %v79 = vld [vmem:[%s1 + $0xd0] sm:$0xf]
  %v80 = vld [vmem:[%s1 + $0xd4] sm:$0xf]
  %v81 = vld [vmem:[%s1 + $0xd8] sm:$0xf]
  %v82 = vld [vmem:[%s1 + $0xdc] sm:$0xf]
  %v83 = vld [vmem:[%s1 + $0xe0] sm:$0xf]
  %v84 = vld [vmem:[%s1 + $0xe4] sm:$0xf]
  %v85 = vld [vmem:[%s1 + $0xe8] sm:$0xf]
  %v86 = vld [vmem:[%s1 + $0xec] sm:$0xf]
  %v87 = vld [vmem:[%s1 + $0xf0] sm:$0xf]
  %v88 = vld [vmem:[%s1 + $0xf4] sm:$0xf]
  %v89 = vld [vmem:[%s1 + $0xf8] sm:$0xf]
  %v90 = vld [vmem:[%s1 + $0xfc] sm:$0xf]
  %v91 = vld [vmem:[%s1 + $0x100] sm:$0xf]
  %v92 = vld [vmem:[%s1 + $0x104] sm:$0xf]
  %v93 = vld [vmem:[%s1 + $0x108] sm:$0xf]
  %v94 = vld [vmem:[%s1 + $0x10c] sm:$0xf]
  %v95 = vld [vmem:[%s1 + $0x110] sm:$0xf]
  %v96 = vld [vmem:[%s1 + $0x114] sm:$0xf]
  %v97 = vld [vmem:[%s1 + $0x118] sm:$0xf]
  %v98 = vld [vmem:[%s1 + $0x11c] sm:$0xf]
  %v99 = vld [vmem:[%s1 + $0x120] sm:$0xf]
  %v100 = vld [vmem:[%s1 + $0x124] sm:$0xf]
  %v101 = vld [vmem:[%s1 + $0x128] sm:$0xf]
  %v102 = vld [vmem:[%s1 + $0x12c] sm:$0xf]
  %v103 = vld [vmem:[%s1 + $0x130] sm:$0xf]
  %v104 = vld [vmem:[%s1 + $0x134] sm:$0xf]
  %v105 = vld [vmem:[%s1 + $0x138] sm:$0xf]
  %v106 = vld [vmem:[%s1 + $0x13c] sm:$0xf]
  %v107 = vld [vmem:[%s1 + $0x140] sm:$0xf]
  %v108 = vld [vmem:[%s1 + $0x144] sm:$0xf]
  %v109 = vld [vmem:[%s1 + $0x148] sm:$0xf]
  %v110 = vld [vmem:[%s1 + $0x14c] sm:$0xf]
  %v111 = vld [vmem:[%s1 + $0x150] sm:$0xf]
  %v112 = vld [vmem:[%s1 + $0x154] sm:$0xf]
  %v113 = vld [vmem:[%s1 + $0x158] sm:$0xf]
  %v114 = vld [vmem:[%s1 + $0x15c] sm:$0xf]
  %v115 = vld [vmem:[%s1 + $0x160] sm:$0xf]
  %v116 = vld [vmem:[%s1 + $0x164] sm:$0xf]
  %v117 = vld [vmem:[%s1 + $0x168] sm:$0xf]
  %v118 = vld [vmem:[%s1 + $0x16c] sm:$0xf]
  %v119 = vld [vmem:[%s1 + $0x170] sm:$0xf]
  %v120 = vld [vmem:[%s1 + $0x174] sm:$0xf]
  %v121 = vld [vmem:[%s1 + $0x178] sm:$0xf]
  %v122 = vld [vmem:[%s1 + $0x17c] sm:$0xf]
  %v123 = vld [vmem:[%s1 + $0x180] sm:$0xf]
  %v124 = vld [vmem:[%s1 + $0x184] sm:$0xf]
  %v125 = vld [vmem:[%s1 + $0x188] sm:$0xf]
  %v126 = vld [vmem:[%s1 + $0x18c] sm:$0xf]
  %v127 = vld [vmem:[%s1 + $0x190] sm:$0xf]
  %v128 = vld [vmem:[%s1 + $0x194] sm:$0xf]
  %v129 = vld [vmem:[%s1 + $0x198] sm:$0xf]
  %v130 = vld [vmem:[%s1 + $0x19c] sm:$0xf]
  %v131 = vld [vmem:[%s1 + $0x1a0] sm:$0xf]
  %v132 = vld [vmem:[%s1 + $0x1a4] sm:$0xf]
  %v133 = vld [vmem:[%s1 + $0x1a8] sm:$0xf]
  %v134 = vld [vmem:[%s1 + $0x1ac] sm:$0xf]
  %v135 = vld [vmem:[%s1 + $0x1b0] sm:$0xf]
  %v136 = vld [vmem:[%s1 + $0x1b4] sm:$0xf]
  %v137 = vld [vmem:[%s1 + $0x1b8] sm:$0xf]
  %v138 = vld [vmem:[%s1 + $0x1bc] sm:$0xf]
  %v139 = vld [vmem:[%s1 + $0x1c0] sm:$0xf]
  %v140 = vld [vmem:[%s1 + $0x1c4] sm:$0xf]
  %v141 = vld [vmem:[%s1 + $0x1c8] sm:$0xf]
  %v142 = vld [vmem:[%s1 + $0x1cc] sm:$0xf]
  %v143 = vld [vmem:[%s1 + $0x1d0] sm:$0xf]
  %v144 = vld [vmem:[%s1 + $0x1d4] sm:$0xf]
  %v145 = vld [vmem:[%s1 + $0x1d8] sm:$0xf]
  %v146 = vld [vmem:[%s1 + $0x1dc] sm:$0xf]
  %v147 = vld [vmem:[%s1 + $0x1e0] sm:$0xf]
  %v148 = vld [vmem:[%s1 + $0x1e4] sm:$0xf]
  %v149 = vld [vmem:[%s1 + $0x1e8] sm:$0xf]
  %v150 = vld [vmem:[%s1 + $0x1ec] sm:$0xf]
  %v151 = vld [vmem:[%s1 + $0x1f0] sm:$0xf]
  %v152 = vld [vmem:[%s1 + $0x1f4] sm:$0xf]
  %v153 = vld [vmem:[%s1 + $0x1f8] sm:$0xf]
  %v154 = vld [vmem:[%s1 + $0x1fc] sm:$0xf]
  %v155 = vld [vmem:[%s2] sm:$0x1]
  %v157 = vlaneseq
  %v158 = vshrl.u32 %v157, 7
  %v159 = vsub.s32 0, %v158
  %v160 = vrot.slane %v155, %v159
  %v166 = vunpack.c.l.b16 %v23
  %v167 = vunpack.c.h.b16 %v23
  %v168 = vunpack.c.l.b16 %v24
  %v169 = vunpack.c.h.b16 %v24
  %v170 = vunpack.c.l.b16 %v25
  %v171 = vunpack.c.h.b16 %v25
  %v172 = vunpack.c.l.b16 %v26
  %v173 = vunpack.c.h.b16 %v26
  %v174 = vpack.c.b16 %v166, %v166
  %v175 = vpack.c.b16 %v167, %v167
  %v176 = vpack.c.b16 %v168, %v168
  %v177 = vpack.c.b16 %v169, %v169
  %v178 = vpack.c.b16 %v170, %v170
  %v179 = vpack.c.b16 %v171, %v171
  %v180 = vpack.c.b16 %v172, %v172
  %v181 = vpack.c.b16 %v173, %v173
  %v318 = vunpack.c.l.b16 %v27
  %v319 = vunpack.c.l.b16 %v28
  %v320 = vunpack.c.l.b16 %v29
  %v321 = vunpack.c.l.b16 %v30
  %v322 = vunpack.c.l.b16 %v31
  %v323 = vunpack.c.l.b16 %v32
  %v324 = vunpack.c.l.b16 %v33
  %v325 = vunpack.c.l.b16 %v34
  %v326 = vunpack.c.l.b16 %v35
  %v327 = vunpack.c.l.b16 %v36
  %v328 = vunpack.c.l.b16 %v37
  %v329 = vunpack.c.l.b16 %v38
  %v330 = vunpack.c.l.b16 %v39
  %v331 = vunpack.c.l.b16 %v40
  %v332 = vunpack.c.l.b16 %v41
  %v333 = vunpack.c.l.b16 %v42
  %v334 = vunpack.c.l.b16 %v43
  %v335 = vunpack.c.l.b16 %v44
  %v336 = vunpack.c.l.b16 %v45
  %v337 = vunpack.c.l.b16 %v46
  %v338 = vunpack.c.l.b16 %v47
  %v339 = vunpack.c.l.b16 %v48
  %v340 = vunpack.c.l.b16 %v49
  %v341 = vunpack.c.l.b16 %v50
  %v342 = vunpack.c.l.b16 %v51
  %v343 = vunpack.c.l.b16 %v52
  %v344 = vunpack.c.l.b16 %v53
  %v345 = vunpack.c.l.b16 %v54
  %v346 = vunpack.c.l.b16 %v55
  %v347 = vunpack.c.l.b16 %v56
  %v348 = vunpack.c.l.b16 %v57
  %v349 = vunpack.c.l.b16 %v58
  %v350 = vunpack.c.l.b16 %v59
  %v351 = vunpack.c.l.b16 %v60
  %v352 = vunpack.c.l.b16 %v61
  %v353 = vunpack.c.l.b16 %v62
  %v354 = vunpack.c.l.b16 %v63
  %v355 = vunpack.c.l.b16 %v64
  %v356 = vunpack.c.l.b16 %v65
  %v357 = vunpack.c.l.b16 %v66
  %v358 = vunpack.c.l.b16 %v67
  %v359 = vunpack.c.l.b16 %v68
  %v360 = vunpack.c.l.b16 %v69
  %v361 = vunpack.c.l.b16 %v70
  %v362 = vunpack.c.l.b16 %v71
  %v363 = vunpack.c.l.b16 %v72
  %v364 = vunpack.c.l.b16 %v73
  %v365 = vunpack.c.l.b16 %v74
  %v366 = vunpack.c.l.b16 %v75
  %v367 = vunpack.c.l.b16 %v76
  %v368 = vunpack.c.l.b16 %v77
  %v369 = vunpack.c.l.b16 %v78
  %v370 = vunpack.c.l.b16 %v79
  %v371 = vunpack.c.l.b16 %v80
  %v372 = vunpack.c.l.b16 %v81
  %v373 = vunpack.c.l.b16 %v82
  %v374 = vunpack.c.l.b16 %v83
  %v375 = vunpack.c.l.b16 %v84
  %v376 = vunpack.c.l.b16 %v85
  %v377 = vunpack.c.l.b16 %v86
  %v378 = vunpack.c.l.b16 %v87
  %v379 = vunpack.c.l.b16 %v88
  %v380 = vunpack.c.l.b16 %v89
  %v381 = vunpack.c.l.b16 %v90
  %v382 = vunpack.c.l.b16 %v91
  %v383 = vunpack.c.l.b16 %v92
  %v384 = vunpack.c.l.b16 %v93
  %v385 = vunpack.c.l.b16 %v94
  %v386 = vunpack.c.l.b16 %v95
  %v387 = vunpack.c.l.b16 %v96
  %v388 = vunpack.c.l.b16 %v97
  %v389 = vunpack.c.l.b16 %v98
  %v390 = vunpack.c.l.b16 %v99
  %v391 = vunpack.c.l.b16 %v100
  %v392 = vunpack.c.l.b16 %v101
  %v393 = vunpack.c.l.b16 %v102
  %v394 = vunpack.c.l.b16 %v103
  %v395 = vunpack.c.l.b16 %v104
  %v396 = vunpack.c.l.b16 %v105
  %v397 = vunpack.c.l.b16 %v106
  %v398 = vunpack.c.l.b16 %v107
  %v399 = vunpack.c.l.b16 %v108
  %v400 = vunpack.c.l.b16 %v109
  %v401 = vunpack.c.l.b16 %v110
  %v402 = vunpack.c.l.b16 %v111
  %v403 = vunpack.c.l.b16 %v112
  %v404 = vunpack.c.l.b16 %v113
  %v405 = vunpack.c.l.b16 %v114
  %v406 = vunpack.c.l.b16 %v115
  %v407 = vunpack.c.l.b16 %v116
  %v408 = vunpack.c.l.b16 %v117
  %v409 = vunpack.c.l.b16 %v118
  %v410 = vunpack.c.l.b16 %v119
  %v411 = vunpack.c.l.b16 %v120
  %v412 = vunpack.c.l.b16 %v121
  %v413 = vunpack.c.l.b16 %v122
  %v414 = vunpack.c.l.b16 %v123
  %v415 = vunpack.c.l.b16 %v124
  %v416 = vunpack.c.l.b16 %v125
  %v417 = vunpack.c.l.b16 %v126
  %v418 = vunpack.c.l.b16 %v127
  %v419 = vunpack.c.l.b16 %v128
  %v420 = vunpack.c.l.b16 %v129
  %v421 = vunpack.c.l.b16 %v130
  %v422 = vunpack.c.l.b16 %v131
  %v423 = vunpack.c.l.b16 %v132
  %v424 = vunpack.c.l.b16 %v133
  %v425 = vunpack.c.l.b16 %v134
  %v426 = vunpack.c.l.b16 %v135
  %v427 = vunpack.c.l.b16 %v136
  %v428 = vunpack.c.l.b16 %v137
  %v429 = vunpack.c.l.b16 %v138
  %v430 = vunpack.c.l.b16 %v139
  %v431 = vunpack.c.l.b16 %v140
  %v432 = vunpack.c.l.b16 %v141
  %v433 = vunpack.c.l.b16 %v142
  %v434 = vunpack.c.l.b16 %v143
  %v435 = vunpack.c.l.b16 %v144
  %v436 = vunpack.c.l.b16 %v145
  %v437 = vunpack.c.l.b16 %v146
  %v438 = vunpack.c.l.b16 %v147
  %v439 = vunpack.c.l.b16 %v148
  %v440 = vunpack.c.l.b16 %v149
  %v441 = vunpack.c.l.b16 %v150
  %v442 = vunpack.c.l.b16 %v151
  %v443 = vunpack.c.l.b16 %v152
  %v444 = vunpack.c.l.b16 %v153
  %v445 = vunpack.c.l.b16 %v154
  %v446 = vpack.c.b16 %v319, %v318
  %v447 = vpack.c.b16 %v321, %v320
  %v448 = vpack.c.b16 %v323, %v322
  %v449 = vpack.c.b16 %v325, %v324
  %v450 = vpack.c.b16 %v327, %v326
  %v451 = vpack.c.b16 %v329, %v328
  %v452 = vpack.c.b16 %v331, %v330
  %v453 = vpack.c.b16 %v333, %v332
  %v454 = vpack.c.b16 %v335, %v334
  %v455 = vpack.c.b16 %v337, %v336
  %v456 = vpack.c.b16 %v339, %v338
  %v457 = vpack.c.b16 %v341, %v340
  %v458 = vpack.c.b16 %v343, %v342
  %v459 = vpack.c.b16 %v345, %v344
  %v460 = vpack.c.b16 %v347, %v346
  %v461 = vpack.c.b16 %v349, %v348
  %v462 = vpack.c.b16 %v351, %v350
  %v463 = vpack.c.b16 %v353, %v352
  %v464 = vpack.c.b16 %v355, %v354
  %v465 = vpack.c.b16 %v357, %v356
  %v466 = vpack.c.b16 %v359, %v358
  %v467 = vpack.c.b16 %v361, %v360
  %v468 = vpack.c.b16 %v363, %v362
  %v469 = vpack.c.b16 %v365, %v364
  %v470 = vpack.c.b16 %v367, %v366
  %v471 = vpack.c.b16 %v369, %v368
  %v472 = vpack.c.b16 %v371, %v370
  %v473 = vpack.c.b16 %v373, %v372
  %v474 = vpack.c.b16 %v375, %v374
  %v475 = vpack.c.b16 %v377, %v376
  %v476 = vpack.c.b16 %v379, %v378
  %v477 = vpack.c.b16 %v381, %v380
  %v478 = vpack.c.b16 %v383, %v382
  %v479 = vpack.c.b16 %v385, %v384
  %v480 = vpack.c.b16 %v387, %v386
  %v481 = vpack.c.b16 %v389, %v388
  %v482 = vpack.c.b16 %v391, %v390
  %v483 = vpack.c.b16 %v393, %v392
  %v484 = vpack.c.b16 %v395, %v394
  %v485 = vpack.c.b16 %v397, %v396
  %v486 = vpack.c.b16 %v399, %v398
  %v487 = vpack.c.b16 %v401, %v400
  %v488 = vpack.c.b16 %v403, %v402
  %v489 = vpack.c.b16 %v405, %v404
  %v490 = vpack.c.b16 %v407, %v406
  %v491 = vpack.c.b16 %v409, %v408
  %v492 = vpack.c.b16 %v411, %v410
  %v493 = vpack.c.b16 %v413, %v412
  %v494 = vpack.c.b16 %v415, %v414
  %v495 = vpack.c.b16 %v417, %v416
  %v496 = vpack.c.b16 %v419, %v418
  %v497 = vpack.c.b16 %v421, %v420
  %v498 = vpack.c.b16 %v423, %v422
  %v499 = vpack.c.b16 %v425, %v424
  %v500 = vpack.c.b16 %v427, %v426
  %v501 = vpack.c.b16 %v429, %v428
  %v502 = vpack.c.b16 %v431, %v430
  %v503 = vpack.c.b16 %v433, %v432
  %v504 = vpack.c.b16 %v435, %v434
  %v505 = vpack.c.b16 %v437, %v436
  %v506 = vpack.c.b16 %v439, %v438
  %v507 = vpack.c.b16 %v441, %v440
  %v508 = vpack.c.b16 %v443, %v442
  %v509 = vpack.c.b16 %v445, %v444
  %574 = vmatprep.subr.bf16.mxu0 0
  %575 = vmatpush1.bf16.msra.mxu0 %v446
  %576 = vmatprep.subr.bf16.mxu0 0
  %577 = vmatpush1.bf16.msra.mxu0 %v447
  %578 = vmatprep.subr.bf16.mxu0 0
  %579 = vmatpush1.bf16.msra.mxu0 %v448
  %580 = vmatprep.subr.bf16.mxu0 0
  %581 = vmatpush1.bf16.msra.mxu0 %v449
  %582 = vmatprep.subr.bf16.mxu0 0
  %583 = vmatpush1.bf16.msra.mxu0 %v450
  %584 = vmatprep.subr.bf16.mxu0 0
  %585 = vmatpush1.bf16.msra.mxu0 %v451
  %586 = vmatprep.subr.bf16.mxu0 0
  %587 = vmatpush1.bf16.msra.mxu0 %v452
  %588 = vmatprep.subr.bf16.mxu0 0
  %589 = vmatpush1.bf16.msra.mxu0 %v453
  %590 = vmatprep.subr.bf16.mxu0 0
  %591 = vmatpush1.bf16.msra.mxu0 %v454
  %592 = vmatprep.subr.bf16.mxu0 0
  %593 = vmatpush1.bf16.msra.mxu0 %v455
  %594 = vmatprep.subr.bf16.mxu0 0
  %595 = vmatpush1.bf16.msra.mxu0 %v456
  %596 = vmatprep.subr.bf16.mxu0 0
  %597 = vmatpush1.bf16.msra.mxu0 %v457
  %598 = vmatprep.subr.bf16.mxu0 0
  %599 = vmatpush1.bf16.msra.mxu0 %v458
  %600 = vmatprep.subr.bf16.mxu0 0
  %601 = vmatpush1.bf16.msra.mxu0 %v459
  %602 = vmatprep.subr.bf16.mxu0 0
  %603 = vmatpush1.bf16.msra.mxu0 %v460
  %604 = vmatprep.subr.bf16.mxu0 0
  %605 = vmatpush1.bf16.msra.mxu0 %v461
  %606 = vmatprep.mubr.bf16.mxu0 %v175
  %607 = vmatmul.mubr.bf16.gmra.mrb[0].mxu0 %v174
  %v608 = vpop.f32.mrb[0].mxu0
  %v609 = vadd.f32 %v160, %v608
  %v610 = vpop.f32.mrb[0].mxu0
  %v611 = vpop.f32.mrb[0].mxu0
  %v612 = vpop.f32.mrb[0].mxu0
  %613 = vdwg.mxu0
  %614 = vmatprep.subr.bf16.mxu0 0
  %615 = vmatpush1.bf16.msra.mxu0 %v462
  %616 = vmatprep.subr.bf16.mxu0 0
  %617 = vmatpush1.bf16.msra.mxu0 %v463
  %618 = vmatprep.subr.bf16.mxu0 0
  %619 = vmatpush1.bf16.msra.mxu0 %v464
  %620 = vmatprep.subr.bf16.mxu0 0
  %621 = vmatpush1.bf16.msra.mxu0 %v465
  %622 = vmatprep.subr.bf16.mxu0 0
  %623 = vmatpush1.bf16.msra.mxu0 %v466
  %624 = vmatprep.subr.bf16.mxu0 0
  %625 = vmatpush1.bf16.msra.mxu0 %v467
  %626 = vmatprep.subr.bf16.mxu0 0
  %627 = vmatpush1.bf16.msra.mxu0 %v468
  %628 = vmatprep.subr.bf16.mxu0 0
  %629 = vmatpush1.bf16.msra.mxu0 %v469
  %630 = vmatprep.subr.bf16.mxu0 0
  %631 = vmatpush1.bf16.msra.mxu0 %v470
  %632 = vmatprep.subr.bf16.mxu0 0
  %633 = vmatpush1.bf16.msra.mxu0 %v471
  %634 = vmatprep.subr.bf16.mxu0 0
  %635 = vmatpush1.bf16.msra.mxu0 %v472
  %636 = vmatprep.subr.bf16.mxu0 0
  %637 = vmatpush1.bf16.msra.mxu0 %v473
  %638 = vmatprep.subr.bf16.mxu0 0
  %639 = vmatpush1.bf16.msra.mxu0 %v474
  %640 = vmatprep.subr.bf16.mxu0 0
  %641 = vmatpush1.bf16.msra.mxu0 %v475
  %642 = vmatprep.subr.bf16.mxu0 0
  %643 = vmatpush1.bf16.msra.mxu0 %v476
  %644 = vmatprep.subr.bf16.mxu0 0
  %645 = vmatpush1.bf16.msra.mxu0 %v477
  %646 = vmatprep.mubr.bf16.mxu0 %v177
  %647 = vmatmul.mubr.bf16.gmra.mrb[0].mxu0 %v176
  %v648 = vpop.f32.mrb[0].mxu0
  %v649 = vadd.f32 %v609, %v648
  %v650 = vpop.f32.mrb[0].mxu0
  %v651 = vpop.f32.mrb[0].mxu0
  %v652 = vpop.f32.mrb[0].mxu0
  %653 = vdwg.mxu0
  %654 = vmatprep.subr.bf16.mxu0 0
  %655 = vmatpush1.bf16.msra.mxu0 %v478
  %656 = vmatprep.subr.bf16.mxu0 0
  %657 = vmatpush1.bf16.msra.mxu0 %v479
  %658 = vmatprep.subr.bf16.mxu0 0
  %659 = vmatpush1.bf16.msra.mxu0 %v480
  %660 = vmatprep.subr.bf16.mxu0 0
  %661 = vmatpush1.bf16.msra.mxu0 %v481
  %662 = vmatprep.subr.bf16.mxu0 0
  %663 = vmatpush1.bf16.msra.mxu0 %v482
  %664 = vmatprep.subr.bf16.mxu0 0
  %665 = vmatpush1.bf16.msra.mxu0 %v483
  %666 = vmatprep.subr.bf16.mxu0 0
  %667 = vmatpush1.bf16.msra.mxu0 %v484
  %668 = vmatprep.subr.bf16.mxu0 0
  %669 = vmatpush1.bf16.msra.mxu0 %v485
  %670 = vmatprep.subr.bf16.mxu0 0
  %671 = vmatpush1.bf16.msra.mxu0 %v486
  %672 = vmatprep.subr.bf16.mxu0 0
  %673 = vmatpush1.bf16.msra.mxu0 %v487
  %674 = vmatprep.subr.bf16.mxu0 0
  %675 = vmatpush1.bf16.msra.mxu0 %v488
  %676 = vmatprep.subr.bf16.mxu0 0
  %677 = vmatpush1.bf16.msra.mxu0 %v489
  %678 = vmatprep.subr.bf16.mxu0 0
  %679 = vmatpush1.bf16.msra.mxu0 %v490
  %680 = vmatprep.subr.bf16.mxu0 0
  %681 = vmatpush1.bf16.msra.mxu0 %v491
  %682 = vmatprep.subr.bf16.mxu0 0
  %683 = vmatpush1.bf16.msra.mxu0 %v492
  %684 = vmatprep.subr.bf16.mxu0 0
  %685 = vmatpush1.bf16.msra.mxu0 %v493
  %686 = vmatprep.mubr.bf16.mxu0 %v179
  %687 = vmatmul.mubr.bf16.gmra.mrb[0].mxu0 %v178
  %v688 = vpop.f32.mrb[0].mxu0
  %v689 = vadd.f32 %v649, %v688
  %v690 = vpop.f32.mrb[0].mxu0
  %v691 = vpop.f32.mrb[0].mxu0
  %v692 = vpop.f32.mrb[0].mxu0
  %693 = vdwg.mxu0
  %694 = vmatprep.subr.bf16.mxu0 0
  %695 = vmatpush1.bf16.msra.mxu0 %v494
  %696 = vmatprep.subr.bf16.mxu0 0
  %697 = vmatpush1.bf16.msra.mxu0 %v495
  %698 = vmatprep.subr.bf16.mxu0 0
  %699 = vmatpush1.bf16.msra.mxu0 %v496
  %700 = vmatprep.subr.bf16.mxu0 0
  %701 = vmatpush1.bf16.msra.mxu0 %v497
  %702 = vmatprep.subr.bf16.mxu0 0
  %703 = vmatpush1.bf16.msra.mxu0 %v498
  %704 = vmatprep.subr.bf16.mxu0 0
  %705 = vmatpush1.bf16.msra.mxu0 %v499
  %706 = vmatprep.subr.bf16.mxu0 0
  %707 = vmatpush1.bf16.msra.mxu0 %v500
  %708 = vmatprep.subr.bf16.mxu0 0
  %709 = vmatpush1.bf16.msra.mxu0 %v501
  %710 = vmatprep.subr.bf16.mxu0 0
  %711 = vmatpush1.bf16.msra.mxu0 %v502
  %712 = vmatprep.subr.bf16.mxu0 0
  %713 = vmatpush1.bf16.msra.mxu0 %v503
  %714 = vmatprep.subr.bf16.mxu0 0
  %715 = vmatpush1.bf16.msra.mxu0 %v504
  %716 = vmatprep.subr.bf16.mxu0 0
  %717 = vmatpush1.bf16.msra.mxu0 %v505
  %718 = vmatprep.subr.bf16.mxu0 0
  %719 = vmatpush1.bf16.msra.mxu0 %v506
  %720 = vmatprep.subr.bf16.mxu0 0
  %721 = vmatpush1.bf16.msra.mxu0 %v507
  %722 = vmatprep.subr.bf16.mxu0 0
  %723 = vmatpush1.bf16.msra.mxu0 %v508
  %724 = vmatprep.subr.bf16.mxu0 0
  %725 = vmatpush1.bf16.msra.mxu0 %v509
  %726 = vmatprep.mubr.bf16.mxu0 %v181
  %727 = vmatmul.mubr.bf16.gmra.mrb[0].mxu0 %v180
  %v728 = vpop.f32.mrb[0].mxu0
  %v729 = vadd.f32 %v689, %v728
  %v730 = vpop.f32.mrb[0].mxu0
  %v731 = vpop.f32.mrb[0].mxu0
  %v732 = vpop.f32.mrb[0].mxu0
  %733 = vdwg.mxu0
  %vm734 = vcmp.ge.f32.partialorder %v729, 0.0
  %v735 = vmul.f32 %v729, 0.1
  %v736 = vsel %vm734, %v729, %v735
  %737 = vst [vmem:[%s5] sm:$0xff] %v736
  %v738 = vpack.c.bf16 %v736, %v736
  %v739 = vld [vmem:[%s3] sm:$0xff]
  %v740 = vld [vmem:[%s3 + $0x8] sm:$0xff]
  %v741 = vld [vmem:[%s3 + $0x10] sm:$0xff]
  %v742 = vld [vmem:[%s3 + $0x18] sm:$0xff]
  %v743 = vld [vmem:[%s3 + $0x20] sm:$0xff]
  %v744 = vld [vmem:[%s3 + $0x28] sm:$0xff]
  %v745 = vld [vmem:[%s3 + $0x30] sm:$0xff]
  %v746 = vld [vmem:[%s3 + $0x38] sm:$0xff]
  %v747 = vld [vmem:[%s3 + $0x40] sm:$0xff]
  %v748 = vld [vmem:[%s3 + $0x48] sm:$0xff]
  %v749 = vld [vmem:[%s3 + $0x50] sm:$0xff]
  %v750 = vld [vmem:[%s3 + $0x58] sm:$0xff]
  %v751 = vld [vmem:[%s3 + $0x60] sm:$0xff]
  %v752 = vld [vmem:[%s3 + $0x68] sm:$0xff]
  %v753 = vld [vmem:[%s3 + $0x70] sm:$0xff]
  %v754 = vld [vmem:[%s3 + $0x78] sm:$0xff]
  %v755 = vld [vmem:[%s3 + $0x80] sm:$0xff]
  %v756 = vld [vmem:[%s3 + $0x88] sm:$0xff]
  %v757 = vld [vmem:[%s3 + $0x90] sm:$0xff]
  %v758 = vld [vmem:[%s3 + $0x98] sm:$0xff]
  %v759 = vld [vmem:[%s3 + $0xa0] sm:$0xff]
  %v760 = vld [vmem:[%s3 + $0xa8] sm:$0xff]
  %v761 = vld [vmem:[%s3 + $0xb0] sm:$0xff]
  %v762 = vld [vmem:[%s3 + $0xb8] sm:$0xff]
  %v763 = vld [vmem:[%s3 + $0xc0] sm:$0xff]
  %v764 = vld [vmem:[%s3 + $0xc8] sm:$0xff]
  %v765 = vld [vmem:[%s3 + $0xd0] sm:$0xff]
  %v766 = vld [vmem:[%s3 + $0xd8] sm:$0xff]
  %v767 = vld [vmem:[%s3 + $0xe0] sm:$0xff]
  %v768 = vld [vmem:[%s3 + $0xe8] sm:$0xff]
  %v769 = vld [vmem:[%s3 + $0xf0] sm:$0xff]
  %v770 = vld [vmem:[%s3 + $0xf8] sm:$0xff]
  %v771 = vld [vmem:[%s3 + $0x100] sm:$0xff]
  %v772 = vld [vmem:[%s3 + $0x108] sm:$0xff]
  %v773 = vld [vmem:[%s3 + $0x110] sm:$0xff]
  %v774 = vld [vmem:[%s3 + $0x118] sm:$0xff]
  %v775 = vld [vmem:[%s3 + $0x120] sm:$0xff]
  %v776 = vld [vmem:[%s3 + $0x128] sm:$0xff]
  %v777 = vld [vmem:[%s3 + $0x130] sm:$0xff]
  %v778 = vld [vmem:[%s3 + $0x138] sm:$0xff]
  %v779 = vld [vmem:[%s3 + $0x140] sm:$0xff]
  %v780 = vld [vmem:[%s3 + $0x148] sm:$0xff]
  %v781 = vld [vmem:[%s3 + $0x150] sm:$0xff]
  %v782 = vld [vmem:[%s3 + $0x158] sm:$0xff]
  %v783 = vld [vmem:[%s3 + $0x160] sm:$0xff]
  %v784 = vld [vmem:[%s3 + $0x168] sm:$0xff]
  %v785 = vld [vmem:[%s3 + $0x170] sm:$0xff]
  %v786 = vld [vmem:[%s3 + $0x178] sm:$0xff]
  %v787 = vld [vmem:[%s3 + $0x180] sm:$0xff]
  %v788 = vld [vmem:[%s3 + $0x188] sm:$0xff]
  %v789 = vld [vmem:[%s3 + $0x190] sm:$0xff]
  %v790 = vld [vmem:[%s3 + $0x198] sm:$0xff]
  %v791 = vld [vmem:[%s3 + $0x1a0] sm:$0xff]
  %v792 = vld [vmem:[%s3 + $0x1a8] sm:$0xff]
  %v793 = vld [vmem:[%s3 + $0x1b0] sm:$0xff]
  %v794 = vld [vmem:[%s3 + $0x1b8] sm:$0xff]
  %v795 = vld [vmem:[%s3 + $0x1c0] sm:$0xff]
  %v796 = vld [vmem:[%s3 + $0x1c8] sm:$0xff]
  %v797 = vld [vmem:[%s3 + $0x1d0] sm:$0xff]
  %v798 = vld [vmem:[%s3 + $0x1d8] sm:$0xff]
  %v799 = vld [vmem:[%s3 + $0x1e0] sm:$0xff]
  %v800 = vld [vmem:[%s3 + $0x1e8] sm:$0xff]
  %v801 = vld [vmem:[%s3 + $0x1f0] sm:$0xff]
  %v802 = vld [vmem:[%s3 + $0x1f8] sm:$0xff]
  %v803 = vld [vmem:[%s4] sm:$0xff]
  %v805 = vlaneseq
  %v806 = vshrl.u32 %v805, 7
  %v807 = vsub.s32 0, %v806
  %v808 = vrot.slane %v803, %v807
  %v809 = vlaneseq
  %v810 = vshrl.u32 %v809, 7
  %v811 = vsub.s32 1, %v810
  %v812 = vrot.slane %v803, %v811
  %v813 = vlaneseq
  %v814 = vshrl.u32 %v813, 7
  %v815 = vsub.s32 2, %v814
  %v816 = vrot.slane %v803, %v815
  %v817 = vlaneseq
  %v818 = vshrl.u32 %v817, 7
  %v819 = vsub.s32 3, %v818
  %v820 = vrot.slane %v803, %v819
  %v821 = vlaneseq
  %v822 = vshrl.u32 %v821, 7
  %v823 = vsub.s32 4, %v822
  %v824 = vrot.slane %v803, %v823
  %v825 = vlaneseq
  %v826 = vshrl.u32 %v825, 7
  %v827 = vsub.s32 5, %v826
  %v828 = vrot.slane %v803, %v827
  %v829 = vlaneseq
  %v830 = vshrl.u32 %v829, 7
  %v831 = vsub.s32 6, %v830
  %v832 = vrot.slane %v803, %v831
  %v833 = vlaneseq
  %v834 = vshrl.u32 %v833, 7
  %v835 = vsub.s32 7, %v834
  %v836 = vrot.slane %v803, %v835
  %v909 = vunpack.c.l.b16 %v739
  %v910 = vunpack.c.h.b16 %v739
  %v911 = vunpack.c.l.b16 %v740
  %v912 = vunpack.c.h.b16 %v740
  %v913 = vunpack.c.l.b16 %v741
  %v914 = vunpack.c.h.b16 %v741
  %v915 = vunpack.c.l.b16 %v742
  %v916 = vunpack.c.h.b16 %v742
  %v917 = vunpack.c.l.b16 %v743
  %v918 = vunpack.c.h.b16 %v743
  %v919 = vunpack.c.l.b16 %v744
  %v920 = vunpack.c.h.b16 %v744
  %v921 = vunpack.c.l.b16 %v745
  %v922 = vunpack.c.h.b16 %v745
  %v923 = vunpack.c.l.b16 %v746
  %v924 = vunpack.c.h.b16 %v746
  %v925 = vunpack.c.l.b16 %v747
  %v926 = vunpack.c.h.b16 %v747
  %v927 = vunpack.c.l.b16 %v748
  %v928 = vunpack.c.h.b16 %v748
  %v929 = vunpack.c.l.b16 %v749
  %v930 = vunpack.c.h.b16 %v749
  %v931 = vunpack.c.l.b16 %v750
  %v932 = vunpack.c.h.b16 %v750
  %v933 = vunpack.c.l.b16 %v751
  %v934 = vunpack.c.h.b16 %v751
  %v935 = vunpack.c.l.b16 %v752
  %v936 = vunpack.c.h.b16 %v752
  %v937 = vunpack.c.l.b16 %v753
  %v938 = vunpack.c.h.b16 %v753
  %v939 = vunpack.c.l.b16 %v754
  %v940 = vunpack.c.h.b16 %v754
  %v941 = vunpack.c.l.b16 %v755
  %v942 = vunpack.c.h.b16 %v755
  %v943 = vunpack.c.l.b16 %v756
  %v944 = vunpack.c.h.b16 %v756
  %v945 = vunpack.c.l.b16 %v757
  %v946 = vunpack.c.h.b16 %v757
  %v947 = vunpack.c.l.b16 %v758
  %v948 = vunpack.c.h.b16 %v758
  %v949 = vunpack.c.l.b16 %v759
  %v950 = vunpack.c.h.b16 %v759
  %v951 = vunpack.c.l.b16 %v760
  %v952 = vunpack.c.h.b16 %v760
  %v953 = vunpack.c.l.b16 %v761
  %v954 = vunpack.c.h.b16 %v761
  %v955 = vunpack.c.l.b16 %v762
  %v956 = vunpack.c.h.b16 %v762
  %v957 = vunpack.c.l.b16 %v763
  %v958 = vunpack.c.h.b16 %v763
  %v959 = vunpack.c.l.b16 %v764
  %v960 = vunpack.c.h.b16 %v764
  %v961 = vunpack.c.l.b16 %v765
  %v962 = vunpack.c.h.b16 %v765
  %v963 = vunpack.c.l.b16 %v766
  %v964 = vunpack.c.h.b16 %v766
  %v965 = vunpack.c.l.b16 %v767
  %v966 = vunpack.c.h.b16 %v767
  %v967 = vunpack.c.l.b16 %v768
  %v968 = vunpack.c.h.b16 %v768
  %v969 = vunpack.c.l.b16 %v769
  %v970 = vunpack.c.h.b16 %v769
  %v971 = vunpack.c.l.b16 %v770
  %v972 = vunpack.c.h.b16 %v770
  %v973 = vunpack.c.l.b16 %v771
  %v974 = vunpack.c.h.b16 %v771
  %v975 = vunpack.c.l.b16 %v772
  %v976 = vunpack.c.h.b16 %v772
  %v977 = vunpack.c.l.b16 %v773
  %v978 = vunpack.c.h.b16 %v773
  %v979 = vunpack.c.l.b16 %v774
  %v980 = vunpack.c.h.b16 %v774
  %v981 = vunpack.c.l.b16 %v775
  %v982 = vunpack.c.h.b16 %v775
  %v983 = vunpack.c.l.b16 %v776
  %v984 = vunpack.c.h.b16 %v776
  %v985 = vunpack.c.l.b16 %v777
  %v986 = vunpack.c.h.b16 %v777
  %v987 = vunpack.c.l.b16 %v778
  %v988 = vunpack.c.h.b16 %v778
  %v989 = vunpack.c.l.b16 %v779
  %v990 = vunpack.c.h.b16 %v779
  %v991 = vunpack.c.l.b16 %v780
  %v992 = vunpack.c.h.b16 %v780
  %v993 = vunpack.c.l.b16 %v781
  %v994 = vunpack.c.h.b16 %v781
  %v995 = vunpack.c.l.b16 %v782
  %v996 = vunpack.c.h.b16 %v782
  %v997 = vunpack.c.l.b16 %v783
  %v998 = vunpack.c.h.b16 %v783
  %v999 = vunpack.c.l.b16 %v784
  %v1000 = vunpack.c.h.b16 %v784
  %v1001 = vunpack.c.l.b16 %v785
  %v1002 = vunpack.c.h.b16 %v785
  %v1003 = vunpack.c.l.b16 %v786
  %v1004 = vunpack.c.h.b16 %v786
  %v1005 = vunpack.c.l.b16 %v787
  %v1006 = vunpack.c.h.b16 %v787
  %v1007 = vunpack.c.l.b16 %v788
  %v1008 = vunpack.c.h.b16 %v788
  %v1009 = vunpack.c.l.b16 %v789
  %v1010 = vunpack.c.h.b16 %v789
  %v1011 = vunpack.c.l.b16 %v790
  %v1012 = vunpack.c.h.b16 %v790
  %v1013 = vunpack.c.l.b16 %v791
  %v1014 = vunpack.c.h.b16 %v791
  %v1015 = vunpack.c.l.b16 %v792
  %v1016 = vunpack.c.h.b16 %v792
  %v1017 = vunpack.c.l.b16 %v793
  %v1018 = vunpack.c.h.b16 %v793
  %v1019 = vunpack.c.l.b16 %v794
  %v1020 = vunpack.c.h.b16 %v794
  %v1021 = vunpack.c.l.b16 %v795
  %v1022 = vunpack.c.h.b16 %v795
  %v1023 = vunpack.c.l.b16 %v796
  %v1024 = vunpack.c.h.b16 %v796
  %v1025 = vunpack.c.l.b16 %v797
  %v1026 = vunpack.c.h.b16 %v797
  %v1027 = vunpack.c.l.b16 %v798
  %v1028 = vunpack.c.h.b16 %v798
  %v1029 = vunpack.c.l.b16 %v799
  %v1030 = vunpack.c.h.b16 %v799
  %v1031 = vunpack.c.l.b16 %v800
  %v1032 = vunpack.c.h.b16 %v800
  %v1033 = vunpack.c.l.b16 %v801
  %v1034 = vunpack.c.h.b16 %v801
  %v1035 = vunpack.c.l.b16 %v802
  %v1036 = vunpack.c.h.b16 %v802
  %v1037 = vpack.c.b16 %v917, %v909
  %v1038 = vpack.c.b16 %v918, %v910
  %v1039 = vpack.c.b16 %v919, %v911
  %v1040 = vpack.c.b16 %v920, %v912
  %v1041 = vpack.c.b16 %v921, %v913
  %v1042 = vpack.c.b16 %v922, %v914
  %v1043 = vpack.c.b16 %v923, %v915
  %v1044 = vpack.c.b16 %v924, %v916
  %v1045 = vpack.c.b16 %v933, %v925
  %v1046 = vpack.c.b16 %v934, %v926
  %v1047 = vpack.c.b16 %v935, %v927
  %v1048 = vpack.c.b16 %v936, %v928
  %v1049 = vpack.c.b16 %v937, %v929
  %v1050 = vpack.c.b16 %v938, %v930
  %v1051 = vpack.c.b16 %v939, %v931
  %v1052 = vpack.c.b16 %v940, %v932
  %v1053 = vpack.c.b16 %v949, %v941
  %v1054 = vpack.c.b16 %v950, %v942
  %v1055 = vpack.c.b16 %v951, %v943
  %v1056 = vpack.c.b16 %v952, %v944
  %v1057 = vpack.c.b16 %v953, %v945
  %v1058 = vpack.c.b16 %v954, %v946
  %v1059 = vpack.c.b16 %v955, %v947
  %v1060 = vpack.c.b16 %v956, %v948
  %v1061 = vpack.c.b16 %v965, %v957
  %v1062 = vpack.c.b16 %v966, %v958
  %v1063 = vpack.c.b16 %v967, %v959
  %v1064 = vpack.c.b16 %v968, %v960
  %v1065 = vpack.c.b16 %v969, %v961
  %v1066 = vpack.c.b16 %v970, %v962
  %v1067 = vpack.c.b16 %v971, %v963
  %v1068 = vpack.c.b16 %v972, %v964
  %v1069 = vpack.c.b16 %v981, %v973
  %v1070 = vpack.c.b16 %v982, %v974
  %v1071 = vpack.c.b16 %v983, %v975
  %v1072 = vpack.c.b16 %v984, %v976
  %v1073 = vpack.c.b16 %v985, %v977
  %v1074 = vpack.c.b16 %v986, %v978
  %v1075 = vpack.c.b16 %v987, %v979
  %v1076 = vpack.c.b16 %v988, %v980
  %v1077 = vpack.c.b16 %v997, %v989
  %v1078 = vpack.c.b16 %v998, %v990
  %v1079 = vpack.c.b16 %v999, %v991
  %v1080 = vpack.c.b16 %v1000, %v992
  %v1081 = vpack.c.b16 %v1001, %v993
  %v1082 = vpack.c.b16 %v1002, %v994
  %v1083 = vpack.c.b16 %v1003, %v995
  %v1084 = vpack.c.b16 %v1004, %v996
  %v1085 = vpack.c.b16 %v1013, %v1005
  %v1086 = vpack.c.b16 %v1014, %v1006
  %v1087 = vpack.c.b16 %v1015, %v1007
  %v1088 = vpack.c.b16 %v1016, %v1008
  %v1089 = vpack.c.b16 %v1017, %v1009
  %v1090 = vpack.c.b16 %v1018, %v1010
  %v1091 = vpack.c.b16 %v1019, %v1011
  %v1092 = vpack.c.b16 %v1020, %v1012
  %v1093 = vpack.c.b16 %v1029, %v1021
  %v1094 = vpack.c.b16 %v1030, %v1022
  %v1095 = vpack.c.b16 %v1031, %v1023
  %v1096 = vpack.c.b16 %v1032, %v1024
  %v1097 = vpack.c.b16 %v1033, %v1025
  %v1098 = vpack.c.b16 %v1034, %v1026
  %v1099 = vpack.c.b16 %v1035, %v1027
  %v1100 = vpack.c.b16 %v1036, %v1028
  %1165 = vmatprep.subr.bf16.mxu0 %v1038
  %1166 = vmatpush1.bf16.msra.mxu0 %v1037
  %1167 = vmatprep.subr.bf16.mxu0 %v1046
  %1168 = vmatpush1.bf16.msra.mxu0 %v1045
  %1169 = vmatprep.subr.bf16.mxu0 %v1054
  %1170 = vmatpush1.bf16.msra.mxu0 %v1053
  %1171 = vmatprep.subr.bf16.mxu0 %v1062
  %1172 = vmatpush1.bf16.msra.mxu0 %v1061
  %1173 = vmatprep.subr.bf16.mxu0 %v1070
  %1174 = vmatpush1.bf16.msra.mxu0 %v1069
  %1175 = vmatprep.subr.bf16.mxu0 %v1078
  %1176 = vmatpush1.bf16.msra.mxu0 %v1077
  %1177 = vmatprep.subr.bf16.mxu0 %v1086
  %1178 = vmatpush1.bf16.msra.mxu0 %v1085
  %1179 = vmatprep.subr.bf16.mxu0 %v1094
  %1180 = vmatpush1.bf16.msra.mxu0 %v1093
  %1181 = vmatprep.subr.bf16.mxu0 0
  %1182 = vmatpush1.bf16.msra.mxu0 0
  %1183 = vmatprep.subr.bf16.mxu0 0
  %1184 = vmatpush1.bf16.msra.mxu0 0
  %1185 = vmatprep.subr.bf16.mxu0 0
  %1186 = vmatpush1.bf16.msra.mxu0 0
  %1187 = vmatprep.subr.bf16.mxu0 0
  %1188 = vmatpush1.bf16.msra.mxu0 0
  %1189 = vmatprep.subr.bf16.mxu0 0
  %1190 = vmatpush1.bf16.msra.mxu0 0
  %1191 = vmatprep.subr.bf16.mxu0 0
  %1192 = vmatpush1.bf16.msra.mxu0 0
  %1193 = vmatprep.subr.bf16.mxu0 0
  %1194 = vmatpush1.bf16.msra.mxu0 0
  %1195 = vmatprep.subr.bf16.mxu0 0
  %1196 = vmatpush1.bf16.msra.mxu0 0
  %1197 = vmatprep.mubr.bf16.mxu0 0
  %1198 = vmatmul.mubr.bf16.gmra.mrb[0].mxu0 %v738
  %v1199 = vpop.f32.mrb[0].mxu0
  %v1200 = vadd.f32 %v808, %v1199
  %v1201 = vpop.f32.mrb[0].mxu0
  %v1202 = vadd.f32 %v812, %v1201
  %v1203 = vpop.f32.mrb[0].mxu0
  %v1204 = vpop.f32.mrb[0].mxu0
  %1205 = vdwg.mxu0
  %1206 = vmatprep.subr.bf16.mxu0 %v1040
  %1207 = vmatpush1.bf16.msra.mxu0 %v1039
  %1208 = vmatprep.subr.bf16.mxu0 %v1048
  %1209 = vmatpush1.bf16.msra.mxu0 %v1047
  %1210 = vmatprep.subr.bf16.mxu0 %v1056
  %1211 = vmatpush1.bf16.msra.mxu0 %v1055
  %1212 = vmatprep.subr.bf16.mxu0 %v1064
  %1213 = vmatpush1.bf16.msra.mxu0 %v1063
  %1214 = vmatprep.subr.bf16.mxu0 %v1072
  %1215 = vmatpush1.bf16.msra.mxu0 %v1071
  %1216 = vmatprep.subr.bf16.mxu0 %v1080
  %1217 = vmatpush1.bf16.msra.mxu0 %v1079
  %1218 = vmatprep.subr.bf16.mxu0 %v1088
  %1219 = vmatpush1.bf16.msra.mxu0 %v1087
  %1220 = vmatprep.subr.bf16.mxu0 %v1096
  %1221 = vmatpush1.bf16.msra.mxu0 %v1095
  %1222 = vmatprep.subr.bf16.mxu0 0
  %1223 = vmatpush1.bf16.msra.mxu0 0
  %1224 = vmatprep.subr.bf16.mxu0 0
  %1225 = vmatpush1.bf16.msra.mxu0 0
  %1226 = vmatprep.subr.bf16.mxu0 0
  %1227 = vmatpush1.bf16.msra.mxu0 0
  %1228 = vmatprep.subr.bf16.mxu0 0
  %1229 = vmatpush1.bf16.msra.mxu0 0
  %1230 = vmatprep.subr.bf16.mxu0 0
  %1231 = vmatpush1.bf16.msra.mxu0 0
  %1232 = vmatprep.subr.bf16.mxu0 0
  %1233 = vmatpush1.bf16.msra.mxu0 0
  %1234 = vmatprep.subr.bf16.mxu0 0
  %1235 = vmatpush1.bf16.msra.mxu0 0
  %1236 = vmatprep.subr.bf16.mxu0 0
  %1237 = vmatpush1.bf16.msra.mxu0 0
  %1238 = vmatprep.mubr.bf16.mxu0 0
  %1239 = vmatmul.mubr.bf16.gmra.mrb[0].mxu0 %v738
  %v1240 = vpop.f32.mrb[0].mxu0
  %v1241 = vadd.f32 %v816, %v1240
  %v1242 = vpop.f32.mrb[0].mxu0
  %v1243 = vadd.f32 %v820, %v1242
  %v1244 = vpop.f32.mrb[0].mxu0
  %v1245 = vpop.f32.mrb[0].mxu0
  %1246 = vdwg.mxu0
  %1247 = vmatprep.subr.bf16.mxu0 %v1042
  %1248 = vmatpush1.bf16.msra.mxu0 %v1041
  %1249 = vmatprep.subr.bf16.mxu0 %v1050
  %1250 = vmatpush1.bf16.msra.mxu0 %v1049
  %1251 = vmatprep.subr.bf16.mxu0 %v1058
  %1252 = vmatpush1.bf16.msra.mxu0 %v1057
  %1253 = vmatprep.subr.bf16.mxu0 %v1066
  %1254 = vmatpush1.bf16.msra.mxu0 %v1065
  %1255 = vmatprep.subr.bf16.mxu0 %v1074
  %1256 = vmatpush1.bf16.msra.mxu0 %v1073
  %1257 = vmatprep.subr.bf16.mxu0 %v1082
  %1258 = vmatpush1.bf16.msra.mxu0 %v1081
  %1259 = vmatprep.subr.bf16.mxu0 %v1090
  %1260 = vmatpush1.bf16.msra.mxu0 %v1089
  %1261 = vmatprep.subr.bf16.mxu0 %v1098
  %1262 = vmatpush1.bf16.msra.mxu0 %v1097
  %1263 = vmatprep.subr.bf16.mxu0 0
  %1264 = vmatpush1.bf16.msra.mxu0 0
  %1265 = vmatprep.subr.bf16.mxu0 0
  %1266 = vmatpush1.bf16.msra.mxu0 0
  %1267 = vmatprep.subr.bf16.mxu0 0
  %1268 = vmatpush1.bf16.msra.mxu0 0
  %1269 = vmatprep.subr.bf16.mxu0 0
  %1270 = vmatpush1.bf16.msra.mxu0 0
  %1271 = vmatprep.subr.bf16.mxu0 0
  %1272 = vmatpush1.bf16.msra.mxu0 0
  %1273 = vmatprep.subr.bf16.mxu0 0
  %1274 = vmatpush1.bf16.msra.mxu0 0
  %1275 = vmatprep.subr.bf16.mxu0 0
  %1276 = vmatpush1.bf16.msra.mxu0 0
  %1277 = vmatprep.subr.bf16.mxu0 0
  %1278 = vmatpush1.bf16.msra.mxu0 0
  %1279 = vmatprep.mubr.bf16.mxu0 0
  %1280 = vmatmul.mubr.bf16.gmra.mrb[0].mxu0 %v738
  %v1281 = vpop.f32.mrb[0].mxu0
  %v1282 = vadd.f32 %v824, %v1281
  %v1283 = vpop.f32.mrb[0].mxu0
  %v1284 = vadd.f32 %v828, %v1283
  %v1285 = vpop.f32.mrb[0].mxu0
  %v1286 = vpop.f32.mrb[0].mxu0
  %1287 = vdwg.mxu0
  %1288 = vmatprep.subr.bf16.mxu0 %v1044
  %1289 = vmatpush1.bf16.msra.mxu0 %v1043
  %1290 = vmatprep.subr.bf16.mxu0 %v1052
  %1291 = vmatpush1.bf16.msra.mxu0 %v1051
  %1292 = vmatprep.subr.bf16.mxu0 %v1060
  %1293 = vmatpush1.bf16.msra.mxu0 %v1059
  %1294 = vmatprep.subr.bf16.mxu0 %v1068
  %1295 = vmatpush1.bf16.msra.mxu0 %v1067
  %1296 = vmatprep.subr.bf16.mxu0 %v1076
  %1297 = vmatpush1.bf16.msra.mxu0 %v1075
  %1298 = vmatprep.subr.bf16.mxu0 %v1084
  %1299 = vmatpush1.bf16.msra.mxu0 %v1083
  %1300 = vmatprep.subr.bf16.mxu0 %v1092
  %1301 = vmatpush1.bf16.msra.mxu0 %v1091
  %1302 = vmatprep.subr.bf16.mxu0 %v1100
  %1303 = vmatpush1.bf16.msra.mxu0 %v1099
  %1304 = vmatprep.subr.bf16.mxu0 0
  %1305 = vmatpush1.bf16.msra.mxu0 0
  %1306 = vmatprep.subr.bf16.mxu0 0
  %1307 = vmatpush1.bf16.msra.mxu0 0
  %1308 = vmatprep.subr.bf16.mxu0 0
  %1309 = vmatpush1.bf16.msra.mxu0 0
  %1310 = vmatprep.subr.bf16.mxu0 0
  %1311 = vmatpush1.bf16.msra.mxu0 0
  %1312 = vmatprep.subr.bf16.mxu0 0
  %1313 = vmatpush1.bf16.msra.mxu0 0
  %1314 = vmatprep.subr.bf16.mxu0 0
  %1315 = vmatpush1.bf16.msra.mxu0 0
  %1316 = vmatprep.subr.bf16.mxu0 0
  %1317 = vmatpush1.bf16.msra.mxu0 0
  %1318 = vmatprep.subr.bf16.mxu0 0
  %1319 = vmatpush1.bf16.msra.mxu0 0
  %1320 = vmatprep.mubr.bf16.mxu0 0
  %1321 = vmatmul.mubr.bf16.gmra.mrb[0].mxu0 %v738
  %v1322 = vpop.f32.mrb[0].mxu0
  %v1323 = vadd.f32 %v832, %v1322
  %v1324 = vpop.f32.mrb[0].mxu0
  %v1325 = vadd.f32 %v836, %v1324
  %v1326 = vpop.f32.mrb[0].mxu0
  %v1327 = vpop.f32.mrb[0].mxu0
  %1328 = vdwg.mxu0
  %v1329 = vmul.f32 %v1200, 0.5
  %v1330 = vmul.f32 %v1202, 0.5
  %v1331 = vmul.f32 %v1241, 0.5
  %v1332 = vmul.f32 %v1243, 0.5
  %v1333 = vmul.f32 %v1282, 0.5
  %v1334 = vmul.f32 %v1284, 0.5
  %v1335 = vmul.f32 %v1323, 0.5
  %v1336 = vmul.f32 %v1325, 0.5
  %v1337 = vtanh.pop %v1329
  %v1338 = vtanh.pop %v1330
  %v1339 = vtanh.pop %v1331
  %v1340 = vtanh.pop %v1332
  %v1341 = vtanh.pop %v1333
  %v1342 = vtanh.pop %v1334
  %v1343 = vtanh.pop %v1335
  %v1344 = vtanh.pop %v1336
  %v1345 = vmul.f32 %v1337, 0.5
  %v1346 = vmul.f32 %v1338, 0.5
  %v1347 = vmul.f32 %v1339, 0.5
  %v1348 = vmul.f32 %v1340, 0.5
  %v1349 = vmul.f32 %v1341, 0.5
  %v1350 = vmul.f32 %v1342, 0.5
  %v1351 = vmul.f32 %v1343, 0.5
  %v1352 = vmul.f32 %v1344, 0.5
  %v1353 = vadd.f32 %v1345, 0.5
  %v1354 = vadd.f32 %v1346, 0.5
  %v1355 = vadd.f32 %v1347, 0.5
  %v1356 = vadd.f32 %v1348, 0.5
  %v1357 = vadd.f32 %v1349, 0.5
  %v1358 = vadd.f32 %v1350, 0.5
  %v1359 = vadd.f32 %v1351, 0.5
  %v1360 = vadd.f32 %v1352, 0.5
  %v1361 = vpack.c.bf16 %v1353, %v1353
  %v1362 = vpack.c.bf16 %v1354, %v1354
  %v1363 = vpack.c.bf16 %v1355, %v1355
  %v1364 = vpack.c.bf16 %v1356, %v1356
  %v1365 = vpack.c.bf16 %v1357, %v1357
  %v1366 = vpack.c.bf16 %v1358, %v1358
  %v1367 = vpack.c.bf16 %v1359, %v1359
  %v1368 = vpack.c.bf16 %v1360, %v1360
  %v1377 = vunpack.c.l.b16 %v1361
  %v1378 = vunpack.c.l.b16 %v1362
  %v1379 = vunpack.c.l.b16 %v1363
  %v1380 = vunpack.c.l.b16 %v1364
  %v1381 = vunpack.c.l.b16 %v1365
  %v1382 = vunpack.c.l.b16 %v1366
  %v1383 = vunpack.c.l.b16 %v1367
  %v1384 = vunpack.c.l.b16 %v1368
  %v1385 = vpack.c.b16 %v1378, %v1377
  %v1386 = vpack.c.b16 %v1380, %v1379
  %v1387 = vpack.c.b16 %v1382, %v1381
  %v1388 = vpack.c.b16 %v1384, %v1383
  %1393 = vst [vmem:[%s6] sm:$0xff] %v1385
  %1394 = vst [vmem:[%s6 + $0x8] sm:$0xff] %v1386
  %1395 = vst [vmem:[%s6 + $0x10] sm:$0xff] %v1387
  %1396 = vst [vmem:[%s6 + $0x18] sm:$0xff] %v1388
  // Predicated region
  $region22: #{tybalt_vae_forward.4} parent=0 // pred_check
    _
  $region23: #{tybalt_vae_forward.4} parent=0 // pred_check_branch
    %1398 = sbr.rel (0) target = $region25
  $region24: #{tybalt_vae_forward.4} parent=0 // pred_region
    _
  $region25: #{tybalt_vae_forward.4} parent=0 // pred_fallthru
    _
  // Predicated region
  $region26: #{tybalt_vae_forward.4} parent=0 // pred_check
    _
  $region27: #{tybalt_vae_forward.4} parent=0 // pred_check_branch
    %1400 = sbr.rel (0) target = $region29
  $region28: #{tybalt_vae_forward.4} parent=0 // pred_region
    _
  $region29: #{tybalt_vae_forward.4} parent=0 // pred_fallthru
    _
  // Predicated region
  $region30: #{tybalt_vae_forward.4} parent=0 // pred_check
    _
  $region31: #{tybalt_vae_forward.4} parent=0 // pred_check_branch
    %1402 = sbr.rel (0) target = $region33
  $region32: #{tybalt_vae_forward.4} parent=0 // pred_region
    _
  $region33: #{tybalt_vae_forward.4} parent=0 // pred_fallthru
    _
  // Predicated region
  $region34: #{tybalt_vae_forward.4} parent=0 // pred_check
    _
  $region35: #{tybalt_vae_forward.4} parent=0 // pred_check_branch
    %1404 = sbr.rel (0) target = $region37
  $region36: #{tybalt_vae_forward.4} parent=0 // pred_region
    _
  $region37: #{tybalt_vae_forward.4} parent=0 // pred_fallthru
    _

</llo_original>
